<compile_context>
chip_gen: v5e
topology: v5e:2x2
jax: 0.10.0
libtpu: 0.0.40
codegen_flags: <defaults>
</compile_context>

<pallas_src>
import functools

import jax
import jax.numpy as jnp
from jax.experimental import pallas as pl
from jax.experimental.pallas import tpu as pltpu


_MASK_FILL = -10000.0  # matches masked_fill(mask == 0, -10000) in the reference


def _layer_norm(x, gamma, beta, eps=1e-12):
    # Matches the "transformer-from-scratch" LayerNorm: biased variance, eps=1e-12.
    mean = jnp.mean(x, axis=-1, keepdims=True)
    var = jnp.mean((x - mean) ** 2, axis=-1, keepdims=True)
    return (x - mean) * jax.lax.rsqrt(var + eps) * gamma + beta


def _project_kv(x_b16, wk, bk, wv, bv, n_head, dh):
    """Full-width K/V projections, then split to (H, L, dh) bf16 for attention."""
    f32, bf16 = jnp.float32, jnp.bfloat16
    L, _ = x_b16.shape
    k = jnp.dot(x_b16, wk, preferred_element_type=f32) + bk
    v = jnp.dot(x_b16, wv, preferred_element_type=f32) + bv
    kh = k.reshape(L, n_head, dh).transpose(1, 0, 2).astype(bf16)
    vh = v.reshape(L, n_head, dh).transpose(1, 0, 2).astype(bf16)
    return kh, vh


def _attend(x_b16, kh, vh, bias_b16, wq, bq, wo, bo, n_head, dh):
    """Multi-headed attention for one query block against cached K/V.

    x_b16:    (BQ, D) bf16   query rows
    kh, vh:   (H, Lk, dh) bf16 cached key/value heads
    bias_b16: (BQ, Lk) bf16  additive mask bias (0 visible / -1e4 masked)
    wq: (D, D) bf16 (1/sqrt(dh) pre-folded), bq: (1, D) f32 (pre-folded)
    wo: (D, D) bf16, bo: (1, D) f32
    """
    bf16, f32 = jnp.bfloat16, jnp.float32
    BQ, D = x_b16.shape

    q = jnp.dot(x_b16, wq, preferred_element_type=f32) + bq           # (BQ, D)
    qh = q.reshape(BQ, n_head, dh).transpose(1, 0, 2).astype(bf16)    # (H, BQ, dh)

    s = jnp.einsum("hqd,hkd->hqk", qh, kh, preferred_element_type=f32)
    s = s + bias_b16.astype(f32)[None]             # broadcast over heads
    s = s - jnp.max(s, axis=-1, keepdims=True)     # f32 softmax statistics
    e = jnp.exp(s)
    p = e * pl.reciprocal(jnp.sum(e, axis=-1, keepdims=True), approx=True)

    o = jnp.einsum("hqk,hkd->hqd", p.astype(bf16), vh,
                   preferred_element_type=f32)                         # (H, BQ, dh)
    o = o.transpose(1, 0, 2).reshape(BQ, D).astype(bf16)               # concat heads
    return jnp.dot(o, wo, preferred_element_type=f32) + bo             # (BQ, D) f32


def _decoder_kernel(n_head, dh, block_q,
                    tgt_ref, mem_ref, tb_ref, sb_ref,
                    wq1, bq1, wk1, bk1, wv1, bv1, wo1, bo1, g1, be1,
                    wq2, bq2, wk2, bk2, wv2, bv2, wo2, bo2, g2, be2,
                    w1, b1, w2, b2, g3, be3,
                    out_ref,
                    k1_ref, v1_ref, k2_ref, v2_ref):
    bf16, f32 = jnp.bfloat16, jnp.float32
    qi = pl.program_id(1)

    # K/V for both attentions are independent of the query block: project them
    # once per batch row and keep them in VMEM scratch across q steps.
    @pl.when(qi == 0)
    def _():
        kh, vh = _project_kv(tgt_ref[...], wk1[...], bk1[...], wv1[...], bv1[...],
                             n_head, dh)
        k1_ref[...] = kh
        v1_ref[...] = vh
        kh, vh = _project_kv(mem_ref[...], wk2[...], bk2[...], wv2[...], bv2[...],
                             n_head, dh)
        k2_ref[...] = kh
        v2_ref[...] = vh

    start = pl.multiple_of(qi * block_q, block_q)
    x_in = tgt_ref[pl.ds(start, block_q), :]       # (BQ, D) bf16 query rows
    x0 = x_in.astype(f32)

    # --- self attention + residual + norm1 (dropout = identity in eval) ---
    sa = _attend(x_in, k1_ref[...], v1_ref[...], tb_ref[...],
                 wq1[...], bq1[...], wo1[...], bo1[...], n_head, dh)
    x = _layer_norm(x0 + sa, g1[...], be1[...])

    # --- encoder-decoder attention + residual + norm2 ---
    ca = _attend(x.astype(bf16), k2_ref[...], v2_ref[...], sb_ref[...],
                 wq2[...], bq2[...], wo2[...], bo2[...], n_head, dh)
    x = _layer_norm(x + ca, g2[...], be2[...])

    # --- position-wise feed-forward + residual + norm3 ---
    h = jnp.maximum(
        jnp.dot(x.astype(bf16), w1[...], preferred_element_type=f32) + b1[...], 0.0)
    f = jnp.dot(h.astype(bf16), w2[...], preferred_element_type=f32) + b2[...]
    x = _layer_norm(x + f, g3[...], be3[...])

    out_ref[...] = x.astype(out_ref.dtype)


def decoder_layer(tgt, memory, src_mask, tgt_mask, params, n_head, block_q=None):
    B, Lq, D = tgt.shape
    Lk = memory.shape[1]
    F = params["w1"].shape[1]
    assert D % n_head == 0
    dh = D // n_head
    scale = dh ** -0.5

    if block_q is None:
        block_q = min(Lq, 128)
    assert Lq % block_q == 0
    assert block_q == Lq or block_q % 16 == 0   # bf16 sublane packing
    nq = Lq // block_q

    bf16, f32 = jnp.bfloat16, jnp.float32

    # bf16 activations for the MXU; 0/1 masks -> bf16 additive biases.
    tgt_b = tgt.astype(bf16)
    mem_b = memory.astype(bf16)
    tbias = jnp.where(tgt_mask == 0, _MASK_FILL, 0.0).astype(bf16)
    sbias = jnp.where(src_mask == 0, _MASK_FILL, 0.0).astype(bf16)

    p = params
    # Full-width bf16 weights; 1/sqrt(dh) folded into the query projection.
    w_args = [
        (p["wq1"] * scale).astype(bf16), (p["bq1"] * scale).astype(f32),
        p["wk1"].astype(bf16), p["bk1"].astype(f32),
        p["wv1"].astype(bf16), p["bv1"].astype(f32),
        p["wo1"].astype(bf16), p["bo1"].astype(f32),
        p["g1"].astype(f32), p["be1"].astype(f32),
        (p["wq2"] * scale).astype(bf16), (p["bq2"] * scale).astype(f32),
        p["wk2"].astype(bf16), p["bk2"].astype(f32),
        p["wv2"].astype(bf16), p["bv2"].astype(f32),
        p["wo2"].astype(bf16), p["bo2"].astype(f32),
        p["g2"].astype(f32), p["be2"].astype(f32),
        p["w1"].astype(bf16), p["b1"].astype(f32),
        p["w2"].astype(bf16), p["b2"].astype(f32),
        p["g3"].astype(f32), p["be3"].astype(f32),
    ]

    def _full_spec(w):  # whole array resident, constant block index (no re-DMA)
        n = w.ndim
        return pl.BlockSpec(w.shape, lambda b, q: (0,) * n)

    w_specs = [_full_spec(w) for w in w_args]

    act_specs = [
        pl.BlockSpec((None, Lq, D), lambda b, q: (b, 0, 0)),        # full tgt (Q rows + self-attn K/V)
        pl.BlockSpec((None, Lk, D), lambda b, q: (b, 0, 0)),        # encoder memory
        pl.BlockSpec((None, block_q, Lq), lambda b, q: (b, q, 0)),  # self-attn mask bias
        pl.BlockSpec((None, block_q, Lk), lambda b, q: (b, q, 0)),  # enc-dec mask bias
    ]
    out_spec = pl.BlockSpec((None, block_q, D), lambda b, q: (b, q, 0))

    scratch_shapes = [
        pltpu.VMEM((n_head, Lq, dh), bf16),   # self-attn K cache
        pltpu.VMEM((n_head, Lq, dh), bf16),   # self-attn V cache
        pltpu.VMEM((n_head, Lk, dh), bf16),   # enc-dec K cache
        pltpu.VMEM((n_head, Lk, dh), bf16),   # enc-dec V cache
    ]

    # Advisory cost estimate (K/V projections counted once per batch row).
    flops = 2 * B * (4 * Lq * D * D + 2 * Lq * Lq * D
                     + 2 * Lq * D * D + 2 * Lk * D * D + 2 * Lq * Lk * D
                     + 2 * Lq * D * F)
    transcendentals = B * n_head * Lq * (Lq + Lk)
    bytes_accessed = (2 * B * (Lq * D + Lk * D + Lq * (Lq + Lk))   # bf16 acts + biases
                      + 2 * (8 * D * D + 2 * D * F)                # bf16 weights
                      + 4 * (10 * D + F)                           # f32 biases / LN params
                      + 4 * B * Lq * D)                            # f32 output
    cost = pl.CostEstimate(flops=int(flops), transcendentals=int(transcendentals),
                           bytes_accessed=int(bytes_accessed))

    kernel = functools.partial(_decoder_kernel, n_head, dh, block_q)
    return pl.pallas_call(
        kernel,
        out_shape=jax.ShapeDtypeStruct((B, Lq, D), jnp.float32),
        grid_spec=pltpu.PrefetchScalarGridSpec(
            num_scalar_prefetch=0,
            grid=(B, nq),
            in_specs=act_specs + w_specs,
            out_specs=out_spec,
            scratch_shapes=scratch_shapes,
        ),
        compiler_params=pltpu.CompilerParams(
            # q axis carries the cached K/V scratch -> "arbitrary";
            # batch axis stays "parallel" (feeds both v7x TensorCores).
            dimension_semantics=("parallel", "arbitrary"),
            # 48 MiB is above every generation's default scoped limit and
            # still safe under v7x's 64 MiB physical VMEM.
            vmem_limit_bytes=48 * 1024 * 1024,
        ),
        cost_estimate=cost,
    )(tgt_b, mem_b, tbias, sbias, *w_args)


# ----------------------------- reference (pure JAX, f32) ------------------------------

def decoder_layer_ref(tgt, memory, src_mask, tgt_mask, p, n_head):
    def ln(x, g, b, eps=1e-12):
        m = x.mean(-1, keepdims=True)
        v = ((x - m) ** 2).mean(-1, keepdims=True)
        return (x - m) / jnp.sqrt(v + eps) * g + b

    def mha(q_in, kv_in, mask, wq, bq, wk, bk, wv, bv, wo, bo):
        B, Lq, D = q_in.shape
        Lk = kv_in.shape[1]
        dh = D // n_head
        q = (q_in @ wq + bq).reshape(B, Lq, n_head, dh).transpose(0, 2, 1, 3)
        k = (kv_in @ wk + bk).reshape(B, Lk, n_head, dh).transpose(0, 2, 1, 3)
        v = (kv_in @ wv + bv).reshape(B, Lk, n_head, dh).transpose(0, 2, 1, 3)
        s = jnp.einsum("bhqd,bhkd->bhqk", q, k) / jnp.sqrt(dh)
        s = jnp.where(mask[:, None] == 0, _MASK_FILL, s)
        a = jax.nn.softmax(s, axis=-1)
        o = jnp.einsum("bhqk,bhkd->bhqd", a, v).transpose(0, 2, 1, 3).reshape(B, Lq, D)
        return o @ wo + bo

    x = ln(tgt + mha(tgt, tgt, tgt_mask, p["wq1"], p["bq1"], p["wk1"], p["bk1"],
                     p["wv1"], p["bv1"], p["wo1"], p["bo1"]), p["g1"], p["be1"])
    x = ln(x + mha(x, memory, src_mask, p["wq2"], p["bq2"], p["wk2"], p["bk2"],
                   p["wv2"], p["bv2"], p["wo2"], p["bo2"]), p["g2"], p["be2"])
    h = jnp.maximum(x @ p["w1"] + p["b1"], 0.0)
    return ln(x + h @ p["w2"] + p["b2"], p["g3"], p["be3"])


def init_params(key, d_model, d_hidden):
    """Deterministic synthetic weights (shapes follow the PyTorch module)."""
    keys = jax.random.split(key, 10)
    scale = 0.05

    def lin(k, din, dout):
        return jax.random.normal(k, (din, dout), jnp.float32) * scale

    D, F = d_model, d_hidden
    p = {}
    p["wq1"], p["wk1"], p["wv1"], p["wo1"] = (lin(keys[i], D, D) for i in range(4))
    p["wq2"], p["wk2"], p["wv2"], p["wo2"] = (lin(keys[4 + i], D, D) for i in range(4))
    p["w1"] = lin(keys[8], D, F)
    p["w2"] = lin(keys[9], F, D)
    for name, dim in [("bq1", D), ("bk1", D), ("bv1", D), ("bo1", D),
                      ("bq2", D), ("bk2", D), ("bv2", D), ("bo2", D),
                      ("b1", F), ("b2", D)]:
        p[name] = jnp.zeros((1, dim), jnp.float32)
    for i in (1, 2, 3):
        p[f"g{i}"] = jnp.ones((1, D), jnp.float32)
        p[f"be{i}"] = jnp.zeros((1, D), jnp.float32)
    return p


if __name__ == "__main__":
    # Small but lane-dense shapes: D and F are multiples of 128; block_q multiple of 16.
    B, Lq, Lk, D, H, F = 2, 32, 16, 128, 4, 256
    block_q = 16

    key = jax.random.PRNGKey(0)
    k_tgt, k_mem, k_par = jax.random.split(key, 3)

    tgt = jax.random.normal(k_tgt, (B, Lq, D), jnp.float32)
    memory = jax.random.normal(k_mem, (B, Lk, D), jnp.float32)
    # causal mask for self-attention, full mask for enc-dec attention
    tgt_mask = jnp.broadcast_to(jnp.tril(jnp.ones((Lq, Lq), jnp.float32)), (B, Lq, Lq))
    src_mask = jnp.ones((B, Lq, Lk), jnp.float32)

    params = init_params(k_par, D, F)

    out = decoder_layer(tgt, memory, src_mask, tgt_mask, params, H, block_q=block_q)
    out = jax.block_until_ready(out)
    assert out.shape == (B, Lq, D) and out.dtype == jnp.float32
    assert bool(jnp.all(jnp.isfinite(out)))

    # Correctness vs. pure-JAX f32 reference (loose tolerance: bf16 MXU operands,
    # additive bf16 mask bias and approx reciprocal in the softmax denominator).
    ref = decoder_layer_ref(tgt, memory, src_mask, tgt_mask, params, H)
    max_err = float(jnp.max(jnp.abs(out - ref)))
    assert max_err < 0.15, f"max abs error vs reference: {max_err}"

    print("KERNEL_OK")
</pallas_src>

<mosaic_0001>
module attributes {stable_mosaic.version = 11 : i64} {
  func.func @_decoder_kernel(%arg0: i32, %arg1: i32, %arg2: memref<1x32x128xbf16, #tpu.memory_space<vmem>>, %arg3: memref<1x16x128xbf16, #tpu.memory_space<vmem>>, %arg4: memref<1x16x32xbf16, #tpu.memory_space<vmem>>, %arg5: memref<1x16x16xbf16, #tpu.memory_space<vmem>>, %arg6: memref<128x128xbf16, #tpu.memory_space<vmem>>, %arg7: memref<1x128xf32, #tpu.memory_space<vmem>>, %arg8: memref<128x128xbf16, #tpu.memory_space<vmem>>, %arg9: memref<1x128xf32, #tpu.memory_space<vmem>>, %arg10: memref<128x128xbf16, #tpu.memory_space<vmem>>, %arg11: memref<1x128xf32, #tpu.memory_space<vmem>>, %arg12: memref<128x128xbf16, #tpu.memory_space<vmem>>, %arg13: memref<1x128xf32, #tpu.memory_space<vmem>>, %arg14: memref<1x128xf32, #tpu.memory_space<vmem>>, %arg15: memref<1x128xf32, #tpu.memory_space<vmem>>, %arg16: memref<128x128xbf16, #tpu.memory_space<vmem>>, %arg17: memref<1x128xf32, #tpu.memory_space<vmem>>, %arg18: memref<128x128xbf16, #tpu.memory_space<vmem>>, %arg19: memref<1x128xf32, #tpu.memory_space<vmem>>, %arg20: memref<128x128xbf16, #tpu.memory_space<vmem>>, %arg21: memref<1x128xf32, #tpu.memory_space<vmem>>, %arg22: memref<128x128xbf16, #tpu.memory_space<vmem>>, %arg23: memref<1x128xf32, #tpu.memory_space<vmem>>, %arg24: memref<1x128xf32, #tpu.memory_space<vmem>>, %arg25: memref<1x128xf32, #tpu.memory_space<vmem>>, %arg26: memref<128x256xbf16, #tpu.memory_space<vmem>>, %arg27: memref<1x256xf32, #tpu.memory_space<vmem>>, %arg28: memref<256x128xbf16, #tpu.memory_space<vmem>>, %arg29: memref<1x128xf32, #tpu.memory_space<vmem>>, %arg30: memref<1x128xf32, #tpu.memory_space<vmem>>, %arg31: memref<1x128xf32, #tpu.memory_space<vmem>>, %arg32: memref<1x16x128xf32, #tpu.memory_space<vmem>>, %arg33: memref<4x32x32xbf16, #tpu.memory_space<vmem>>, %arg34: memref<4x32x32xbf16, #tpu.memory_space<vmem>>, %arg35: memref<4x16x32xbf16, #tpu.memory_space<vmem>>, %arg36: memref<4x16x32xbf16, #tpu.memory_space<vmem>>) attributes {dimension_semantics = [#tpu.dimension_semantics<parallel>, #tpu.dimension_semantics<arbitrary>], iteration_bounds = array<i64: 2, 2>, scalar_prefetch = 0 : i64, scratch_operands = 4 : i64, tpu.core_type = #tpu.core_type<tc>, window_params = [{transform_indices = @transform_0, window_bounds = array<i64: 1, 32, 128>}, {transform_indices = @transform_1, window_bounds = array<i64: 1, 16, 128>}, {transform_indices = @transform_2, window_bounds = array<i64: 1, 16, 32>}, {transform_indices = @transform_3, window_bounds = array<i64: 1, 16, 16>}, {pipeline_mode = #tpu.pipeline_mode<synchronous>, transform_indices = @transform_4, window_bounds = array<i64: 128, 128>}, {pipeline_mode = #tpu.pipeline_mode<synchronous>, transform_indices = @transform_5, window_bounds = array<i64: 1, 128>}, {pipeline_mode = #tpu.pipeline_mode<synchronous>, transform_indices = @transform_6, window_bounds = array<i64: 128, 128>}, {pipeline_mode = #tpu.pipeline_mode<synchronous>, transform_indices = @transform_7, window_bounds = array<i64: 1, 128>}, {pipeline_mode = #tpu.pipeline_mode<synchronous>, transform_indices = @transform_8, window_bounds = array<i64: 128, 128>}, {pipeline_mode = #tpu.pipeline_mode<synchronous>, transform_indices = @transform_9, window_bounds = array<i64: 1, 128>}, {pipeline_mode = #tpu.pipeline_mode<synchronous>, transform_indices = @transform_10, window_bounds = array<i64: 128, 128>}, {pipeline_mode = #tpu.pipeline_mode<synchronous>, transform_indices = @transform_11, window_bounds = array<i64: 1, 128>}, {pipeline_mode = #tpu.pipeline_mode<synchronous>, transform_indices = @transform_12, window_bounds = array<i64: 1, 128>}, {pipeline_mode = #tpu.pipeline_mode<synchronous>, transform_indices = @transform_13, window_bounds = array<i64: 1, 128>}, {pipeline_mode = #tpu.pipeline_mode<synchronous>, transform_indices = @transform_14, window_bounds = array<i64: 128, 128>}, {pipeline_mode = #tpu.pipeline_mode<synchronous>, transform_indices = @transform_15, window_bounds = array<i64: 1, 128>}, {pipeline_mode = #tpu.pipeline_mode<synchronous>, transform_indices = @transform_16, window_bounds = array<i64: 128, 128>}, {pipeline_mode = #tpu.pipeline_mode<synchronous>, transform_indices = @transform_17, window_bounds = array<i64: 1, 128>}, {pipeline_mode = #tpu.pipeline_mode<synchronous>, transform_indices = @transform_18, window_bounds = array<i64: 128, 128>}, {pipeline_mode = #tpu.pipeline_mode<synchronous>, transform_indices = @transform_19, window_bounds = array<i64: 1, 128>}, {pipeline_mode = #tpu.pipeline_mode<synchronous>, transform_indices = @transform_20, window_bounds = array<i64: 128, 128>}, {pipeline_mode = #tpu.pipeline_mode<synchronous>, transform_indices = @transform_21, window_bounds = array<i64: 1, 128>}, {pipeline_mode = #tpu.pipeline_mode<synchronous>, transform_indices = @transform_22, window_bounds = array<i64: 1, 128>}, {pipeline_mode = #tpu.pipeline_mode<synchronous>, transform_indices = @transform_23, window_bounds = array<i64: 1, 128>}, {pipeline_mode = #tpu.pipeline_mode<synchronous>, transform_indices = @transform_24, window_bounds = array<i64: 128, 256>}, {pipeline_mode = #tpu.pipeline_mode<synchronous>, transform_indices = @transform_25, window_bounds = array<i64: 1, 256>}, {pipeline_mode = #tpu.pipeline_mode<synchronous>, transform_indices = @transform_26, window_bounds = array<i64: 256, 128>}, {pipeline_mode = #tpu.pipeline_mode<synchronous>, transform_indices = @transform_27, window_bounds = array<i64: 1, 128>}, {pipeline_mode = #tpu.pipeline_mode<synchronous>, transform_indices = @transform_28, window_bounds = array<i64: 1, 128>}, {pipeline_mode = #tpu.pipeline_mode<synchronous>, transform_indices = @transform_29, window_bounds = array<i64: 1, 128>}, {transform_indices = @transform_30, window_bounds = array<i64: 1, 16, 128>}]} {
    %c0_i32 = arith.constant 0 : i32
    %0 = arith.cmpi eq, %arg1, %c0_i32 : i32
    %1 = arith.extui %0 : i1 to i32
    %c0_i32_0 = arith.constant 0 : i32
    %2 = arith.cmpi ne, %1, %c0_i32_0 : i32
    scf.if %2 {
      %c0_88 = arith.constant 0 : index
      %c0_89 = arith.constant 0 : index
      %c0_90 = arith.constant 0 : index
      %176 = vector.load %arg2[%c0_88, %c0_89, %c0_90] : memref<1x32x128xbf16, #tpu.memory_space<vmem>>, vector<1x32x128xbf16>
      %177 = vector.shape_cast %176 : vector<1x32x128xbf16> to vector<32x128xbf16>
      %c0_91 = arith.constant 0 : index
      %c0_92 = arith.constant 0 : index
      %178 = vector.load %arg8[%c0_91, %c0_92] : memref<128x128xbf16, #tpu.memory_space<vmem>>, vector<128x128xbf16>
      %c0_93 = arith.constant 0 : index
      %c0_94 = arith.constant 0 : index
      %179 = vector.load %arg9[%c0_93, %c0_94] : memref<1x128xf32, #tpu.memory_space<vmem>>, vector<1x128xf32>
      %c0_95 = arith.constant 0 : index
      %c0_96 = arith.constant 0 : index
      %180 = vector.load %arg10[%c0_95, %c0_96] : memref<128x128xbf16, #tpu.memory_space<vmem>>, vector<128x128xbf16>
      %c0_97 = arith.constant 0 : index
      %c0_98 = arith.constant 0 : index
      %181 = vector.load %arg11[%c0_97, %c0_98] : memref<1x128xf32, #tpu.memory_space<vmem>>, vector<1x128xf32>
      %cst_99 = arith.constant dense<0.000000e+00> : vector<32x128xf32>
      %182 = tpu.matmul %177, %178, %cst_99 {dimension_numbers = #tpu.dot_dimension_numbers<[1], [0], [0], [1], [0, 0, 1, 1], [], []>} : vector<32x128xbf16>, vector<128x128xbf16>, vector<32x128xf32> -> vector<32x128xf32>
      %183 = vector.broadcast %179 : vector<1x128xf32> to vector<32x128xf32>
      %184 = arith.addf %182, %183 : vector<32x128xf32>
      %cst_100 = arith.constant dense<0.000000e+00> : vector<32x128xf32>
      %185 = tpu.matmul %177, %180, %cst_100 {dimension_numbers = #tpu.dot_dimension_numbers<[1], [0], [0], [1], [0, 0, 1, 1], [], []>} : vector<32x128xbf16>, vector<128x128xbf16>, vector<32x128xf32> -> vector<32x128xf32>
      %186 = vector.broadcast %181 : vector<1x128xf32> to vector<32x128xf32>
      %187 = arith.addf %185, %186 : vector<32x128xf32>
      %188 = vector.shape_cast %184 : vector<32x128xf32> to vector<32x4x32xf32>
      %189 = tpu.transpose %188, [1, 0, 2] : vector<32x4x32xf32> -> vector<4x32x32xf32>
      %190 = arith.truncf %189 : vector<4x32x32xf32> to vector<4x32x32xbf16>
      %191 = vector.shape_cast %187 : vector<32x128xf32> to vector<32x4x32xf32>
      %192 = tpu.transpose %191, [1, 0, 2] : vector<32x4x32xf32> -> vector<4x32x32xf32>
      %193 = arith.truncf %192 : vector<4x32x32xf32> to vector<4x32x32xbf16>
      %c0_101 = arith.constant 0 : index
      %c0_102 = arith.constant 0 : index
      %c0_103 = arith.constant 0 : index
      %194 = vector.load %arg33[%c0_101, %c0_102, %c0_103] : memref<4x32x32xbf16, #tpu.memory_space<vmem>>, vector<4x32x32xbf16>
      tpu.vector_store %arg33[%c0_101, %c0_102, %c0_103], %190 {strides = array<i32>} : memref<4x32x32xbf16, #tpu.memory_space<vmem>>, vector<4x32x32xbf16>,
      %c0_104 = arith.constant 0 : index
      %c0_105 = arith.constant 0 : index
      %c0_106 = arith.constant 0 : index
      %195 = vector.load %arg34[%c0_104, %c0_105, %c0_106] : memref<4x32x32xbf16, #tpu.memory_space<vmem>>, vector<4x32x32xbf16>
      tpu.vector_store %arg34[%c0_104, %c0_105, %c0_106], %193 {strides = array<i32>} : memref<4x32x32xbf16, #tpu.memory_space<vmem>>, vector<4x32x32xbf16>,
      %c0_107 = arith.constant 0 : index
      %c0_108 = arith.constant 0 : index
      %c0_109 = arith.constant 0 : index
      %196 = vector.load %arg3[%c0_107, %c0_108, %c0_109] : memref<1x16x128xbf16, #tpu.memory_space<vmem>>, vector<1x16x128xbf16>
      %197 = vector.shape_cast %196 : vector<1x16x128xbf16> to vector<16x128xbf16>
      %c0_110 = arith.constant 0 : index
      %c0_111 = arith.constant 0 : index
      %198 = vector.load %arg18[%c0_110, %c0_111] : memref<128x128xbf16, #tpu.memory_space<vmem>>, vector<128x128xbf16>
      %c0_112 = arith.constant 0 : index
      %c0_113 = arith.constant 0 : index
      %199 = vector.load %arg19[%c0_112, %c0_113] : memref<1x128xf32, #tpu.memory_space<vmem>>, vector<1x128xf32>
      %c0_114 = arith.constant 0 : index
      %c0_115 = arith.constant 0 : index
      %200 = vector.load %arg20[%c0_114, %c0_115] : memref<128x128xbf16, #tpu.memory_space<vmem>>, vector<128x128xbf16>
      %c0_116 = arith.constant 0 : index
      %c0_117 = arith.constant 0 : index
      %201 = vector.load %arg21[%c0_116, %c0_117] : memref<1x128xf32, #tpu.memory_space<vmem>>, vector<1x128xf32>
      %cst_118 = arith.constant dense<0.000000e+00> : vector<16x128xf32>
      %202 = tpu.matmul %197, %198, %cst_118 {dimension_numbers = #tpu.dot_dimension_numbers<[1], [0], [0], [1], [0, 0, 1, 1], [], []>} : vector<16x128xbf16>, vector<128x128xbf16>, vector<16x128xf32> -> vector<16x128xf32>
      %203 = vector.broadcast %199 : vector<1x128xf32> to vector<16x128xf32>
      %204 = arith.addf %202, %203 : vector<16x128xf32>
      %cst_119 = arith.constant dense<0.000000e+00> : vector<16x128xf32>
      %205 = tpu.matmul %197, %200, %cst_119 {dimension_numbers = #tpu.dot_dimension_numbers<[1], [0], [0], [1], [0, 0, 1, 1], [], []>} : vector<16x128xbf16>, vector<128x128xbf16>, vector<16x128xf32> -> vector<16x128xf32>
      %206 = vector.broadcast %201 : vector<1x128xf32> to vector<16x128xf32>
      %207 = arith.addf %205, %206 : vector<16x128xf32>
      %208 = vector.shape_cast %204 : vector<16x128xf32> to vector<16x4x32xf32>
      %209 = tpu.transpose %208, [1, 0, 2] : vector<16x4x32xf32> -> vector<4x16x32xf32>
      %210 = arith.truncf %209 : vector<4x16x32xf32> to vector<4x16x32xbf16>
      %211 = vector.shape_cast %207 : vector<16x128xf32> to vector<16x4x32xf32>
      %212 = tpu.transpose %211, [1, 0, 2] : vector<16x4x32xf32> -> vector<4x16x32xf32>
      %213 = arith.truncf %212 : vector<4x16x32xf32> to vector<4x16x32xbf16>
      %c0_120 = arith.constant 0 : index
      %c0_121 = arith.constant 0 : index
      %c0_122 = arith.constant 0 : index
      %214 = vector.load %arg35[%c0_120, %c0_121, %c0_122] : memref<4x16x32xbf16, #tpu.memory_space<vmem>>, vector<4x16x32xbf16>
      tpu.vector_store %arg35[%c0_120, %c0_121, %c0_122], %210 {strides = array<i32>} : memref<4x16x32xbf16, #tpu.memory_space<vmem>>, vector<4x16x32xbf16>,
      %c0_123 = arith.constant 0 : index
      %c0_124 = arith.constant 0 : index
      %c0_125 = arith.constant 0 : index
      %215 = vector.load %arg36[%c0_123, %c0_124, %c0_125] : memref<4x16x32xbf16, #tpu.memory_space<vmem>>, vector<4x16x32xbf16>
      tpu.vector_store %arg36[%c0_123, %c0_124, %c0_125], %213 {strides = array<i32>} : memref<4x16x32xbf16, #tpu.memory_space<vmem>>, vector<4x16x32xbf16>,
    } else {
    }
    %c16_i32 = arith.constant 16 : i32
    %3 = arith.muli %arg1, %c16_i32 : i32
    %4 = tpu.assume_multiple %3, 16 : i32
    %c0 = arith.constant 0 : index
    %5 = arith.index_cast %4 : i32 to index
    %c0_1 = arith.constant 0 : index
    %6 = vector.load %arg2[%c0, %5, %c0_1] : memref<1x32x128xbf16, #tpu.memory_space<vmem>>, vector<1x16x128xbf16>
    %7 = vector.shape_cast %6 : vector<1x16x128xbf16> to vector<16x128xbf16>
    %8 = arith.extf %7 : vector<16x128xbf16> to vector<16x128xf32>
    %c0_2 = arith.constant 0 : index
    %c0_3 = arith.constant 0 : index
    %c0_4 = arith.constant 0 : index
    %9 = vector.load %arg33[%c0_2, %c0_3, %c0_4] : memref<4x32x32xbf16, #tpu.memory_space<vmem>>, vector<4x32x32xbf16>
    %c0_5 = arith.constant 0 : index
    %c0_6 = arith.constant 0 : index
    %c0_7 = arith.constant 0 : index
    %10 = vector.load %arg34[%c0_5, %c0_6, %c0_7] : memref<4x32x32xbf16, #tpu.memory_space<vmem>>, vector<4x32x32xbf16>
    %c0_8 = arith.constant 0 : index
    %c0_9 = arith.constant 0 : index
    %c0_10 = arith.constant 0 : index
    %11 = vector.load %arg4[%c0_8, %c0_9, %c0_10] : memref<1x16x32xbf16, #tpu.memory_space<vmem>>, vector<1x16x32xbf16>
    %12 = vector.shape_cast %11 : vector<1x16x32xbf16> to vector<16x32xbf16>
    %c0_11 = arith.constant 0 : index
    %c0_12 = arith.constant 0 : index
    %13 = vector.load %arg6[%c0_11, %c0_12] : memref<128x128xbf16, #tpu.memory_space<vmem>>, vector<128x128xbf16>
    %c0_13 = arith.constant 0 : index
    %c0_14 = arith.constant 0 : index
    %14 = vector.load %arg7[%c0_13, %c0_14] : memref<1x128xf32, #tpu.memory_space<vmem>>, vector<1x128xf32>
    %c0_15 = arith.constant 0 : index
    %c0_16 = arith.constant 0 : index
    %15 = vector.load %arg12[%c0_15, %c0_16] : memref<128x128xbf16, #tpu.memory_space<vmem>>, vector<128x128xbf16>
    %c0_17 = arith.constant 0 : index
    %c0_18 = arith.constant 0 : index
    %16 = vector.load %arg13[%c0_17, %c0_18] : memref<1x128xf32, #tpu.memory_space<vmem>>, vector<1x128xf32>
    %cst = arith.constant dense<0.000000e+00> : vector<16x128xf32>
    %17 = tpu.matmul %7, %13, %cst {dimension_numbers = #tpu.dot_dimension_numbers<[1], [0], [0], [1], [0, 0, 1, 1], [], []>} : vector<16x128xbf16>, vector<128x128xbf16>, vector<16x128xf32> -> vector<16x128xf32>
    %18 = vector.broadcast %14 : vector<1x128xf32> to vector<16x128xf32>
    %19 = arith.addf %17, %18 : vector<16x128xf32>
    %20 = vector.shape_cast %19 : vector<16x128xf32> to vector<16x4x32xf32>
    %21 = tpu.transpose %20, [1, 0, 2] : vector<16x4x32xf32> -> vector<4x16x32xf32>
    %22 = arith.truncf %21 : vector<4x16x32xf32> to vector<4x16x32xbf16>
    "tpu.trace_start"() <{level = 10 : i32, message = "hqd,hkd->hqk"}> : () -> ()
    %cst_19 = arith.constant dense<0.000000e+00> : vector<4x16x32xf32>
    %23 = tpu.matmul %22, %9, %cst_19 {dimension_numbers = #tpu.dot_dimension_numbers<[2], [2], [1], [1], [0, 0, 0, 1, 1, 1], [0], [0]>} : vector<4x16x32xbf16>, vector<4x32x32xbf16>, vector<4x16x32xf32> -> vector<4x16x32xf32>
    "tpu.trace_stop"() : () -> ()
    %24 = arith.extf %12 : vector<16x32xbf16> to vector<16x32xf32>
    %25 = vector.shape_cast %24 : vector<16x32xf32> to vector<1x16x32xf32>
    %26 = vector.broadcast %25 : vector<1x16x32xf32> to vector<4x16x32xf32>
    %27 = arith.addf %23, %26 : vector<4x16x32xf32>
    %cst_20 = arith.constant dense<0xFF800000> : vector<4x16xf32>
    %28 = vector.multi_reduction <maximumf>, %27, %cst_20 [2] : vector<4x16x32xf32> to vector<4x16xf32>
    %29 = vector.shape_cast %28 : vector<4x16xf32> to vector<4x16x1xf32>
    %30 = vector.broadcast %29 : vector<4x16x1xf32> to vector<4x16x32xf32>
    %31 = arith.subf %27, %30 : vector<4x16x32xf32>
    %32 = math.exp %31 : vector<4x16x32xf32>
    %cst_21 = arith.constant dense<0.000000e+00> : vector<4x16xf32>
    %33 = vector.multi_reduction <add>, %32, %cst_21 [2] : vector<4x16x32xf32> to vector<4x16xf32>
    %34 = vector.shape_cast %33 : vector<4x16xf32> to vector<4x16x1xf32>
    %35 = tpu.reciprocal %34 {approx = true} : vector<4x16x1xf32> -> vector<4x16x1xf32>
    %36 = vector.broadcast %35 : vector<4x16x1xf32> to vector<4x16x32xf32>
    %37 = arith.mulf %32, %36 : vector<4x16x32xf32>
    %38 = arith.truncf %37 : vector<4x16x32xf32> to vector<4x16x32xbf16>
    "tpu.trace_start"() <{level = 10 : i32, message = "hqk,hkd->hqd"}> : () -> ()
    %cst_22 = arith.constant dense<0.000000e+00> : vector<4x16x32xf32>
    %39 = tpu.matmul %38, %10, %cst_22 {dimension_numbers = #tpu.dot_dimension_numbers<[2], [1], [1], [2], [0, 0, 0, 1, 1, 2], [0], [0]>} : vector<4x16x32xbf16>, vector<4x32x32xbf16>, vector<4x16x32xf32> -> vector<4x16x32xf32>
    "tpu.trace_stop"() : () -> ()
    %40 = tpu.transpose %39, [1, 0, 2] : vector<4x16x32xf32> -> vector<16x4x32xf32>
    %41 = vector.shape_cast %40 : vector<16x4x32xf32> to vector<16x128xf32>
    %42 = arith.truncf %41 : vector<16x128xf32> to vector<16x128xbf16>
    %cst_23 = arith.constant dense<0.000000e+00> : vector<16x128xf32>
    %43 = tpu.matmul %42, %15, %cst_23 {dimension_numbers = #tpu.dot_dimension_numbers<[1], [0], [0], [1], [0, 0, 1, 1], [], []>} : vector<16x128xbf16>, vector<128x128xbf16>, vector<16x128xf32> -> vector<16x128xf32>
    %44 = vector.broadcast %16 : vector<1x128xf32> to vector<16x128xf32>
    %45 = arith.addf %43, %44 : vector<16x128xf32>
    %46 = arith.addf %8, %45 : vector<16x128xf32>
    %c0_24 = arith.constant 0 : index
    %c0_25 = arith.constant 0 : index
    %47 = vector.load %arg14[%c0_24, %c0_25] : memref<1x128xf32, #tpu.memory_space<vmem>>, vector<1x128xf32>
    %c0_26 = arith.constant 0 : index
    %c0_27 = arith.constant 0 : index
    %48 = vector.load %arg15[%c0_26, %c0_27] : memref<1x128xf32, #tpu.memory_space<vmem>>, vector<1x128xf32>
    %cst_28 = arith.constant dense<0.000000e+00> : vector<16xf32>
    %49 = vector.multi_reduction <add>, %46, %cst_28 [1] : vector<16x128xf32> to vector<16xf32>
    %50 = vector.shape_cast %49 : vector<16xf32> to vector<16x1xf32>
    %cst_29 = arith.constant 1.280000e+02 : f32
    %51 = vector.broadcast %cst_29 : f32 to vector<16x1xf32>
    %52 = arith.divf %50, %51 : vector<16x1xf32>
    %53 = vector.broadcast %52 : vector<16x1xf32> to vector<16x128xf32>
    %54 = arith.subf %46, %53 : vector<16x128xf32>
    %55 = arith.mulf %54, %54 : vector<16x128xf32>
    %cst_30 = arith.constant dense<0.000000e+00> : vector<16xf32>
    %56 = vector.multi_reduction <add>, %55, %cst_30 [1] : vector<16x128xf32> to vector<16xf32>
    %57 = vector.shape_cast %56 : vector<16xf32> to vector<16x1xf32>
    %cst_31 = arith.constant 1.280000e+02 : f32
    %58 = vector.broadcast %cst_31 : f32 to vector<16x1xf32>
    %59 = arith.divf %57, %58 : vector<16x1xf32>
    %60 = vector.broadcast %52 : vector<16x1xf32> to vector<16x128xf32>
    %61 = arith.subf %46, %60 : vector<16x128xf32>
    %cst_32 = arith.constant 9.99999996E-13 : f32
    %62 = vector.broadcast %cst_32 : f32 to vector<16x1xf32>
    %63 = arith.addf %59, %62 : vector<16x1xf32>
    %64 = math.rsqrt %63 : vector<16x1xf32>
    %65 = vector.broadcast %64 : vector<16x1xf32> to vector<16x128xf32>
    %66 = arith.mulf %61, %65 : vector<16x128xf32>
    %67 = vector.broadcast %47 : vector<1x128xf32> to vector<16x128xf32>
    %68 = arith.mulf %66, %67 : vector<16x128xf32>
    %69 = vector.broadcast %48 : vector<1x128xf32> to vector<16x128xf32>
    %70 = arith.addf %68, %69 : vector<16x128xf32>
    %71 = arith.truncf %70 : vector<16x128xf32> to vector<16x128xbf16>
    %c0_33 = arith.constant 0 : index
    %c0_34 = arith.constant 0 : index
    %c0_35 = arith.constant 0 : index
    %72 = vector.load %arg35[%c0_33, %c0_34, %c0_35] : memref<4x16x32xbf16, #tpu.memory_space<vmem>>, vector<4x16x32xbf16>
    %c0_36 = arith.constant 0 : index
    %c0_37 = arith.constant 0 : index
    %c0_38 = arith.constant 0 : index
    %73 = vector.load %arg36[%c0_36, %c0_37, %c0_38] : memref<4x16x32xbf16, #tpu.memory_space<vmem>>, vector<4x16x32xbf16>
    %c0_39 = arith.constant 0 : index
    %c0_40 = arith.constant 0 : index
    %c0_41 = arith.constant 0 : index
    %74 = vector.load %arg5[%c0_39, %c0_40, %c0_41] : memref<1x16x16xbf16, #tpu.memory_space<vmem>>, vector<1x16x16xbf16>
    %75 = vector.shape_cast %74 : vector<1x16x16xbf16> to vector<16x16xbf16>
    %c0_42 = arith.constant 0 : index
    %c0_43 = arith.constant 0 : index
    %76 = vector.load %arg16[%c0_42, %c0_43] : memref<128x128xbf16, #tpu.memory_space<vmem>>, vector<128x128xbf16>
    %c0_44 = arith.constant 0 : index
    %c0_45 = arith.constant 0 : index
    %77 = vector.load %arg17[%c0_44, %c0_45] : memref<1x128xf32, #tpu.memory_space<vmem>>, vector<1x128xf32>
    %c0_46 = arith.constant 0 : index
    %c0_47 = arith.constant 0 : index
    %78 = vector.load %arg22[%c0_46, %c0_47] : memref<128x128xbf16, #tpu.memory_space<vmem>>, vector<128x128xbf16>
    %c0_48 = arith.constant 0 : index
    %c0_49 = arith.constant 0 : index
    %79 = vector.load %arg23[%c0_48, %c0_49] : memref<1x128xf32, #tpu.memory_space<vmem>>, vector<1x128xf32>
    %cst_50 = arith.constant dense<0.000000e+00> : vector<16x128xf32>
    %80 = tpu.matmul %71, %76, %cst_50 {dimension_numbers = #tpu.dot_dimension_numbers<[1], [0], [0], [1], [0, 0, 1, 1], [], []>} : vector<16x128xbf16>, vector<128x128xbf16>, vector<16x128xf32> -> vector<16x128xf32>
    %81 = vector.broadcast %77 : vector<1x128xf32> to vector<16x128xf32>
    %82 = arith.addf %80, %81 : vector<16x128xf32>
    %83 = vector.shape_cast %82 : vector<16x128xf32> to vector<16x4x32xf32>
    %84 = tpu.transpose %83, [1, 0, 2] : vector<16x4x32xf32> -> vector<4x16x32xf32>
    %85 = arith.truncf %84 : vector<4x16x32xf32> to vector<4x16x32xbf16>
    "tpu.trace_start"() <{level = 10 : i32, message = "hqd,hkd->hqk"}> : () -> ()
    %cst_51 = arith.constant dense<0.000000e+00> : vector<4x16x16xf32>
    %86 = tpu.matmul %85, %72, %cst_51 {dimension_numbers = #tpu.dot_dimension_numbers<[2], [2], [1], [1], [0, 0, 0, 1, 1, 1], [0], [0]>} : vector<4x16x32xbf16>, vector<4x16x32xbf16>, vector<4x16x16xf32> -> vector<4x16x16xf32>
    "tpu.trace_stop"() : () -> ()
    %87 = arith.extf %75 : vector<16x16xbf16> to vector<16x16xf32>
    %88 = vector.shape_cast %87 : vector<16x16xf32> to vector<1x16x16xf32>
    %89 = vector.broadcast %88 : vector<1x16x16xf32> to vector<4x16x16xf32>
    %90 = arith.addf %86, %89 : vector<4x16x16xf32>
    %cst_52 = arith.constant dense<0xFF800000> : vector<4x16xf32>
    %91 = vector.multi_reduction <maximumf>, %90, %cst_52 [2] : vector<4x16x16xf32> to vector<4x16xf32>
    %92 = vector.shape_cast %91 : vector<4x16xf32> to vector<4x16x1xf32>
    %93 = vector.broadcast %92 : vector<4x16x1xf32> to vector<4x16x16xf32>
    %94 = arith.subf %90, %93 : vector<4x16x16xf32>
    %95 = math.exp %94 : vector<4x16x16xf32>
    %cst_53 = arith.constant dense<0.000000e+00> : vector<4x16xf32>
    %96 = vector.multi_reduction <add>, %95, %cst_53 [2] : vector<4x16x16xf32> to vector<4x16xf32>
    %97 = vector.shape_cast %96 : vector<4x16xf32> to vector<4x16x1xf32>
    %98 = tpu.reciprocal %97 {approx = true} : vector<4x16x1xf32> -> vector<4x16x1xf32>
    %99 = vector.broadcast %98 : vector<4x16x1xf32> to vector<4x16x16xf32>
    %100 = arith.mulf %95, %99 : vector<4x16x16xf32>
    %101 = arith.truncf %100 : vector<4x16x16xf32> to vector<4x16x16xbf16>
    "tpu.trace_start"() <{level = 10 : i32, message = "hqk,hkd->hqd"}> : () -> ()
    %cst_54 = arith.constant dense<0.000000e+00> : vector<4x16x32xf32>
    %102 = tpu.matmul %101, %73, %cst_54 {dimension_numbers = #tpu.dot_dimension_numbers<[2], [1], [1], [2], [0, 0, 0, 1, 1, 2], [0], [0]>} : vector<4x16x16xbf16>, vector<4x16x32xbf16>, vector<4x16x32xf32> -> vector<4x16x32xf32>
    "tpu.trace_stop"() : () -> ()
    %103 = tpu.transpose %102, [1, 0, 2] : vector<4x16x32xf32> -> vector<16x4x32xf32>
    %104 = vector.shape_cast %103 : vector<16x4x32xf32> to vector<16x128xf32>
    %105 = arith.truncf %104 : vector<16x128xf32> to vector<16x128xbf16>
    %cst_55 = arith.constant dense<0.000000e+00> : vector<16x128xf32>
    %106 = tpu.matmul %105, %78, %cst_55 {dimension_numbers = #tpu.dot_dimension_numbers<[1], [0], [0], [1], [0, 0, 1, 1], [], []>} : vector<16x128xbf16>, vector<128x128xbf16>, vector<16x128xf32> -> vector<16x128xf32>
    %107 = vector.broadcast %79 : vector<1x128xf32> to vector<16x128xf32>
    %108 = arith.addf %106, %107 : vector<16x128xf32>
    %109 = arith.addf %70, %108 : vector<16x128xf32>
    %c0_56 = arith.constant 0 : index
    %c0_57 = arith.constant 0 : index
    %110 = vector.load %arg24[%c0_56, %c0_57] : memref<1x128xf32, #tpu.memory_space<vmem>>, vector<1x128xf32>
    %c0_58 = arith.constant 0 : index
    %c0_59 = arith.constant 0 : index
    %111 = vector.load %arg25[%c0_58, %c0_59] : memref<1x128xf32, #tpu.memory_space<vmem>>, vector<1x128xf32>
    %cst_60 = arith.constant dense<0.000000e+00> : vector<16xf32>
    %112 = vector.multi_reduction <add>, %109, %cst_60 [1] : vector<16x128xf32> to vector<16xf32>
    %113 = vector.shape_cast %112 : vector<16xf32> to vector<16x1xf32>
    %cst_61 = arith.constant 1.280000e+02 : f32
    %114 = vector.broadcast %cst_61 : f32 to vector<16x1xf32>
    %115 = arith.divf %113, %114 : vector<16x1xf32>
    %116 = vector.broadcast %115 : vector<16x1xf32> to vector<16x128xf32>
    %117 = arith.subf %109, %116 : vector<16x128xf32>
    %118 = arith.mulf %117, %117 : vector<16x128xf32>
    %cst_62 = arith.constant dense<0.000000e+00> : vector<16xf32>
    %119 = vector.multi_reduction <add>, %118, %cst_62 [1] : vector<16x128xf32> to vector<16xf32>
    %120 = vector.shape_cast %119 : vector<16xf32> to vector<16x1xf32>
    %cst_63 = arith.constant 1.280000e+02 : f32
    %121 = vector.broadcast %cst_63 : f32 to vector<16x1xf32>
    %122 = arith.divf %120, %121 : vector<16x1xf32>
    %123 = vector.broadcast %115 : vector<16x1xf32> to vector<16x128xf32>
    %124 = arith.subf %109, %123 : vector<16x128xf32>
    %cst_64 = arith.constant 9.99999996E-13 : f32
    %125 = vector.broadcast %cst_64 : f32 to vector<16x1xf32>
    %126 = arith.addf %122, %125 : vector<16x1xf32>
    %127 = math.rsqrt %126 : vector<16x1xf32>
    %128 = vector.broadcast %127 : vector<16x1xf32> to vector<16x128xf32>
    %129 = arith.mulf %124, %128 : vector<16x128xf32>
    %130 = vector.broadcast %110 : vector<1x128xf32> to vector<16x128xf32>
    %131 = arith.mulf %129, %130 : vector<16x128xf32>
    %132 = vector.broadcast %111 : vector<1x128xf32> to vector<16x128xf32>
    %133 = arith.addf %131, %132 : vector<16x128xf32>
    %134 = arith.truncf %133 : vector<16x128xf32> to vector<16x128xbf16>
    %c0_65 = arith.constant 0 : index
    %c0_66 = arith.constant 0 : index
    %135 = vector.load %arg26[%c0_65, %c0_66] : memref<128x256xbf16, #tpu.memory_space<vmem>>, vector<128x256xbf16>
    %cst_67 = arith.constant dense<0.000000e+00> : vector<16x256xf32>
    %136 = tpu.matmul %134, %135, %cst_67 {dimension_numbers = #tpu.dot_dimension_numbers<[1], [0], [0], [1], [0, 0, 1, 1], [], []>} : vector<16x128xbf16>, vector<128x256xbf16>, vector<16x256xf32> -> vector<16x256xf32>
    %c0_68 = arith.constant 0 : index
    %c0_69 = arith.constant 0 : index
    %137 = vector.load %arg27[%c0_68, %c0_69] : memref<1x256xf32, #tpu.memory_space<vmem>>, vector<1x256xf32>
    %138 = vector.broadcast %137 : vector<1x256xf32> to vector<16x256xf32>
    %139 = arith.addf %136, %138 : vector<16x256xf32>
    %cst_70 = arith.constant 0.000000e+00 : f32
    %140 = vector.broadcast %cst_70 : f32 to vector<16x256xf32>
    %141 = arith.maximumf %139, %140 : vector<16x256xf32>
    %142 = arith.truncf %141 : vector<16x256xf32> to vector<16x256xbf16>
    %c0_71 = arith.constant 0 : index
    %c0_72 = arith.constant 0 : index
    %143 = vector.load %arg28[%c0_71, %c0_72] : memref<256x128xbf16, #tpu.memory_space<vmem>>, vector<256x128xbf16>
    %cst_73 = arith.constant dense<0.000000e+00> : vector<16x128xf32>
    %144 = tpu.matmul %142, %143, %cst_73 {dimension_numbers = #tpu.dot_dimension_numbers<[1], [0], [0], [1], [0, 0, 1, 1], [], []>} : vector<16x256xbf16>, vector<256x128xbf16>, vector<16x128xf32> -> vector<16x128xf32>
    %c0_74 = arith.constant 0 : index
    %c0_75 = arith.constant 0 : index
    %145 = vector.load %arg29[%c0_74, %c0_75] : memref<1x128xf32, #tpu.memory_space<vmem>>, vector<1x128xf32>
    %146 = vector.broadcast %145 : vector<1x128xf32> to vector<16x128xf32>
    %147 = arith.addf %144, %146 : vector<16x128xf32>
    %148 = arith.addf %133, %147 : vector<16x128xf32>
    %c0_76 = arith.constant 0 : index
    %c0_77 = arith.constant 0 : index
    %149 = vector.load %arg30[%c0_76, %c0_77] : memref<1x128xf32, #tpu.memory_space<vmem>>, vector<1x128xf32>
    %c0_78 = arith.constant 0 : index
    %c0_79 = arith.constant 0 : index
    %150 = vector.load %arg31[%c0_78, %c0_79] : memref<1x128xf32, #tpu.memory_space<vmem>>, vector<1x128xf32>
    %cst_80 = arith.constant dense<0.000000e+00> : vector<16xf32>
    %151 = vector.multi_reduction <add>, %148, %cst_80 [1] : vector<16x128xf32> to vector<16xf32>
    %152 = vector.shape_cast %151 : vector<16xf32> to vector<16x1xf32>
    %cst_81 = arith.constant 1.280000e+02 : f32
    %153 = vector.broadcast %cst_81 : f32 to vector<16x1xf32>
    %154 = arith.divf %152, %153 : vector<16x1xf32>
    %155 = vector.broadcast %154 : vector<16x1xf32> to vector<16x128xf32>
    %156 = arith.subf %148, %155 : vector<16x128xf32>
    %157 = arith.mulf %156, %156 : vector<16x128xf32>
    %cst_82 = arith.constant dense<0.000000e+00> : vector<16xf32>
    %158 = vector.multi_reduction <add>, %157, %cst_82 [1] : vector<16x128xf32> to vector<16xf32>
    %159 = vector.shape_cast %158 : vector<16xf32> to vector<16x1xf32>
    %cst_83 = arith.constant 1.280000e+02 : f32
    %160 = vector.broadcast %cst_83 : f32 to vector<16x1xf32>
    %161 = arith.divf %159, %160 : vector<16x1xf32>
    %162 = vector.broadcast %154 : vector<16x1xf32> to vector<16x128xf32>
    %163 = arith.subf %148, %162 : vector<16x128xf32>
    %cst_84 = arith.constant 9.99999996E-13 : f32
    %164 = vector.broadcast %cst_84 : f32 to vector<16x1xf32>
    %165 = arith.addf %161, %164 : vector<16x1xf32>
    %166 = math.rsqrt %165 : vector<16x1xf32>
    %167 = vector.broadcast %166 : vector<16x1xf32> to vector<16x128xf32>
    %168 = arith.mulf %163, %167 : vector<16x128xf32>
    %169 = vector.broadcast %149 : vector<1x128xf32> to vector<16x128xf32>
    %170 = arith.mulf %168, %169 : vector<16x128xf32>
    %171 = vector.broadcast %150 : vector<1x128xf32> to vector<16x128xf32>
    %172 = arith.addf %170, %171 : vector<16x128xf32>
    %c0_85 = arith.constant 0 : index
    %c0_86 = arith.constant 0 : index
    %c0_87 = arith.constant 0 : index
    %173 = vector.load %arg32[%c0_85, %c0_86, %c0_87] : memref<1x16x128xf32, #tpu.memory_space<vmem>>, vector<1x16x128xf32>
    %174 = vector.shape_cast %173 : vector<1x16x128xf32> to vector<16x128xf32>
    %175 = vector.shape_cast %172 : vector<16x128xf32> to vector<1x16x128xf32>
    tpu.vector_store %arg32[%c0_85, %c0_86, %c0_87], %175 {strides = array<i32>} : memref<1x16x128xf32, #tpu.memory_space<vmem>>, vector<1x16x128xf32>,
    return
  }
  func.func @transform_0(%arg0: i32, %arg1: i32) -> (i32, i32, i32) {
    %c0_i32 = arith.constant 0 : i32
    %c0_i32_0 = arith.constant 0 : i32
    %c0_i32_1 = arith.constant 0 : i32
    return %arg0, %c0_i32, %c0_i32_0 : i32, i32, i32
  }
  func.func @transform_1(%arg0: i32, %arg1: i32) -> (i32, i32, i32) {
    %c0_i32 = arith.constant 0 : i32
    %c0_i32_0 = arith.constant 0 : i32
    %c0_i32_1 = arith.constant 0 : i32
    return %arg0, %c0_i32, %c0_i32_0 : i32, i32, i32
  }
  func.func @transform_2(%arg0: i32, %arg1: i32) -> (i32, i32, i32) {
    %c0_i32 = arith.constant 0 : i32
    %c0_i32_0 = arith.constant 0 : i32
    return %arg0, %arg1, %c0_i32 : i32, i32, i32
  }
  func.func @transform_3(%arg0: i32, %arg1: i32) -> (i32, i32, i32) {
    %c0_i32 = arith.constant 0 : i32
    %c0_i32_0 = arith.constant 0 : i32
    return %arg0, %arg1, %c0_i32 : i32, i32, i32
  }
  func.func @transform_4(%arg0: i32, %arg1: i32) -> (i32, i32) {
    %c0_i32 = arith.constant 0 : i32
    %c0_i32_0 = arith.constant 0 : i32
    %c0_i32_1 = arith.constant 0 : i32
    return %c0_i32, %c0_i32_0 : i32, i32
  }
  func.func @transform_5(%arg0: i32, %arg1: i32) -> (i32, i32) {
    %c0_i32 = arith.constant 0 : i32
    %c0_i32_0 = arith.constant 0 : i32
    %c0_i32_1 = arith.constant 0 : i32
    return %c0_i32, %c0_i32_0 : i32, i32
  }
  func.func @transform_6(%arg0: i32, %arg1: i32) -> (i32, i32) {
    %c0_i32 = arith.constant 0 : i32
    %c0_i32_0 = arith.constant 0 : i32
    %c0_i32_1 = arith.constant 0 : i32
    return %c0_i32, %c0_i32_0 : i32, i32
  }
  func.func @transform_7(%arg0: i32, %arg1: i32) -> (i32, i32) {
    %c0_i32 = arith.constant 0 : i32
    %c0_i32_0 = arith.constant 0 : i32
    %c0_i32_1 = arith.constant 0 : i32
    return %c0_i32, %c0_i32_0 : i32, i32
  }
  func.func @transform_8(%arg0: i32, %arg1: i32) -> (i32, i32) {
    %c0_i32 = arith.constant 0 : i32
    %c0_i32_0 = arith.constant 0 : i32
    %c0_i32_1 = arith.constant 0 : i32
    return %c0_i32, %c0_i32_0 : i32, i32
  }
  func.func @transform_9(%arg0: i32, %arg1: i32) -> (i32, i32) {
    %c0_i32 = arith.constant 0 : i32
    %c0_i32_0 = arith.constant 0 : i32
    %c0_i32_1 = arith.constant 0 : i32
    return %c0_i32, %c0_i32_0 : i32, i32
  }
  func.func @transform_10(%arg0: i32, %arg1: i32) -> (i32, i32) {
    %c0_i32 = arith.constant 0 : i32
    %c0_i32_0 = arith.constant 0 : i32
    %c0_i32_1 = arith.constant 0 : i32
    return %c0_i32, %c0_i32_0 : i32, i32
  }
  func.func @transform_11(%arg0: i32, %arg1: i32) -> (i32, i32) {
    %c0_i32 = arith.constant 0 : i32
    %c0_i32_0 = arith.constant 0 : i32
    %c0_i32_1 = arith.constant 0 : i32
    return %c0_i32, %c0_i32_0 : i32, i32
  }
  func.func @transform_12(%arg0: i32, %arg1: i32) -> (i32, i32) {
    %c0_i32 = arith.constant 0 : i32
    %c0_i32_0 = arith.constant 0 : i32
    %c0_i32_1 = arith.constant 0 : i32
    return %c0_i32, %c0_i32_0 : i32, i32
  }
  func.func @transform_13(%arg0: i32, %arg1: i32) -> (i32, i32) {
    %c0_i32 = arith.constant 0 : i32
    %c0_i32_0 = arith.constant 0 : i32
    %c0_i32_1 = arith.constant 0 : i32
    return %c0_i32, %c0_i32_0 : i32, i32
  }
  func.func @transform_14(%arg0: i32, %arg1: i32) -> (i32, i32) {
    %c0_i32 = arith.constant 0 : i32
    %c0_i32_0 = arith.constant 0 : i32
    %c0_i32_1 = arith.constant 0 : i32
    return %c0_i32, %c0_i32_0 : i32, i32
  }
  func.func @transform_15(%arg0: i32, %arg1: i32) -> (i32, i32) {
    %c0_i32 = arith.constant 0 : i32
    %c0_i32_0 = arith.constant 0 : i32
    %c0_i32_1 = arith.constant 0 : i32
    return %c0_i32, %c0_i32_0 : i32, i32
  }
  func.func @transform_16(%arg0: i32, %arg1: i32) -> (i32, i32) {
    %c0_i32 = arith.constant 0 : i32
    %c0_i32_0 = arith.constant 0 : i32
    %c0_i32_1 = arith.constant 0 : i32
    return %c0_i32, %c0_i32_0 : i32, i32
  }
  func.func @transform_17(%arg0: i32, %arg1: i32) -> (i32, i32) {
    %c0_i32 = arith.constant 0 : i32
    %c0_i32_0 = arith.constant 0 : i32
    %c0_i32_1 = arith.constant 0 : i32
    return %c0_i32, %c0_i32_0 : i32, i32
  }
  func.func @transform_18(%arg0: i32, %arg1: i32) -> (i32, i32) {
    %c0_i32 = arith.constant 0 : i32
    %c0_i32_0 = arith.constant 0 : i32
    %c0_i32_1 = arith.constant 0 : i32
    return %c0_i32, %c0_i32_0 : i32, i32
  }
  func.func @transform_19(%arg0: i32, %arg1: i32) -> (i32, i32) {
    %c0_i32 = arith.constant 0 : i32
    %c0_i32_0 = arith.constant 0 : i32
    %c0_i32_1 = arith.constant 0 : i32
    return %c0_i32, %c0_i32_0 : i32, i32
  }
  func.func @transform_20(%arg0: i32, %arg1: i32) -> (i32, i32) {
    %c0_i32 = arith.constant 0 : i32
    %c0_i32_0 = arith.constant 0 : i32
    %c0_i32_1 = arith.constant 0 : i32
    return %c0_i32, %c0_i32_0 : i32, i32
  }
  func.func @transform_21(%arg0: i32, %arg1: i32) -> (i32, i32) {
    %c0_i32 = arith.constant 0 : i32
    %c0_i32_0 = arith.constant 0 : i32
    %c0_i32_1 = arith.constant 0 : i32
    return %c0_i32, %c0_i32_0 : i32, i32
  }
  func.func @transform_22(%arg0: i32, %arg1: i32) -> (i32, i32) {
    %c0_i32 = arith.constant 0 : i32
    %c0_i32_0 = arith.constant 0 : i32
    %c0_i32_1 = arith.constant 0 : i32
    return %c0_i32, %c0_i32_0 : i32, i32
  }
  func.func @transform_23(%arg0: i32, %arg1: i32) -> (i32, i32) {
    %c0_i32 = arith.constant 0 : i32
    %c0_i32_0 = arith.constant 0 : i32
    %c0_i32_1 = arith.constant 0 : i32
    return %c0_i32, %c0_i32_0 : i32, i32
  }
  func.func @transform_24(%arg0: i32, %arg1: i32) -> (i32, i32) {
    %c0_i32 = arith.constant 0 : i32
    %c0_i32_0 = arith.constant 0 : i32
    %c0_i32_1 = arith.constant 0 : i32
    return %c0_i32, %c0_i32_0 : i32, i32
  }
  func.func @transform_25(%arg0: i32, %arg1: i32) -> (i32, i32) {
    %c0_i32 = arith.constant 0 : i32
    %c0_i32_0 = arith.constant 0 : i32
    %c0_i32_1 = arith.constant 0 : i32
    return %c0_i32, %c0_i32_0 : i32, i32
  }
  func.func @transform_26(%arg0: i32, %arg1: i32) -> (i32, i32) {
    %c0_i32 = arith.constant 0 : i32
    %c0_i32_0 = arith.constant 0 : i32
    %c0_i32_1 = arith.constant 0 : i32
    return %c0_i32, %c0_i32_0 : i32, i32
  }
  func.func @transform_27(%arg0: i32, %arg1: i32) -> (i32, i32) {
    %c0_i32 = arith.constant 0 : i32
    %c0_i32_0 = arith.constant 0 : i32
    %c0_i32_1 = arith.constant 0 : i32
    return %c0_i32, %c0_i32_0 : i32, i32
  }
  func.func @transform_28(%arg0: i32, %arg1: i32) -> (i32, i32) {
    %c0_i32 = arith.constant 0 : i32
    %c0_i32_0 = arith.constant 0 : i32
    %c0_i32_1 = arith.constant 0 : i32
    return %c0_i32, %c0_i32_0 : i32, i32
  }
  func.func @transform_29(%arg0: i32, %arg1: i32) -> (i32, i32) {
    %c0_i32 = arith.constant 0 : i32
    %c0_i32_0 = arith.constant 0 : i32
    %c0_i32_1 = arith.constant 0 : i32
    return %c0_i32, %c0_i32_0 : i32, i32
  }
  func.func @transform_30(%arg0: i32, %arg1: i32) -> (i32, i32, i32) {
    %c0_i32 = arith.constant 0 : i32
    %c0_i32_0 = arith.constant 0 : i32
    return %arg0, %arg1, %c0_i32 : i32, i32, i32
  }
}

</mosaic_0001>

<llo_original>
// kernel: tpu_custom_call.1
$region0: #{tpu_custom_call.1}
  #allocation0 [shape = 'u32[]', space=smem, size = 0x4, offset = 0x4, fixed_abs, tag = 'smem constant byte address 0x4 - core index']
  #allocation1 [shape = 'u32[72,128]{1,0:T(1,128)}', space=vmem, size = 0x9000, scoped, tag = 'internal scratch']
  #allocation2 [shape = 'bf16[4,32,32]{2,1,0:T(8,128)(2,1)}', space=vmem, size = 0x8000, scoped, tag = 'scratch operand']
  #allocation3 [shape = 'bf16[4,32,32]{2,1,0:T(8,128)(2,1)}', space=vmem, size = 0x8000, scoped, tag = 'scratch operand']
  #allocation4 [shape = 'bf16[4,16,32]{2,1,0:T(8,128)(2,1)}', space=vmem, size = 0x4000, scoped, tag = 'scratch operand']
  #allocation5 [shape = 'bf16[4,16,32]{2,1,0:T(8,128)(2,1)}', space=vmem, size = 0x4000, scoped, tag = 'scratch operand']
  %s0 = inlined_call_operand.smem [shape: u32[31], index: -1, kind: input, shape index: {}]
  %s1 = sld [smem:[%s0]]
  %s2 = scalar_lea.smem %s0, 1
  %s3 = sld [smem:[%s2]]
  %s4 = scalar_lea.smem %s0, 2
  %s5 = sld [smem:[%s4]]
  %s6 = scalar_lea.smem %s0, 3
  %s7 = sld [smem:[%s6]]
  %s8 = scalar_lea.smem %s0, 4
  %s9 = sld [smem:[%s8]]
  %s10 = scalar_lea.smem %s0, 5
  %s11 = sld [smem:[%s10]]
  %s12 = scalar_lea.smem %s0, 6
  %s13 = sld [smem:[%s12]]
  %s14 = scalar_lea.smem %s0, 7
  %s15 = sld [smem:[%s14]]
  %s16 = scalar_lea.smem %s0, 8
  %s17 = sld [smem:[%s16]]
  %s18 = scalar_lea.smem %s0, 9
  %s19 = sld [smem:[%s18]]
  %s20 = scalar_lea.smem %s0, 10
  %s21 = sld [smem:[%s20]]
  %s22 = scalar_lea.smem %s0, 11
  %s23 = sld [smem:[%s22]]
  %s24 = scalar_lea.smem %s0, 12
  %s25 = sld [smem:[%s24]]
  %s26 = scalar_lea.smem %s0, 13
  %s27 = sld [smem:[%s26]]
  %s28 = scalar_lea.smem %s0, 14
  %s29 = sld [smem:[%s28]]
  %s30 = scalar_lea.smem %s0, 15
  %s31 = sld [smem:[%s30]]
  %s32 = scalar_lea.smem %s0, 16
  %s33 = sld [smem:[%s32]]
  %s34 = scalar_lea.smem %s0, 17
  %s35 = sld [smem:[%s34]]
  %s36 = scalar_lea.smem %s0, 18
  %s37 = sld [smem:[%s36]]
  %s38 = scalar_lea.smem %s0, 19
  %s39 = sld [smem:[%s38]]
  %s40 = scalar_lea.smem %s0, 20
  %s41 = sld [smem:[%s40]]
  %s42 = scalar_lea.smem %s0, 21
  %s43 = sld [smem:[%s42]]
  %s44 = scalar_lea.smem %s0, 22
  %s45 = sld [smem:[%s44]]
  %s46 = scalar_lea.smem %s0, 23
  %s47 = sld [smem:[%s46]]
  %s48 = scalar_lea.smem %s0, 24
  %s49 = sld [smem:[%s48]]
  %s50 = scalar_lea.smem %s0, 25
  %s51 = sld [smem:[%s50]]
  %s52 = scalar_lea.smem %s0, 26
  %s53 = sld [smem:[%s52]]
  %s54 = scalar_lea.smem %s0, 27
  %s55 = sld [smem:[%s54]]
  %s56 = scalar_lea.smem %s0, 28
  %s57 = sld [smem:[%s56]]
  %s58 = scalar_lea.smem %s0, 29
  %s59 = sld [smem:[%s58]]
  %s60 = scalar_lea.smem %s0, 30
  %s61 = sld [smem:[%s60]]
  %s62 = sld [smem:[#allocation0]]
  $region241: #{tpu_custom_call.1} parent=0
    _
  %s64 = ssub.s32 1, %s62
  %s65 = scalar_select 0, %s64, %s62
  $region1: #{tpu_custom_call.1} parent=0
    #allocation6 [shape = 'u8[16384]{0}', space=vmem, size = 0x4000, scoped, tag = 'input window, operand 0']
    #allocation7 [shape = 's32[2]{0}', space=sflag, size = 0x8, scoped, tag = 'scoped memory for tpu_custom_call.1']
    #allocation8 [shape = 's32[2]{0}', space=sflag, size = 0x8, scoped, tag = 'scoped memory for tpu_custom_call.1']
    #allocation9 [shape = 'u8[8192]{0}', space=vmem, size = 0x2000, scoped, tag = 'input window, operand 1']
    #allocation10 [shape = 's32[2]{0}', space=sflag, size = 0x8, scoped, tag = 'scoped memory for tpu_custom_call.1']
    #allocation11 [shape = 'u8[8192]{0}', space=vmem, size = 0x2000, scoped, tag = 'input window, operand 2']
    #allocation12 [shape = 'u8[32768]{0}', space=vmem, size = 0x8000, scoped, tag = 'input window, operand 4, single buffered']
    #allocation13 [shape = 's32[1]{0}', space=sflag, size = 0x4, scoped, tag = 'scoped memory for tpu_custom_call.1']
    #allocation14 [shape = 'u8[512]{0}', space=vmem, size = 0x400, scoped, tag = 'input window, operand 5, single buffered']
    #allocation15 [shape = 'u8[32768]{0}', space=vmem, size = 0x8000, scoped, tag = 'input window, operand 6, single buffered']
    #allocation16 [shape = 's32[1]{0}', space=sflag, size = 0x4, scoped, tag = 'scoped memory for tpu_custom_call.1']
    #allocation17 [shape = 'u8[512]{0}', space=vmem, size = 0x400, scoped, tag = 'input window, operand 7, single buffered']
    #allocation18 [shape = 'u8[32768]{0}', space=vmem, size = 0x8000, scoped, tag = 'input window, operand 8, single buffered']
    #allocation19 [shape = 's32[1]{0}', space=sflag, size = 0x4, scoped, tag = 'scoped memory for tpu_custom_call.1']
    #allocation20 [shape = 'u8[512]{0}', space=vmem, size = 0x400, scoped, tag = 'input window, operand 9, single buffered']
    #allocation21 [shape = 'u8[32768]{0}', space=vmem, size = 0x8000, scoped, tag = 'input window, operand 10, single buffered']
    #allocation22 [shape = 's32[1]{0}', space=sflag, size = 0x4, scoped, tag = 'scoped memory for tpu_custom_call.1']
    #allocation23 [shape = 'u8[512]{0}', space=vmem, size = 0x400, scoped, tag = 'input window, operand 11, single buffered']
    #allocation24 [shape = 'u8[512]{0}', space=vmem, size = 0x400, scoped, tag = 'input window, operand 12, single buffered']
    #allocation25 [shape = 's32[1]{0}', space=sflag, size = 0x4, scoped, tag = 'scoped memory for tpu_custom_call.1']
    #allocation26 [shape = 'u8[512]{0}', space=vmem, size = 0x400, scoped, tag = 'input window, operand 13, single buffered']
    #allocation27 [shape = 'u8[32768]{0}', space=vmem, size = 0x8000, scoped, tag = 'input window, operand 14, single buffered']
    #allocation28 [shape = 's32[1]{0}', space=sflag, size = 0x4, scoped, tag = 'scoped memory for tpu_custom_call.1']
    #allocation29 [shape = 'u8[512]{0}', space=vmem, size = 0x400, scoped, tag = 'input window, operand 15, single buffered']
    #allocation30 [shape = 'u8[32768]{0}', space=vmem, size = 0x8000, scoped, tag = 'input window, operand 16, single buffered']
    #allocation31 [shape = 's32[1]{0}', space=sflag, size = 0x4, scoped, tag = 'scoped memory for tpu_custom_call.1']
    #allocation32 [shape = 'u8[512]{0}', space=vmem, size = 0x400, scoped, tag = 'input window, operand 17, single buffered']
    #allocation33 [shape = 'u8[512]{0}', space=vmem, size = 0x400, scoped, tag = 'input window, operand 19, single buffered']
    #allocation34 [shape = 's32[1]{0}', space=sflag, size = 0x4, scoped, tag = 'scoped memory for tpu_custom_call.1']
    #allocation35 [shape = 'u8[32768]{0}', space=vmem, size = 0x8000, scoped, tag = 'input window, operand 20, single buffered']
    #allocation36 [shape = 'u8[65536]{0}', space=vmem, size = 0x10000, scoped, tag = 'input window, operand 24, single buffered']
    #allocation37 [shape = 's32[1]{0}', space=sflag, size = 0x4, scoped, tag = 'scoped memory for tpu_custom_call.1']
    #allocation38 [shape = 'u8[65536]{0}', space=vmem, size = 0x10000, scoped, tag = 'input window, operand 26, single buffered']
    #allocation39 [shape = 'u8[16384]{0}', space=vmem, size = 0x4000, scoped, tag = 'output window, operand 0']
    %66 = vsyncpa [#allocation7], 0
    %s67 = scalar_lea.sflag [#allocation7], 1
    %68 = vsyncpa %s67, 0
    %69 = vsyncpa [#allocation10], 0
    %s70 = scalar_lea.sflag [#allocation10], 1
    %71 = vsyncpa %s70, 0
    %72 = vsyncpa [#allocation13], 0
    %73 = vsyncpa [#allocation16], 0
    %74 = vsyncpa [#allocation19], 0
    %75 = vsyncpa [#allocation22], 0
    %76 = vsyncpa [#allocation25], 0
    %77 = vsyncpa [#allocation28], 0
    %78 = vsyncpa [#allocation31], 0
    %79 = vsyncpa [#allocation34], 0
    %80 = vsyncpa [#allocation37], 0
    %81 = vsyncpa [#allocation8], 0
    %s82 = scalar_lea.sflag [#allocation8], 1
    %83 = vsyncpa %s82, 0
    loop: start=0, step=1, limit=6
    $region2: #{tpu_custom_call.1} parent=1 // loop_pre_header
      _
    $region3: #{tpu_custom_call.1} parent=1 // loop_header
      %s85 = sphi 0, %s89
      %p86 = scmp.ge.s32.totalorder %s85, 6
      %s92 = sphi 0, %s104
      %s93 = sphi 0, %s100
      %s94 = sphi 0, %s92
      %s95 = sphi 0, %s93
      %s96 = sphi 0, %s94
      %s97 = sphi 0, %s95
      %s107 = sphi 0, %s109
      %s110 = sphi 0, %s107
      %s111 = sphi 0, %s110
      %s127 = sphi 0, %s111
      %s133 = sphi 0, %s135
      %s136 = sphi 0, %s133
      %s137 = sphi 0, %s136
      %s153 = sphi 0, %s137
      %s161 = sphi 0, %s163
      %s164 = sphi 0, %s161
      %s165 = sphi 0, %s164
      %s181 = sphi 0, %s165
      %s189 = sphi 0, %s191
      %s192 = sphi 0, %s189
      %s193 = sphi 0, %s192
      %s209 = sphi 0, %s193
      %s213 = sphi 0, %s213
      %s215 = sphi 0, %s213
      %s216 = sphi 0, %s215
      %s230 = sphi 0, %s216
      %s234 = sphi 0, %s234
      %s236 = sphi 0, %s234
      %s237 = sphi 0, %s236
      %s251 = sphi 0, %s237
      %s255 = sphi 0, %s255
      %s257 = sphi 0, %s255
      %s258 = sphi 0, %s257
      %s272 = sphi 0, %s258
      %s276 = sphi 0, %s276
      %s278 = sphi 0, %s276
      %s279 = sphi 0, %s278
      %s293 = sphi 0, %s279
      %s297 = sphi 0, %s297
      %s299 = sphi 0, %s297
      %s300 = sphi 0, %s299
      %s314 = sphi 0, %s300
      %s318 = sphi 0, %s318
      %s320 = sphi 0, %s318
      %s321 = sphi 0, %s320
      %s335 = sphi 0, %s321
      %s339 = sphi 0, %s339
      %s341 = sphi 0, %s339
      %s342 = sphi 0, %s341
      %s356 = sphi 0, %s342
      %s360 = sphi 0, %s360
      %s362 = sphi 0, %s360
      %s363 = sphi 0, %s362
      %s377 = sphi 0, %s363
      %s381 = sphi 0, %s381
      %s383 = sphi 0, %s381
      %s384 = sphi 0, %s383
      %s398 = sphi 0, %s384
      %s402 = sphi 0, %s402
      %s404 = sphi 0, %s402
      %s405 = sphi 0, %s404
      %s419 = sphi 0, %s405
      %s423 = sphi 0, %s423
      %s425 = sphi 0, %s423
      %s426 = sphi 0, %s425
      %s440 = sphi 0, %s426
      %s444 = sphi 0, %s444
      %s446 = sphi 0, %s444
      %s447 = sphi 0, %s446
      %s461 = sphi 0, %s447
      %s465 = sphi 0, %s465
      %s467 = sphi 0, %s465
      %s468 = sphi 0, %s467
      %s482 = sphi 0, %s468
      %s486 = sphi 0, %s486
      %s488 = sphi 0, %s486
      %s489 = sphi 0, %s488
      %s503 = sphi 0, %s489
      %s507 = sphi 0, %s507
      %s509 = sphi 0, %s507
      %s510 = sphi 0, %s509
      %s524 = sphi 0, %s510
      %s528 = sphi 0, %s528
      %s530 = sphi 0, %s528
      %s531 = sphi 0, %s530
      %s545 = sphi 0, %s531
      %s549 = sphi 0, %s549
      %s551 = sphi 0, %s549
      %s552 = sphi 0, %s551
      %s566 = sphi 0, %s552
      %s570 = sphi 0, %s570
      %s572 = sphi 0, %s570
      %s573 = sphi 0, %s572
      %s587 = sphi 0, %s573
      %s591 = sphi 0, %s591
      %s593 = sphi 0, %s591
      %s594 = sphi 0, %s593
      %s608 = sphi 0, %s594
      %s612 = sphi 0, %s612
      %s614 = sphi 0, %s612
      %s615 = sphi 0, %s614
      %s629 = sphi 0, %s615
      %s633 = sphi 0, %s633
      %s635 = sphi 0, %s633
      %s636 = sphi 0, %s635
      %s650 = sphi 0, %s636
      %s654 = sphi 0, %s654
      %s656 = sphi 0, %s654
      %s657 = sphi 0, %s656
      %s671 = sphi 0, %s657
      %s675 = sphi 0, %s675
      %s677 = sphi 0, %s675
      %s678 = sphi 0, %s677
      %s692 = sphi 0, %s678
      %s696 = sphi 0, %s696
      %s698 = sphi 0, %s696
      %s699 = sphi 0, %s698
      %s713 = sphi 0, %s699
      %s717 = sphi 0, %s717
      %s719 = sphi 0, %s717
      %s720 = sphi 0, %s719
      %s734 = sphi 0, %s720
      %s738 = sphi 0, %s738
      %s740 = sphi 0, %s738
      %s741 = sphi 0, %s740
      %s755 = sphi 0, %s741
      %s763 = sphi 0, %s765
      %s766 = sphi 0, %s763
      %s767 = sphi 0, %s766
      %s783 = sphi 0, %s767
    $region4: #{tpu_custom_call.1} parent=1 // loop_header_branch
      %88 = sbr.rel (%p86) target = $region8
    $region5: #{tpu_custom_call.1} parent=1 // loop_body
      %s90 = ssub.s32 %s85, 1
      %s91 = ssub.s32 %s85, 2
      %s98 = sadd.s32 1, %s93
      %p99 = scmp.ge.s32.totalorder %s98, 2
      %s100 = scalar_select %p99, 0, %s98
      %s101 = sadd.s32 1, %s92
      %s102 = scalar_select %p99, %s101, %s92
      %p103 = scmp.ge.s32.totalorder %s102, 2
      %s104 = scalar_select %p103, 0, %s102
      %s105 = ssub.s32 %s92, %s104
      %p106 = scmp.eq.s32.totalorder %s105, 0
      %s108 = sadd.s32 %s107, 1
      %s109 = scalar_select %p106, %s107, %s108
      %p112 = pneg %p106
      %p113 = scmp.eq.s32.totalorder %s85, 3
      %p114 = por %p112, %p113
      %p115 = scmp.ne.s32.totalorder %s107, %s110
      %p116 = scmp.eq.s32.totalorder %s85, 0
      %p117 = por %p115, %p116
      %p118 = scmp.ne.s32.totalorder %s107, %s110
      %p119 = scmp.eq.s32.totalorder %s90, 3
      %p120 = por %p118, %p119
      %p121 = scmp.ne.s32.totalorder %s110, %s111
      %p122 = scmp.eq.s32.totalorder %s90, 0
      %p123 = por %p121, %p122
      %p124 = scmp.ne.s32.totalorder %s110, %s111
      %p125 = scmp.eq.s32.totalorder %s91, 3
      %p126 = por %p124, %p125
      %p128 = scmp.ne.s32.totalorder %s111, %s127
      %p129 = scmp.eq.s32.totalorder %s91, 0
      %p130 = por %p128, %p129
      %s131 = ssub.s32 %s92, %s104
      %p132 = scmp.eq.s32.totalorder %s131, 0
      %s134 = sadd.s32 %s133, 1
      %s135 = scalar_select %p132, %s133, %s134
      %p138 = pneg %p132
      %p139 = scmp.eq.s32.totalorder %s85, 3
      %p140 = por %p138, %p139
      %p141 = scmp.ne.s32.totalorder %s133, %s136
      %p142 = scmp.eq.s32.totalorder %s85, 0
      %p143 = por %p141, %p142
      %p144 = scmp.ne.s32.totalorder %s133, %s136
      %p145 = scmp.eq.s32.totalorder %s90, 3
      %p146 = por %p144, %p145
      %p147 = scmp.ne.s32.totalorder %s136, %s137
      %p148 = scmp.eq.s32.totalorder %s90, 0
      %p149 = por %p147, %p148
      %p150 = scmp.ne.s32.totalorder %s136, %s137
      %p151 = scmp.eq.s32.totalorder %s91, 3
      %p152 = por %p150, %p151
      %p154 = scmp.ne.s32.totalorder %s137, %s153
      %p155 = scmp.eq.s32.totalorder %s91, 0
      %p156 = por %p154, %p155
      %s157 = ssub.s32 %s92, %s104
      %s158 = ssub.s32 %s93, %s100
      %s159 = sor.u32 %s157, %s158
      %p160 = scmp.eq.s32.totalorder %s159, 0
      %s162 = sadd.s32 %s161, 1
      %s163 = scalar_select %p160, %s161, %s162
      %p166 = pneg %p160
      %p167 = scmp.eq.s32.totalorder %s85, 3
      %p168 = por %p166, %p167
      %p169 = scmp.ne.s32.totalorder %s161, %s164
      %p170 = scmp.eq.s32.totalorder %s85, 0
      %p171 = por %p169, %p170
      %p172 = scmp.ne.s32.totalorder %s161, %s164
      %p173 = scmp.eq.s32.totalorder %s90, 3
      %p174 = por %p172, %p173
      %p175 = scmp.ne.s32.totalorder %s164, %s165
      %p176 = scmp.eq.s32.totalorder %s90, 0
      %p177 = por %p175, %p176
      %p178 = scmp.ne.s32.totalorder %s164, %s165
      %p179 = scmp.eq.s32.totalorder %s91, 3
      %p180 = por %p178, %p179
      %p182 = scmp.ne.s32.totalorder %s165, %s181
      %p183 = scmp.eq.s32.totalorder %s91, 0
      %p184 = por %p182, %p183
      %s185 = ssub.s32 %s92, %s104
      %s186 = ssub.s32 %s93, %s100
      %s187 = sor.u32 %s185, %s186
      %p188 = scmp.eq.s32.totalorder %s187, 0
      %s190 = sadd.s32 %s189, 1
      %s191 = scalar_select %p188, %s189, %s190
      %p194 = pneg %p188
      %p195 = scmp.eq.s32.totalorder %s85, 3
      %p196 = por %p194, %p195
      %p197 = scmp.ne.s32.totalorder %s189, %s192
      %p198 = scmp.eq.s32.totalorder %s85, 0
      %p199 = por %p197, %p198
      %p200 = scmp.ne.s32.totalorder %s189, %s192
      %p201 = scmp.eq.s32.totalorder %s90, 3
      %p202 = por %p200, %p201
      %p203 = scmp.ne.s32.totalorder %s192, %s193
      %p204 = scmp.eq.s32.totalorder %s90, 0
      %p205 = por %p203, %p204
      %p206 = scmp.ne.s32.totalorder %s192, %s193
      %p207 = scmp.eq.s32.totalorder %s91, 3
      %p208 = por %p206, %p207
      %p210 = scmp.ne.s32.totalorder %s193, %s209
      %p211 = scmp.eq.s32.totalorder %s91, 0
      %p212 = por %p210, %p211
      %s214 = sadd.s32 %s213, 1
      %p217 = scmp.eq.s32.totalorder %s85, 3
      %p218 = scmp.ne.s32.totalorder %s213, %s215
      %p219 = scmp.eq.s32.totalorder %s85, 0
      %p220 = por %p218, %p219
      %p221 = scmp.ne.s32.totalorder %s213, %s215
      %p222 = scmp.eq.s32.totalorder %s90, 3
      %p223 = por %p221, %p222
      %p224 = scmp.ne.s32.totalorder %s215, %s216
      %p225 = scmp.eq.s32.totalorder %s90, 0
      %p226 = por %p224, %p225
      %p227 = scmp.ne.s32.totalorder %s215, %s216
      %p228 = scmp.eq.s32.totalorder %s91, 3
      %p229 = por %p227, %p228
      %p231 = scmp.ne.s32.totalorder %s216, %s230
      %p232 = scmp.eq.s32.totalorder %s91, 0
      %p233 = por %p231, %p232
      %s235 = sadd.s32 %s234, 1
      %p238 = scmp.eq.s32.totalorder %s85, 3
      %p239 = scmp.ne.s32.totalorder %s234, %s236
      %p240 = scmp.eq.s32.totalorder %s85, 0
      %p241 = por %p239, %p240
      %p242 = scmp.ne.s32.totalorder %s234, %s236
      %p243 = scmp.eq.s32.totalorder %s90, 3
      %p244 = por %p242, %p243
      %p245 = scmp.ne.s32.totalorder %s236, %s237
      %p246 = scmp.eq.s32.totalorder %s90, 0
      %p247 = por %p245, %p246
      %p248 = scmp.ne.s32.totalorder %s236, %s237
      %p249 = scmp.eq.s32.totalorder %s91, 3
      %p250 = por %p248, %p249
      %p252 = scmp.ne.s32.totalorder %s237, %s251
      %p253 = scmp.eq.s32.totalorder %s91, 0
      %p254 = por %p252, %p253
      %s256 = sadd.s32 %s255, 1
      %p259 = scmp.eq.s32.totalorder %s85, 3
      %p260 = scmp.ne.s32.totalorder %s255, %s257
      %p261 = scmp.eq.s32.totalorder %s85, 0
      %p262 = por %p260, %p261
      %p263 = scmp.ne.s32.totalorder %s255, %s257
      %p264 = scmp.eq.s32.totalorder %s90, 3
      %p265 = por %p263, %p264
      %p266 = scmp.ne.s32.totalorder %s257, %s258
      %p267 = scmp.eq.s32.totalorder %s90, 0
      %p268 = por %p266, %p267
      %p269 = scmp.ne.s32.totalorder %s257, %s258
      %p270 = scmp.eq.s32.totalorder %s91, 3
      %p271 = por %p269, %p270
      %p273 = scmp.ne.s32.totalorder %s258, %s272
      %p274 = scmp.eq.s32.totalorder %s91, 0
      %p275 = por %p273, %p274
      %s277 = sadd.s32 %s276, 1
      %p280 = scmp.eq.s32.totalorder %s85, 3
      %p281 = scmp.ne.s32.totalorder %s276, %s278
      %p282 = scmp.eq.s32.totalorder %s85, 0
      %p283 = por %p281, %p282
      %p284 = scmp.ne.s32.totalorder %s276, %s278
      %p285 = scmp.eq.s32.totalorder %s90, 3
      %p286 = por %p284, %p285
      %p287 = scmp.ne.s32.totalorder %s278, %s279
      %p288 = scmp.eq.s32.totalorder %s90, 0
      %p289 = por %p287, %p288
      %p290 = scmp.ne.s32.totalorder %s278, %s279
      %p291 = scmp.eq.s32.totalorder %s91, 3
      %p292 = por %p290, %p291
      %p294 = scmp.ne.s32.totalorder %s279, %s293
      %p295 = scmp.eq.s32.totalorder %s91, 0
      %p296 = por %p294, %p295
      %s298 = sadd.s32 %s297, 1
      %p301 = scmp.eq.s32.totalorder %s85, 3
      %p302 = scmp.ne.s32.totalorder %s297, %s299
      %p303 = scmp.eq.s32.totalorder %s85, 0
      %p304 = por %p302, %p303
      %p305 = scmp.ne.s32.totalorder %s297, %s299
      %p306 = scmp.eq.s32.totalorder %s90, 3
      %p307 = por %p305, %p306
      %p308 = scmp.ne.s32.totalorder %s299, %s300
      %p309 = scmp.eq.s32.totalorder %s90, 0
      %p310 = por %p308, %p309
      %p311 = scmp.ne.s32.totalorder %s299, %s300
      %p312 = scmp.eq.s32.totalorder %s91, 3
      %p313 = por %p311, %p312
      %p315 = scmp.ne.s32.totalorder %s300, %s314
      %p316 = scmp.eq.s32.totalorder %s91, 0
      %p317 = por %p315, %p316
      %s319 = sadd.s32 %s318, 1
      %p322 = scmp.eq.s32.totalorder %s85, 3
      %p323 = scmp.ne.s32.totalorder %s318, %s320
      %p324 = scmp.eq.s32.totalorder %s85, 0
      %p325 = por %p323, %p324
      %p326 = scmp.ne.s32.totalorder %s318, %s320
      %p327 = scmp.eq.s32.totalorder %s90, 3
      %p328 = por %p326, %p327
      %p329 = scmp.ne.s32.totalorder %s320, %s321
      %p330 = scmp.eq.s32.totalorder %s90, 0
      %p331 = por %p329, %p330
      %p332 = scmp.ne.s32.totalorder %s320, %s321
      %p333 = scmp.eq.s32.totalorder %s91, 3
      %p334 = por %p332, %p333
      %p336 = scmp.ne.s32.totalorder %s321, %s335
      %p337 = scmp.eq.s32.totalorder %s91, 0
      %p338 = por %p336, %p337
      %s340 = sadd.s32 %s339, 1
      %p343 = scmp.eq.s32.totalorder %s85, 3
      %p344 = scmp.ne.s32.totalorder %s339, %s341
      %p345 = scmp.eq.s32.totalorder %s85, 0
      %p346 = por %p344, %p345
      %p347 = scmp.ne.s32.totalorder %s339, %s341
      %p348 = scmp.eq.s32.totalorder %s90, 3
      %p349 = por %p347, %p348
      %p350 = scmp.ne.s32.totalorder %s341, %s342
      %p351 = scmp.eq.s32.totalorder %s90, 0
      %p352 = por %p350, %p351
      %p353 = scmp.ne.s32.totalorder %s341, %s342
      %p354 = scmp.eq.s32.totalorder %s91, 3
      %p355 = por %p353, %p354
      %p357 = scmp.ne.s32.totalorder %s342, %s356
      %p358 = scmp.eq.s32.totalorder %s91, 0
      %p359 = por %p357, %p358
      %s361 = sadd.s32 %s360, 1
      %p364 = scmp.eq.s32.totalorder %s85, 3
      %p365 = scmp.ne.s32.totalorder %s360, %s362
      %p366 = scmp.eq.s32.totalorder %s85, 0
      %p367 = por %p365, %p366
      %p368 = scmp.ne.s32.totalorder %s360, %s362
      %p369 = scmp.eq.s32.totalorder %s90, 3
      %p370 = por %p368, %p369
      %p371 = scmp.ne.s32.totalorder %s362, %s363
      %p372 = scmp.eq.s32.totalorder %s90, 0
      %p373 = por %p371, %p372
      %p374 = scmp.ne.s32.totalorder %s362, %s363
      %p375 = scmp.eq.s32.totalorder %s91, 3
      %p376 = por %p374, %p375
      %p378 = scmp.ne.s32.totalorder %s363, %s377
      %p379 = scmp.eq.s32.totalorder %s91, 0
      %p380 = por %p378, %p379
      %s382 = sadd.s32 %s381, 1
      %p385 = scmp.eq.s32.totalorder %s85, 3
      %p386 = scmp.ne.s32.totalorder %s381, %s383
      %p387 = scmp.eq.s32.totalorder %s85, 0
      %p388 = por %p386, %p387
      %p389 = scmp.ne.s32.totalorder %s381, %s383
      %p390 = scmp.eq.s32.totalorder %s90, 3
      %p391 = por %p389, %p390
      %p392 = scmp.ne.s32.totalorder %s383, %s384
      %p393 = scmp.eq.s32.totalorder %s90, 0
      %p394 = por %p392, %p393
      %p395 = scmp.ne.s32.totalorder %s383, %s384
      %p396 = scmp.eq.s32.totalorder %s91, 3
      %p397 = por %p395, %p396
      %p399 = scmp.ne.s32.totalorder %s384, %s398
      %p400 = scmp.eq.s32.totalorder %s91, 0
      %p401 = por %p399, %p400
      %s403 = sadd.s32 %s402, 1
      %p406 = scmp.eq.s32.totalorder %s85, 3
      %p407 = scmp.ne.s32.totalorder %s402, %s404
      %p408 = scmp.eq.s32.totalorder %s85, 0
      %p409 = por %p407, %p408
      %p410 = scmp.ne.s32.totalorder %s402, %s404
      %p411 = scmp.eq.s32.totalorder %s90, 3
      %p412 = por %p410, %p411
      %p413 = scmp.ne.s32.totalorder %s404, %s405
      %p414 = scmp.eq.s32.totalorder %s90, 0
      %p415 = por %p413, %p414
      %p416 = scmp.ne.s32.totalorder %s404, %s405
      %p417 = scmp.eq.s32.totalorder %s91, 3
      %p418 = por %p416, %p417
      %p420 = scmp.ne.s32.totalorder %s405, %s419
      %p421 = scmp.eq.s32.totalorder %s91, 0
      %p422 = por %p420, %p421
      %s424 = sadd.s32 %s423, 1
      %p427 = scmp.eq.s32.totalorder %s85, 3
      %p428 = scmp.ne.s32.totalorder %s423, %s425
      %p429 = scmp.eq.s32.totalorder %s85, 0
      %p430 = por %p428, %p429
      %p431 = scmp.ne.s32.totalorder %s423, %s425
      %p432 = scmp.eq.s32.totalorder %s90, 3
      %p433 = por %p431, %p432
      %p434 = scmp.ne.s32.totalorder %s425, %s426
      %p435 = scmp.eq.s32.totalorder %s90, 0
      %p436 = por %p434, %p435
      %p437 = scmp.ne.s32.totalorder %s425, %s426
      %p438 = scmp.eq.s32.totalorder %s91, 3
      %p439 = por %p437, %p438
      %p441 = scmp.ne.s32.totalorder %s426, %s440
      %p442 = scmp.eq.s32.totalorder %s91, 0
      %p443 = por %p441, %p442
      %s445 = sadd.s32 %s444, 1
      %p448 = scmp.eq.s32.totalorder %s85, 3
      %p449 = scmp.ne.s32.totalorder %s444, %s446
      %p450 = scmp.eq.s32.totalorder %s85, 0
      %p451 = por %p449, %p450
      %p452 = scmp.ne.s32.totalorder %s444, %s446
      %p453 = scmp.eq.s32.totalorder %s90, 3
      %p454 = por %p452, %p453
      %p455 = scmp.ne.s32.totalorder %s446, %s447
      %p456 = scmp.eq.s32.totalorder %s90, 0
      %p457 = por %p455, %p456
      %p458 = scmp.ne.s32.totalorder %s446, %s447
      %p459 = scmp.eq.s32.totalorder %s91, 3
      %p460 = por %p458, %p459
      %p462 = scmp.ne.s32.totalorder %s447, %s461
      %p463 = scmp.eq.s32.totalorder %s91, 0
      %p464 = por %p462, %p463
      %s466 = sadd.s32 %s465, 1
      %p469 = scmp.eq.s32.totalorder %s85, 3
      %p470 = scmp.ne.s32.totalorder %s465, %s467
      %p471 = scmp.eq.s32.totalorder %s85, 0
      %p472 = por %p470, %p471
      %p473 = scmp.ne.s32.totalorder %s465, %s467
      %p474 = scmp.eq.s32.totalorder %s90, 3
      %p475 = por %p473, %p474
      %p476 = scmp.ne.s32.totalorder %s467, %s468
      %p477 = scmp.eq.s32.totalorder %s90, 0
      %p478 = por %p476, %p477
      %p479 = scmp.ne.s32.totalorder %s467, %s468
      %p480 = scmp.eq.s32.totalorder %s91, 3
      %p481 = por %p479, %p480
      %p483 = scmp.ne.s32.totalorder %s468, %s482
      %p484 = scmp.eq.s32.totalorder %s91, 0
      %p485 = por %p483, %p484
      %s487 = sadd.s32 %s486, 1
      %p490 = scmp.eq.s32.totalorder %s85, 3
      %p491 = scmp.ne.s32.totalorder %s486, %s488
      %p492 = scmp.eq.s32.totalorder %s85, 0
      %p493 = por %p491, %p492
      %p494 = scmp.ne.s32.totalorder %s486, %s488
      %p495 = scmp.eq.s32.totalorder %s90, 3
      %p496 = por %p494, %p495
      %p497 = scmp.ne.s32.totalorder %s488, %s489
      %p498 = scmp.eq.s32.totalorder %s90, 0
      %p499 = por %p497, %p498
      %p500 = scmp.ne.s32.totalorder %s488, %s489
      %p501 = scmp.eq.s32.totalorder %s91, 3
      %p502 = por %p500, %p501
      %p504 = scmp.ne.s32.totalorder %s489, %s503
      %p505 = scmp.eq.s32.totalorder %s91, 0
      %p506 = por %p504, %p505
      %s508 = sadd.s32 %s507, 1
      %p511 = scmp.eq.s32.totalorder %s85, 3
      %p512 = scmp.ne.s32.totalorder %s507, %s509
      %p513 = scmp.eq.s32.totalorder %s85, 0
      %p514 = por %p512, %p513
      %p515 = scmp.ne.s32.totalorder %s507, %s509
      %p516 = scmp.eq.s32.totalorder %s90, 3
      %p517 = por %p515, %p516
      %p518 = scmp.ne.s32.totalorder %s509, %s510
      %p519 = scmp.eq.s32.totalorder %s90, 0
      %p520 = por %p518, %p519
      %p521 = scmp.ne.s32.totalorder %s509, %s510
      %p522 = scmp.eq.s32.totalorder %s91, 3
      %p523 = por %p521, %p522
      %p525 = scmp.ne.s32.totalorder %s510, %s524
      %p526 = scmp.eq.s32.totalorder %s91, 0
      %p527 = por %p525, %p526
      %s529 = sadd.s32 %s528, 1
      %p532 = scmp.eq.s32.totalorder %s85, 3
      %p533 = scmp.ne.s32.totalorder %s528, %s530
      %p534 = scmp.eq.s32.totalorder %s85, 0
      %p535 = por %p533, %p534
      %p536 = scmp.ne.s32.totalorder %s528, %s530
      %p537 = scmp.eq.s32.totalorder %s90, 3
      %p538 = por %p536, %p537
      %p539 = scmp.ne.s32.totalorder %s530, %s531
      %p540 = scmp.eq.s32.totalorder %s90, 0
      %p541 = por %p539, %p540
      %p542 = scmp.ne.s32.totalorder %s530, %s531
      %p543 = scmp.eq.s32.totalorder %s91, 3
      %p544 = por %p542, %p543
      %p546 = scmp.ne.s32.totalorder %s531, %s545
      %p547 = scmp.eq.s32.totalorder %s91, 0
      %p548 = por %p546, %p547
      %s550 = sadd.s32 %s549, 1
      %p553 = scmp.eq.s32.totalorder %s85, 3
      %p554 = scmp.ne.s32.totalorder %s549, %s551
      %p555 = scmp.eq.s32.totalorder %s85, 0
      %p556 = por %p554, %p555
      %p557 = scmp.ne.s32.totalorder %s549, %s551
      %p558 = scmp.eq.s32.totalorder %s90, 3
      %p559 = por %p557, %p558
      %p560 = scmp.ne.s32.totalorder %s551, %s552
      %p561 = scmp.eq.s32.totalorder %s90, 0
      %p562 = por %p560, %p561
      %p563 = scmp.ne.s32.totalorder %s551, %s552
      %p564 = scmp.eq.s32.totalorder %s91, 3
      %p565 = por %p563, %p564
      %p567 = scmp.ne.s32.totalorder %s552, %s566
      %p568 = scmp.eq.s32.totalorder %s91, 0
      %p569 = por %p567, %p568
      %s571 = sadd.s32 %s570, 1
      %p574 = scmp.eq.s32.totalorder %s85, 3
      %p575 = scmp.ne.s32.totalorder %s570, %s572
      %p576 = scmp.eq.s32.totalorder %s85, 0
      %p577 = por %p575, %p576
      %p578 = scmp.ne.s32.totalorder %s570, %s572
      %p579 = scmp.eq.s32.totalorder %s90, 3
      %p580 = por %p578, %p579
      %p581 = scmp.ne.s32.totalorder %s572, %s573
      %p582 = scmp.eq.s32.totalorder %s90, 0
      %p583 = por %p581, %p582
      %p584 = scmp.ne.s32.totalorder %s572, %s573
      %p585 = scmp.eq.s32.totalorder %s91, 3
      %p586 = por %p584, %p585
      %p588 = scmp.ne.s32.totalorder %s573, %s587
      %p589 = scmp.eq.s32.totalorder %s91, 0
      %p590 = por %p588, %p589
      %s592 = sadd.s32 %s591, 1
      %p595 = scmp.eq.s32.totalorder %s85, 3
      %p596 = scmp.ne.s32.totalorder %s591, %s593
      %p597 = scmp.eq.s32.totalorder %s85, 0
      %p598 = por %p596, %p597
      %p599 = scmp.ne.s32.totalorder %s591, %s593
      %p600 = scmp.eq.s32.totalorder %s90, 3
      %p601 = por %p599, %p600
      %p602 = scmp.ne.s32.totalorder %s593, %s594
      %p603 = scmp.eq.s32.totalorder %s90, 0
      %p604 = por %p602, %p603
      %p605 = scmp.ne.s32.totalorder %s593, %s594
      %p606 = scmp.eq.s32.totalorder %s91, 3
      %p607 = por %p605, %p606
      %p609 = scmp.ne.s32.totalorder %s594, %s608
      %p610 = scmp.eq.s32.totalorder %s91, 0
      %p611 = por %p609, %p610
      %s613 = sadd.s32 %s612, 1
      %p616 = scmp.eq.s32.totalorder %s85, 3
      %p617 = scmp.ne.s32.totalorder %s612, %s614
      %p618 = scmp.eq.s32.totalorder %s85, 0
      %p619 = por %p617, %p618
      %p620 = scmp.ne.s32.totalorder %s612, %s614
      %p621 = scmp.eq.s32.totalorder %s90, 3
      %p622 = por %p620, %p621
      %p623 = scmp.ne.s32.totalorder %s614, %s615
      %p624 = scmp.eq.s32.totalorder %s90, 0
      %p625 = por %p623, %p624
      %p626 = scmp.ne.s32.totalorder %s614, %s615
      %p627 = scmp.eq.s32.totalorder %s91, 3
      %p628 = por %p626, %p627
      %p630 = scmp.ne.s32.totalorder %s615, %s629
      %p631 = scmp.eq.s32.totalorder %s91, 0
      %p632 = por %p630, %p631
      %s634 = sadd.s32 %s633, 1
      %p637 = scmp.eq.s32.totalorder %s85, 3
      %p638 = scmp.ne.s32.totalorder %s633, %s635
      %p639 = scmp.eq.s32.totalorder %s85, 0
      %p640 = por %p638, %p639
      %p641 = scmp.ne.s32.totalorder %s633, %s635
      %p642 = scmp.eq.s32.totalorder %s90, 3
      %p643 = por %p641, %p642
      %p644 = scmp.ne.s32.totalorder %s635, %s636
      %p645 = scmp.eq.s32.totalorder %s90, 0
      %p646 = por %p644, %p645
      %p647 = scmp.ne.s32.totalorder %s635, %s636
      %p648 = scmp.eq.s32.totalorder %s91, 3
      %p649 = por %p647, %p648
      %p651 = scmp.ne.s32.totalorder %s636, %s650
      %p652 = scmp.eq.s32.totalorder %s91, 0
      %p653 = por %p651, %p652
      %s655 = sadd.s32 %s654, 1
      %p658 = scmp.eq.s32.totalorder %s85, 3
      %p659 = scmp.ne.s32.totalorder %s654, %s656
      %p660 = scmp.eq.s32.totalorder %s85, 0
      %p661 = por %p659, %p660
      %p662 = scmp.ne.s32.totalorder %s654, %s656
      %p663 = scmp.eq.s32.totalorder %s90, 3
      %p664 = por %p662, %p663
      %p665 = scmp.ne.s32.totalorder %s656, %s657
      %p666 = scmp.eq.s32.totalorder %s90, 0
      %p667 = por %p665, %p666
      %p668 = scmp.ne.s32.totalorder %s656, %s657
      %p669 = scmp.eq.s32.totalorder %s91, 3
      %p670 = por %p668, %p669
      %p672 = scmp.ne.s32.totalorder %s657, %s671
      %p673 = scmp.eq.s32.totalorder %s91, 0
      %p674 = por %p672, %p673
      %s676 = sadd.s32 %s675, 1
      %p679 = scmp.eq.s32.totalorder %s85, 3
      %p680 = scmp.ne.s32.totalorder %s675, %s677
      %p681 = scmp.eq.s32.totalorder %s85, 0
      %p682 = por %p680, %p681
      %p683 = scmp.ne.s32.totalorder %s675, %s677
      %p684 = scmp.eq.s32.totalorder %s90, 3
      %p685 = por %p683, %p684
      %p686 = scmp.ne.s32.totalorder %s677, %s678
      %p687 = scmp.eq.s32.totalorder %s90, 0
      %p688 = por %p686, %p687
      %p689 = scmp.ne.s32.totalorder %s677, %s678
      %p690 = scmp.eq.s32.totalorder %s91, 3
      %p691 = por %p689, %p690
      %p693 = scmp.ne.s32.totalorder %s678, %s692
      %p694 = scmp.eq.s32.totalorder %s91, 0
      %p695 = por %p693, %p694
      %s697 = sadd.s32 %s696, 1
      %p700 = scmp.eq.s32.totalorder %s85, 3
      %p701 = scmp.ne.s32.totalorder %s696, %s698
      %p702 = scmp.eq.s32.totalorder %s85, 0
      %p703 = por %p701, %p702
      %p704 = scmp.ne.s32.totalorder %s696, %s698
      %p705 = scmp.eq.s32.totalorder %s90, 3
      %p706 = por %p704, %p705
      %p707 = scmp.ne.s32.totalorder %s698, %s699
      %p708 = scmp.eq.s32.totalorder %s90, 0
      %p709 = por %p707, %p708
      %p710 = scmp.ne.s32.totalorder %s698, %s699
      %p711 = scmp.eq.s32.totalorder %s91, 3
      %p712 = por %p710, %p711
      %p714 = scmp.ne.s32.totalorder %s699, %s713
      %p715 = scmp.eq.s32.totalorder %s91, 0
      %p716 = por %p714, %p715
      %s718 = sadd.s32 %s717, 1
      %p721 = scmp.eq.s32.totalorder %s85, 3
      %p722 = scmp.ne.s32.totalorder %s717, %s719
      %p723 = scmp.eq.s32.totalorder %s85, 0
      %p724 = por %p722, %p723
      %p725 = scmp.ne.s32.totalorder %s717, %s719
      %p726 = scmp.eq.s32.totalorder %s90, 3
      %p727 = por %p725, %p726
      %p728 = scmp.ne.s32.totalorder %s719, %s720
      %p729 = scmp.eq.s32.totalorder %s90, 0
      %p730 = por %p728, %p729
      %p731 = scmp.ne.s32.totalorder %s719, %s720
      %p732 = scmp.eq.s32.totalorder %s91, 3
      %p733 = por %p731, %p732
      %p735 = scmp.ne.s32.totalorder %s720, %s734
      %p736 = scmp.eq.s32.totalorder %s91, 0
      %p737 = por %p735, %p736
      %s739 = sadd.s32 %s738, 1
      %p742 = scmp.eq.s32.totalorder %s85, 3
      %p743 = scmp.ne.s32.totalorder %s738, %s740
      %p744 = scmp.eq.s32.totalorder %s85, 0
      %p745 = por %p743, %p744
      %p746 = scmp.ne.s32.totalorder %s738, %s740
      %p747 = scmp.eq.s32.totalorder %s90, 3
      %p748 = por %p746, %p747
      %p749 = scmp.ne.s32.totalorder %s740, %s741
      %p750 = scmp.eq.s32.totalorder %s90, 0
      %p751 = por %p749, %p750
      %p752 = scmp.ne.s32.totalorder %s740, %s741
      %p753 = scmp.eq.s32.totalorder %s91, 3
      %p754 = por %p752, %p753
      %p756 = scmp.ne.s32.totalorder %s741, %s755
      %p757 = scmp.eq.s32.totalorder %s91, 0
      %p758 = por %p756, %p757
      %s759 = ssub.s32 %s92, %s104
      %s760 = ssub.s32 %s93, %s100
      %s761 = sor.u32 %s759, %s760
      %p762 = scmp.eq.s32.totalorder %s761, 0
      %s764 = sadd.s32 %s763, 1
      %s765 = scalar_select %p762, %s763, %s764
      %p768 = pneg %p762
      %p769 = scmp.eq.s32.totalorder %s85, 3
      %p770 = por %p768, %p769
      %p771 = scmp.ne.s32.totalorder %s763, %s766
      %p772 = scmp.eq.s32.totalorder %s85, 0
      %p773 = por %p771, %p772
      %p774 = scmp.ne.s32.totalorder %s763, %s766
      %p775 = scmp.eq.s32.totalorder %s90, 3
      %p776 = por %p774, %p775
      %p777 = scmp.ne.s32.totalorder %s766, %s767
      %p778 = scmp.eq.s32.totalorder %s90, 0
      %p779 = por %p777, %p778
      %p780 = scmp.ne.s32.totalorder %s766, %s767
      %p781 = scmp.eq.s32.totalorder %s91, 3
      %p782 = por %p780, %p781
      %p784 = scmp.ne.s32.totalorder %s767, %s783
      %p785 = scmp.eq.s32.totalorder %s91, 0
      %p786 = por %p784, %p785
      %p787 = scmp.le.s32.totalorder 1, %s85
      %p788 = scmp.lt.s32.totalorder %s85, 5
      %p789 = pnand %p787, %p788
      %p790 = pneg %p789
      // Predicated region
      $region9: #{tpu_custom_call.1} parent=5 // pred_check
        _
      $region10: #{tpu_custom_call.1} parent=5 // pred_check_branch
        %792 = sbr.rel (%p789) target = $region12
      $region11: #{tpu_custom_call.1} parent=5 // pred_region
        %s793 = ssub.s32 %s85, 1
        // Predicated region
        $region13: #{tpu_custom_call.1} parent=11 // pred_check
          %p794 = pneg %p226
        $region14: #{tpu_custom_call.1} parent=11 // pred_check_branch
          %796 = sbr.rel (%p794) target = $region16
        $region15: #{tpu_custom_call.1} parent=11 // pred_region
          %798 = vsyncadd [#allocation13], 0
          %s799 = sshll.u32 %s9, 4
          %s800 = int_to_ptr.hbm [resolvable:$true] %s799
          %s801 = sshll.u32 [#allocation12], 4
          %s802 = int_to_ptr.vmem [resolvable:$true] %s801
          %807 = dma.hbm_to_vmem [thread:$0]  %s800, 1024, %s802, [#allocation13], 64, 64, 4
        $region16: #{tpu_custom_call.1} parent=11 // pred_fallthru
          _
        // Predicated region
        $region17: #{tpu_custom_call.1} parent=11 // pred_check
          %p808 = pneg %p247
        $region18: #{tpu_custom_call.1} parent=11 // pred_check_branch
          %810 = sbr.rel (%p808) target = $region20
        $region19: #{tpu_custom_call.1} parent=11 // pred_region
          %812 = vsyncadd [#allocation13], 0
          %s814 = sshll.u32 %s11, 4
          %s815 = int_to_ptr.hbm [resolvable:$true] %s814
          %s816 = sshll.u32 [#allocation14], 4
          %s817 = int_to_ptr.vmem [resolvable:$true] %s816
          %819 = dma.hbm_to_vmem [thread:$0]  %s815, 16, %s817, [#allocation13]
        $region20: #{tpu_custom_call.1} parent=11 // pred_fallthru
          _
        // Predicated region
        $region21: #{tpu_custom_call.1} parent=11 // pred_check
          %p820 = pneg %p268
        $region22: #{tpu_custom_call.1} parent=11 // pred_check_branch
          %822 = sbr.rel (%p820) target = $region24
        $region23: #{tpu_custom_call.1} parent=11 // pred_region
          %824 = vsyncadd [#allocation16], 0
          %s825 = sshll.u32 %s13, 4
          %s826 = int_to_ptr.hbm [resolvable:$true] %s825
          %s827 = sshll.u32 [#allocation15], 4
          %s828 = int_to_ptr.vmem [resolvable:$true] %s827
          %833 = dma.hbm_to_vmem [thread:$0]  %s826, 1024, %s828, [#allocation16], 64, 64, 4
        $region24: #{tpu_custom_call.1} parent=11 // pred_fallthru
          _
        // Predicated region
        $region25: #{tpu_custom_call.1} parent=11 // pred_check
          %p834 = pneg %p289
        $region26: #{tpu_custom_call.1} parent=11 // pred_check_branch
          %836 = sbr.rel (%p834) target = $region28
        $region27: #{tpu_custom_call.1} parent=11 // pred_region
          %838 = vsyncadd [#allocation16], 0
          %s840 = sshll.u32 %s15, 4
          %s841 = int_to_ptr.hbm [resolvable:$true] %s840
          %s842 = sshll.u32 [#allocation17], 4
          %s843 = int_to_ptr.vmem [resolvable:$true] %s842
          %845 = dma.hbm_to_vmem [thread:$0]  %s841, 16, %s843, [#allocation16]
        $region28: #{tpu_custom_call.1} parent=11 // pred_fallthru
          _
        // Predicated region
        $region29: #{tpu_custom_call.1} parent=11 // pred_check
          %p846 = pneg %p310
        $region30: #{tpu_custom_call.1} parent=11 // pred_check_branch
          %848 = sbr.rel (%p846) target = $region32
        $region31: #{tpu_custom_call.1} parent=11 // pred_region
          %850 = vsyncadd [#allocation19], 0
          %s851 = sshll.u32 %s17, 4
          %s852 = int_to_ptr.hbm [resolvable:$true] %s851
          %s853 = sshll.u32 [#allocation18], 4
          %s854 = int_to_ptr.vmem [resolvable:$true] %s853
          %859 = dma.hbm_to_vmem [thread:$0]  %s852, 1024, %s854, [#allocation19], 64, 64, 4
        $region32: #{tpu_custom_call.1} parent=11 // pred_fallthru
          _
        // Predicated region
        $region33: #{tpu_custom_call.1} parent=11 // pred_check
          %p860 = pneg %p331
        $region34: #{tpu_custom_call.1} parent=11 // pred_check_branch
          %862 = sbr.rel (%p860) target = $region36
        $region35: #{tpu_custom_call.1} parent=11 // pred_region
          %864 = vsyncadd [#allocation19], 0
          %s866 = sshll.u32 %s19, 4
          %s867 = int_to_ptr.hbm [resolvable:$true] %s866
          %s868 = sshll.u32 [#allocation20], 4
          %s869 = int_to_ptr.vmem [resolvable:$true] %s868
          %871 = dma.hbm_to_vmem [thread:$0]  %s867, 16, %s869, [#allocation19]
        $region36: #{tpu_custom_call.1} parent=11 // pred_fallthru
          _
        // Predicated region
        $region37: #{tpu_custom_call.1} parent=11 // pred_check
          %p872 = pneg %p352
        $region38: #{tpu_custom_call.1} parent=11 // pred_check_branch
          %874 = sbr.rel (%p872) target = $region40
        $region39: #{tpu_custom_call.1} parent=11 // pred_region
          %876 = vsyncadd [#allocation22], 0
          %s877 = sshll.u32 %s21, 4
          %s878 = int_to_ptr.hbm [resolvable:$true] %s877
          %s879 = sshll.u32 [#allocation21], 4
          %s880 = int_to_ptr.vmem [resolvable:$true] %s879
          %885 = dma.hbm_to_vmem [thread:$0]  %s878, 1024, %s880, [#allocation22], 64, 64, 4
        $region40: #{tpu_custom_call.1} parent=11 // pred_fallthru
          _
        // Predicated region
        $region41: #{tpu_custom_call.1} parent=11 // pred_check
          %p886 = pneg %p373
        $region42: #{tpu_custom_call.1} parent=11 // pred_check_branch
          %888 = sbr.rel (%p886) target = $region44
        $region43: #{tpu_custom_call.1} parent=11 // pred_region
          %890 = vsyncadd [#allocation22], 0
          %s892 = sshll.u32 %s23, 4
          %s893 = int_to_ptr.hbm [resolvable:$true] %s892
          %s894 = sshll.u32 [#allocation23], 4
          %s895 = int_to_ptr.vmem [resolvable:$true] %s894
          %897 = dma.hbm_to_vmem [thread:$0]  %s893, 16, %s895, [#allocation22]
        $region44: #{tpu_custom_call.1} parent=11 // pred_fallthru
          _
        // Predicated region
        $region45: #{tpu_custom_call.1} parent=11 // pred_check
          %p898 = pneg %p394
        $region46: #{tpu_custom_call.1} parent=11 // pred_check_branch
          %900 = sbr.rel (%p898) target = $region48
        $region47: #{tpu_custom_call.1} parent=11 // pred_region
          %902 = vsyncadd [#allocation25], 0
          %s904 = sshll.u32 %s25, 4
          %s905 = int_to_ptr.hbm [resolvable:$true] %s904
          %s906 = sshll.u32 [#allocation24], 4
          %s907 = int_to_ptr.vmem [resolvable:$true] %s906
          %909 = dma.hbm_to_vmem [thread:$0]  %s905, 16, %s907, [#allocation25]
        $region48: #{tpu_custom_call.1} parent=11 // pred_fallthru
          _
        // Predicated region
        $region49: #{tpu_custom_call.1} parent=11 // pred_check
          %p910 = pneg %p415
        $region50: #{tpu_custom_call.1} parent=11 // pred_check_branch
          %912 = sbr.rel (%p910) target = $region52
        $region51: #{tpu_custom_call.1} parent=11 // pred_region
          %914 = vsyncadd [#allocation25], 0
          %s916 = sshll.u32 %s27, 4
          %s917 = int_to_ptr.hbm [resolvable:$true] %s916
          %s918 = sshll.u32 [#allocation26], 4
          %s919 = int_to_ptr.vmem [resolvable:$true] %s918
          %921 = dma.hbm_to_vmem [thread:$0]  %s917, 16, %s919, [#allocation25]
        $region52: #{tpu_custom_call.1} parent=11 // pred_fallthru
          _
        // Predicated region
        $region53: #{tpu_custom_call.1} parent=11 // pred_check
          %p922 = pneg %p436
        $region54: #{tpu_custom_call.1} parent=11 // pred_check_branch
          %924 = sbr.rel (%p922) target = $region56
        $region55: #{tpu_custom_call.1} parent=11 // pred_region
          %926 = vsyncadd [#allocation28], 0
          %s927 = sshll.u32 %s29, 4
          %s928 = int_to_ptr.hbm [resolvable:$true] %s927
          %s929 = sshll.u32 [#allocation27], 4
          %s930 = int_to_ptr.vmem [resolvable:$true] %s929
          %935 = dma.hbm_to_vmem [thread:$0]  %s928, 1024, %s930, [#allocation28], 64, 64, 4
        $region56: #{tpu_custom_call.1} parent=11 // pred_fallthru
          _
        // Predicated region
        $region57: #{tpu_custom_call.1} parent=11 // pred_check
          %p936 = pneg %p457
        $region58: #{tpu_custom_call.1} parent=11 // pred_check_branch
          %938 = sbr.rel (%p936) target = $region60
        $region59: #{tpu_custom_call.1} parent=11 // pred_region
          %940 = vsyncadd [#allocation28], 0
          %s942 = sshll.u32 %s31, 4
          %s943 = int_to_ptr.hbm [resolvable:$true] %s942
          %s944 = sshll.u32 [#allocation29], 4
          %s945 = int_to_ptr.vmem [resolvable:$true] %s944
          %947 = dma.hbm_to_vmem [thread:$0]  %s943, 16, %s945, [#allocation28]
        $region60: #{tpu_custom_call.1} parent=11 // pred_fallthru
          _
        // Predicated region
        $region61: #{tpu_custom_call.1} parent=11 // pred_check
          %p948 = pneg %p478
        $region62: #{tpu_custom_call.1} parent=11 // pred_check_branch
          %950 = sbr.rel (%p948) target = $region64
        $region63: #{tpu_custom_call.1} parent=11 // pred_region
          %952 = vsyncadd [#allocation31], 0
          %s953 = sshll.u32 %s33, 4
          %s954 = int_to_ptr.hbm [resolvable:$true] %s953
          %s955 = sshll.u32 [#allocation30], 4
          %s956 = int_to_ptr.vmem [resolvable:$true] %s955
          %961 = dma.hbm_to_vmem [thread:$0]  %s954, 1024, %s956, [#allocation31], 64, 64, 4
        $region64: #{tpu_custom_call.1} parent=11 // pred_fallthru
          _
        // Predicated region
        $region65: #{tpu_custom_call.1} parent=11 // pred_check
          %p962 = pneg %p499
        $region66: #{tpu_custom_call.1} parent=11 // pred_check_branch
          %964 = sbr.rel (%p962) target = $region68
        $region67: #{tpu_custom_call.1} parent=11 // pred_region
          %966 = vsyncadd [#allocation31], 0
          %s968 = sshll.u32 %s35, 4
          %s969 = int_to_ptr.hbm [resolvable:$true] %s968
          %s970 = sshll.u32 [#allocation32], 4
          %s971 = int_to_ptr.vmem [resolvable:$true] %s970
          %973 = dma.hbm_to_vmem [thread:$0]  %s969, 16, %s971, [#allocation31]
        $region68: #{tpu_custom_call.1} parent=11 // pred_fallthru
          _
        // Predicated region
        $region69: #{tpu_custom_call.1} parent=11 // pred_check
          %p974 = pneg %p520
        $region70: #{tpu_custom_call.1} parent=11 // pred_check_branch
          %976 = sbr.rel (%p974) target = $region72
        $region71: #{tpu_custom_call.1} parent=11 // pred_region
          _
        $region72: #{tpu_custom_call.1} parent=11 // pred_fallthru
          _
        // Predicated region
        $region73: #{tpu_custom_call.1} parent=11 // pred_check
          %p977 = pneg %p541
        $region74: #{tpu_custom_call.1} parent=11 // pred_check_branch
          %979 = sbr.rel (%p977) target = $region76
        $region75: #{tpu_custom_call.1} parent=11 // pred_region
          %981 = vsyncadd [#allocation34], 0
          %s983 = sshll.u32 %s39, 4
          %s984 = int_to_ptr.hbm [resolvable:$true] %s983
          %s985 = sshll.u32 [#allocation33], 4
          %s986 = int_to_ptr.vmem [resolvable:$true] %s985
          %988 = dma.hbm_to_vmem [thread:$0]  %s984, 16, %s986, [#allocation34]
        $region76: #{tpu_custom_call.1} parent=11 // pred_fallthru
          _
        // Predicated region
        $region77: #{tpu_custom_call.1} parent=11 // pred_check
          %p989 = pneg %p562
        $region78: #{tpu_custom_call.1} parent=11 // pred_check_branch
          %991 = sbr.rel (%p989) target = $region80
        $region79: #{tpu_custom_call.1} parent=11 // pred_region
          %993 = vsyncadd [#allocation34], 0
          %s994 = sshll.u32 %s41, 4
          %s995 = int_to_ptr.hbm [resolvable:$true] %s994
          %s996 = sshll.u32 [#allocation35], 4
          %s997 = int_to_ptr.vmem [resolvable:$true] %s996
          %1002 = dma.hbm_to_vmem [thread:$0]  %s995, 1024, %s997, [#allocation34], 64, 64, 4
        $region80: #{tpu_custom_call.1} parent=11 // pred_fallthru
          _
        // Predicated region
        $region81: #{tpu_custom_call.1} parent=11 // pred_check
          %p1003 = pneg %p583
        $region82: #{tpu_custom_call.1} parent=11 // pred_check_branch
          %1005 = sbr.rel (%p1003) target = $region84
        $region83: #{tpu_custom_call.1} parent=11 // pred_region
          _
        $region84: #{tpu_custom_call.1} parent=11 // pred_fallthru
          _
        // Predicated region
        $region85: #{tpu_custom_call.1} parent=11 // pred_check
          %p1006 = pneg %p604
        $region86: #{tpu_custom_call.1} parent=11 // pred_check_branch
          %1008 = sbr.rel (%p1006) target = $region88
        $region87: #{tpu_custom_call.1} parent=11 // pred_region
          _
        $region88: #{tpu_custom_call.1} parent=11 // pred_fallthru
          _
        // Predicated region
        $region89: #{tpu_custom_call.1} parent=11 // pred_check
          %p1009 = pneg %p625
        $region90: #{tpu_custom_call.1} parent=11 // pred_check_branch
          %1011 = sbr.rel (%p1009) target = $region92
        $region91: #{tpu_custom_call.1} parent=11 // pred_region
          _
        $region92: #{tpu_custom_call.1} parent=11 // pred_fallthru
          _
        // Predicated region
        $region93: #{tpu_custom_call.1} parent=11 // pred_check
          %p1012 = pneg %p646
        $region94: #{tpu_custom_call.1} parent=11 // pred_check_branch
          %1014 = sbr.rel (%p1012) target = $region96
        $region95: #{tpu_custom_call.1} parent=11 // pred_region
          %1016 = vsyncadd [#allocation37], 0
          %s1017 = sshll.u32 %s49, 4
          %s1018 = int_to_ptr.hbm [resolvable:$true] %s1017
          %s1019 = sshll.u32 [#allocation36], 4
          %s1020 = int_to_ptr.vmem [resolvable:$true] %s1019
          %1025 = dma.hbm_to_vmem [thread:$0]  %s1018, 2048, %s1020, [#allocation37], 128, 128, 8
        $region96: #{tpu_custom_call.1} parent=11 // pred_fallthru
          _
        // Predicated region
        $region97: #{tpu_custom_call.1} parent=11 // pred_check
          %p1026 = pneg %p667
        $region98: #{tpu_custom_call.1} parent=11 // pred_check_branch
          %1028 = sbr.rel (%p1026) target = $region100
        $region99: #{tpu_custom_call.1} parent=11 // pred_region
          _
        $region100: #{tpu_custom_call.1} parent=11 // pred_fallthru
          _
        // Predicated region
        $region101: #{tpu_custom_call.1} parent=11 // pred_check
          %p1029 = pneg %p688
        $region102: #{tpu_custom_call.1} parent=11 // pred_check_branch
          %1031 = sbr.rel (%p1029) target = $region104
        $region103: #{tpu_custom_call.1} parent=11 // pred_region
          %1033 = vsyncadd [#allocation37], 0
          %s1034 = sshll.u32 %s53, 4
          %s1035 = int_to_ptr.hbm [resolvable:$true] %s1034
          %s1036 = sshll.u32 [#allocation38], 4
          %s1037 = int_to_ptr.vmem [resolvable:$true] %s1036
          %1042 = dma.hbm_to_vmem [thread:$0]  %s1035, 2048, %s1037, [#allocation37], 64, 64, 4
        $region104: #{tpu_custom_call.1} parent=11 // pred_fallthru
          _
        // Predicated region
        $region105: #{tpu_custom_call.1} parent=11 // pred_check
          %p1043 = pneg %p709
        $region106: #{tpu_custom_call.1} parent=11 // pred_check_branch
          %1045 = sbr.rel (%p1043) target = $region108
        $region107: #{tpu_custom_call.1} parent=11 // pred_region
          _
        $region108: #{tpu_custom_call.1} parent=11 // pred_fallthru
          _
        // Predicated region
        $region109: #{tpu_custom_call.1} parent=11 // pred_check
          %p1046 = pneg %p730
        $region110: #{tpu_custom_call.1} parent=11 // pred_check_branch
          %1048 = sbr.rel (%p1046) target = $region112
        $region111: #{tpu_custom_call.1} parent=11 // pred_region
          _
        $region112: #{tpu_custom_call.1} parent=11 // pred_fallthru
          _
        // Predicated region
        $region113: #{tpu_custom_call.1} parent=11 // pred_check
          %p1049 = pneg %p751
        $region114: #{tpu_custom_call.1} parent=11 // pred_check_branch
          %1051 = sbr.rel (%p1049) target = $region116
        $region115: #{tpu_custom_call.1} parent=11 // pred_region
          _
        $region116: #{tpu_custom_call.1} parent=11 // pred_fallthru
          _
      $region12: #{tpu_custom_call.1} parent=5 // pred_fallthru
        _
      %p1052 = scmp.lt.s32.totalorder %s85, 4
      // Predicated region
      $region117: #{tpu_custom_call.1} parent=5 // pred_check
        %p1053 = pneg %p1052
      $region118: #{tpu_custom_call.1} parent=5 // pred_check_branch
        %1055 = sbr.rel (%p1053) target = $region120
      $region119: #{tpu_custom_call.1} parent=5 // pred_region
        // Predicated region
        $region121: #{tpu_custom_call.1} parent=119 // pred_check
          %p1056 = pneg %p117
        $region122: #{tpu_custom_call.1} parent=119 // pred_check_branch
          %1058 = sbr.rel (%p1056) target = $region124
        $region123: #{tpu_custom_call.1} parent=119 // pred_region
          %s1059 = sand.u32 %s107, 1
          %s1060 = scalar_lea.sflag [#allocation7], %s1059
          %s1061 = sand.u32 %s107, 1
          %s1062 = smul.addr %s1061, 16
          %s1063 = scalar_lea.vmem [#allocation6], %s1062
          %1065 = vsyncadd %s1060, 0
          %s1066 = smul.addr %s92, 4
          %s1067 = smul.addr %s1066, 4
          %s1068 = scalar_lea.hbm %s1, %s1067
          %s1069 = sshll.u32 %s1068, 4
          %s1070 = int_to_ptr.hbm [resolvable:$true] %s1069
          %s1071 = sshll.u32 %s1063, 4
          %s1072 = int_to_ptr.vmem [resolvable:$true] %s1071
          %1077 = dma.hbm_to_vmem [thread:$0]  %s1070, 256, %s1072, %s1060, 64, 64, 4
        $region124: #{tpu_custom_call.1} parent=119 // pred_fallthru
          _
        // Predicated region
        $region125: #{tpu_custom_call.1} parent=119 // pred_check
          %p1078 = pneg %p143
        $region126: #{tpu_custom_call.1} parent=119 // pred_check_branch
          %1080 = sbr.rel (%p1078) target = $region128
        $region127: #{tpu_custom_call.1} parent=119 // pred_region
          %s1081 = sand.u32 %s85, 1
          %s1082 = scalar_lea.sflag [#allocation10], %s1081
          %s1083 = sand.u32 %s133, 1
          %s1084 = smul.addr %s1083, 8
          %s1085 = scalar_lea.vmem [#allocation9], %s1084
          %1087 = vsyncadd %s1082, 0
          %s1088 = smul.addr %s92, 2
          %s1089 = smul.addr %s1088, 4
          %s1090 = scalar_lea.hbm %s3, %s1089
          %s1091 = sshll.u32 %s1090, 4
          %s1092 = int_to_ptr.hbm [resolvable:$true] %s1091
          %s1093 = sshll.u32 %s1085, 4
          %s1094 = int_to_ptr.vmem [resolvable:$true] %s1093
          %1099 = dma.hbm_to_vmem [thread:$0]  %s1092, 128, %s1094, %s1082, 64, 64, 4
        $region128: #{tpu_custom_call.1} parent=119 // pred_fallthru
          _
        // Predicated region
        $region129: #{tpu_custom_call.1} parent=119 // pred_check
          %p1100 = pneg %p171
        $region130: #{tpu_custom_call.1} parent=119 // pred_check_branch
          %1102 = sbr.rel (%p1100) target = $region132
        $region131: #{tpu_custom_call.1} parent=119 // pred_region
          %s1103 = sand.u32 %s85, 1
          %s1104 = scalar_lea.sflag [#allocation10], %s1103
          %s1105 = sand.u32 %s161, 1
          %s1106 = smul.addr %s1105, 8
          %s1107 = scalar_lea.vmem [#allocation11], %s1106
          %s1108 = smul.u32 2, %s93
          %1110 = vsyncadd %s1104, 0
          %s1111 = smul.addr %s92, 4
          %s1112 = sadd.s32 %s1108, %s1111
          %s1113 = smul.addr %s1112, 4
          %s1114 = scalar_lea.hbm %s5, %s1113
          %s1115 = sshll.u32 %s1114, 4
          %s1116 = int_to_ptr.hbm [resolvable:$true] %s1115
          %s1117 = sshll.u32 %s1107, 4
          %s1118 = int_to_ptr.vmem [resolvable:$true] %s1117
          %1123 = dma.hbm_to_vmem [thread:$0]  %s1116, 128, %s1118, %s1104, 64, 64, 4
        $region132: #{tpu_custom_call.1} parent=119 // pred_fallthru
          _
        // Predicated region
        $region133: #{tpu_custom_call.1} parent=119 // pred_check
          %p1124 = pneg %p199
        $region134: #{tpu_custom_call.1} parent=119 // pred_check_branch
          %1126 = sbr.rel (%p1124) target = $region136
        $region135: #{tpu_custom_call.1} parent=119 // pred_region
          %s1127 = smul.u32 2, %s93
          %p1128 = scmp.lt.s32.totalorder %s92, 1
          %s1129 = scalar_select %p1128, %s92, 1
          %p1130 = scmp.lt.s32.totalorder %s1127, 3
          %s1131 = scalar_select %p1130, %s1127, 3
          %s1132 = smul.addr %s1129, 4
          %s1133 = sadd.s32 %s1131, %s1132
          %s1134 = smul.addr %s1133, 4
          %s1135 = scalar_lea.vmem %s7, %s1134
          %s1136 = smul.u32 2, %s93
        $region136: #{tpu_custom_call.1} parent=119 // pred_fallthru
          _
      $region120: #{tpu_custom_call.1} parent=5 // pred_fallthru
        _
      %p1137 = scmp.le.s32.totalorder 1, %s85
      %p1138 = scmp.lt.s32.totalorder %s85, 5
      %p1139 = pnand %p1137, %p1138
      %p1140 = pneg %p1139
      // Predicated region
      $region137: #{tpu_custom_call.1} parent=5 // pred_check
        _
      $region138: #{tpu_custom_call.1} parent=5 // pred_check_branch
        %1142 = sbr.rel (%p1139) target = $region140
      $region139: #{tpu_custom_call.1} parent=5 // pred_region
        %s1143 = ssub.s32 %s85, 1
        %s1144 = sand.u32 %s110, 1
        %s1145 = scalar_lea.sflag [#allocation7], %s1144
        %s1146 = sand.u32 %s110, 1
        %s1147 = smul.addr %s1146, 16
        %s1148 = scalar_lea.vmem [#allocation6], %s1147
        // Predicated region
        $region141: #{tpu_custom_call.1} parent=139 // pred_check
          %p1149 = pneg %p123
        $region142: #{tpu_custom_call.1} parent=139 // pred_check_branch
          %1151 = sbr.rel (%p1149) target = $region144
        $region143: #{tpu_custom_call.1} parent=139 // pred_region
          %1153 = dma.done %s1145, 256
        $region144: #{tpu_custom_call.1} parent=139 // pred_fallthru
          _
        %s1154 = sand.u32 %s90, 1
        %s1155 = scalar_lea.sflag [#allocation10], %s1154
        %s1156 = sand.u32 %s136, 1
        %s1157 = smul.addr %s1156, 8
        %s1158 = scalar_lea.vmem [#allocation9], %s1157
        // Predicated region
        $region145: #{tpu_custom_call.1} parent=139 // pred_check
          %p1159 = pneg %p149
        $region146: #{tpu_custom_call.1} parent=139 // pred_check_branch
          %1161 = sbr.rel (%p1159) target = $region148
        $region147: #{tpu_custom_call.1} parent=139 // pred_region
          %1163 = dma.done %s1155, 128
        $region148: #{tpu_custom_call.1} parent=139 // pred_fallthru
          _
        %s1164 = sand.u32 %s90, 1
        %s1165 = scalar_lea.sflag [#allocation10], %s1164
        %s1166 = sand.u32 %s164, 1
        %s1167 = smul.addr %s1166, 8
        %s1168 = scalar_lea.vmem [#allocation11], %s1167
        // Predicated region
        $region149: #{tpu_custom_call.1} parent=139 // pred_check
          %p1169 = pneg %p177
        $region150: #{tpu_custom_call.1} parent=139 // pred_check_branch
          %1171 = sbr.rel (%p1169) target = $region152
        $region151: #{tpu_custom_call.1} parent=139 // pred_region
          %1173 = dma.done %s1165, 128
        $region152: #{tpu_custom_call.1} parent=139 // pred_fallthru
          _
        // Predicated region
        $region153: #{tpu_custom_call.1} parent=139 // pred_check
          %p1174 = pneg %p226
        $region154: #{tpu_custom_call.1} parent=139 // pred_check_branch
          %1176 = sbr.rel (%p1174) target = $region156
        $region155: #{tpu_custom_call.1} parent=139 // pred_region
          %1178 = dma.done [#allocation13], 1024
        $region156: #{tpu_custom_call.1} parent=139 // pred_fallthru
          _
        // Predicated region
        $region157: #{tpu_custom_call.1} parent=139 // pred_check
          %p1179 = pneg %p247
        $region158: #{tpu_custom_call.1} parent=139 // pred_check_branch
          %1181 = sbr.rel (%p1179) target = $region160
        $region159: #{tpu_custom_call.1} parent=139 // pred_region
          %1183 = dma.done [#allocation13], 16
        $region160: #{tpu_custom_call.1} parent=139 // pred_fallthru
          _
        // Predicated region
        $region161: #{tpu_custom_call.1} parent=139 // pred_check
          %p1184 = pneg %p268
        $region162: #{tpu_custom_call.1} parent=139 // pred_check_branch
          %1186 = sbr.rel (%p1184) target = $region164
        $region163: #{tpu_custom_call.1} parent=139 // pred_region
          %1188 = dma.done [#allocation16], 1024
        $region164: #{tpu_custom_call.1} parent=139 // pred_fallthru
          _
        // Predicated region
        $region165: #{tpu_custom_call.1} parent=139 // pred_check
          %p1189 = pneg %p289
        $region166: #{tpu_custom_call.1} parent=139 // pred_check_branch
          %1191 = sbr.rel (%p1189) target = $region168
        $region167: #{tpu_custom_call.1} parent=139 // pred_region
          %1193 = dma.done [#allocation16], 16
        $region168: #{tpu_custom_call.1} parent=139 // pred_fallthru
          _
        // Predicated region
        $region169: #{tpu_custom_call.1} parent=139 // pred_check
          %p1194 = pneg %p310
        $region170: #{tpu_custom_call.1} parent=139 // pred_check_branch
          %1196 = sbr.rel (%p1194) target = $region172
        $region171: #{tpu_custom_call.1} parent=139 // pred_region
          %1198 = dma.done [#allocation19], 1024
        $region172: #{tpu_custom_call.1} parent=139 // pred_fallthru
          _
        // Predicated region
        $region173: #{tpu_custom_call.1} parent=139 // pred_check
          %p1199 = pneg %p331
        $region174: #{tpu_custom_call.1} parent=139 // pred_check_branch
          %1201 = sbr.rel (%p1199) target = $region176
        $region175: #{tpu_custom_call.1} parent=139 // pred_region
          %1203 = dma.done [#allocation19], 16
        $region176: #{tpu_custom_call.1} parent=139 // pred_fallthru
          _
        // Predicated region
        $region177: #{tpu_custom_call.1} parent=139 // pred_check
          %p1204 = pneg %p352
        $region178: #{tpu_custom_call.1} parent=139 // pred_check_branch
          %1206 = sbr.rel (%p1204) target = $region180
        $region179: #{tpu_custom_call.1} parent=139 // pred_region
          %1208 = dma.done [#allocation22], 1024
        $region180: #{tpu_custom_call.1} parent=139 // pred_fallthru
          _
        // Predicated region
        $region181: #{tpu_custom_call.1} parent=139 // pred_check
          %p1209 = pneg %p373
        $region182: #{tpu_custom_call.1} parent=139 // pred_check_branch
          %1211 = sbr.rel (%p1209) target = $region184
        $region183: #{tpu_custom_call.1} parent=139 // pred_region
          %1213 = dma.done [#allocation22], 16
        $region184: #{tpu_custom_call.1} parent=139 // pred_fallthru
          _
        // Predicated region
        $region185: #{tpu_custom_call.1} parent=139 // pred_check
          %p1214 = pneg %p394
        $region186: #{tpu_custom_call.1} parent=139 // pred_check_branch
          %1216 = sbr.rel (%p1214) target = $region188
        $region187: #{tpu_custom_call.1} parent=139 // pred_region
          %1218 = dma.done [#allocation25], 16
        $region188: #{tpu_custom_call.1} parent=139 // pred_fallthru
          _
        // Predicated region
        $region189: #{tpu_custom_call.1} parent=139 // pred_check
          %p1219 = pneg %p415
        $region190: #{tpu_custom_call.1} parent=139 // pred_check_branch
          %1221 = sbr.rel (%p1219) target = $region192
        $region191: #{tpu_custom_call.1} parent=139 // pred_region
          %1223 = dma.done [#allocation25], 16
        $region192: #{tpu_custom_call.1} parent=139 // pred_fallthru
          _
        // Predicated region
        $region193: #{tpu_custom_call.1} parent=139 // pred_check
          %p1224 = pneg %p436
        $region194: #{tpu_custom_call.1} parent=139 // pred_check_branch
          %1226 = sbr.rel (%p1224) target = $region196
        $region195: #{tpu_custom_call.1} parent=139 // pred_region
          %1228 = dma.done [#allocation28], 1024
        $region196: #{tpu_custom_call.1} parent=139 // pred_fallthru
          _
        // Predicated region
        $region197: #{tpu_custom_call.1} parent=139 // pred_check
          %p1229 = pneg %p457
        $region198: #{tpu_custom_call.1} parent=139 // pred_check_branch
          %1231 = sbr.rel (%p1229) target = $region200
        $region199: #{tpu_custom_call.1} parent=139 // pred_region
          %1233 = dma.done [#allocation28], 16
        $region200: #{tpu_custom_call.1} parent=139 // pred_fallthru
          _
        // Predicated region
        $region201: #{tpu_custom_call.1} parent=139 // pred_check
          %p1234 = pneg %p478
        $region202: #{tpu_custom_call.1} parent=139 // pred_check_branch
          %1236 = sbr.rel (%p1234) target = $region204
        $region203: #{tpu_custom_call.1} parent=139 // pred_region
          %1238 = dma.done [#allocation31], 1024
        $region204: #{tpu_custom_call.1} parent=139 // pred_fallthru
          _
        // Predicated region
        $region205: #{tpu_custom_call.1} parent=139 // pred_check
          %p1239 = pneg %p499
        $region206: #{tpu_custom_call.1} parent=139 // pred_check_branch
          %1241 = sbr.rel (%p1239) target = $region208
        $region207: #{tpu_custom_call.1} parent=139 // pred_region
          %1243 = dma.done [#allocation31], 16
        $region208: #{tpu_custom_call.1} parent=139 // pred_fallthru
          _
        // Predicated region
        $region209: #{tpu_custom_call.1} parent=139 // pred_check
          %p1244 = pneg %p541
        $region210: #{tpu_custom_call.1} parent=139 // pred_check_branch
          %1246 = sbr.rel (%p1244) target = $region212
        $region211: #{tpu_custom_call.1} parent=139 // pred_region
          %1248 = dma.done [#allocation34], 16
        $region212: #{tpu_custom_call.1} parent=139 // pred_fallthru
          _
        // Predicated region
        $region213: #{tpu_custom_call.1} parent=139 // pred_check
          %p1249 = pneg %p562
        $region214: #{tpu_custom_call.1} parent=139 // pred_check_branch
          %1251 = sbr.rel (%p1249) target = $region216
        $region215: #{tpu_custom_call.1} parent=139 // pred_region
          %1253 = dma.done [#allocation34], 1024
        $region216: #{tpu_custom_call.1} parent=139 // pred_fallthru
          _
        // Predicated region
        $region217: #{tpu_custom_call.1} parent=139 // pred_check
          %p1254 = pneg %p646
        $region218: #{tpu_custom_call.1} parent=139 // pred_check_branch
          %1256 = sbr.rel (%p1254) target = $region220
        $region219: #{tpu_custom_call.1} parent=139 // pred_region
          %1258 = dma.done [#allocation37], 2048
        $region220: #{tpu_custom_call.1} parent=139 // pred_fallthru
          _
        // Predicated region
        $region221: #{tpu_custom_call.1} parent=139 // pred_check
          %p1259 = pneg %p688
        $region222: #{tpu_custom_call.1} parent=139 // pred_check_branch
          %1261 = sbr.rel (%p1259) target = $region224
        $region223: #{tpu_custom_call.1} parent=139 // pred_region
          %1263 = dma.done [#allocation37], 2048
        $region224: #{tpu_custom_call.1} parent=139 // pred_fallthru
          _
        %s1264 = sand.u32 %s110, 1
        %s1265 = scalar_lea.sflag [#allocation7], %s1264
        %s1266 = sand.u32 %s110, 1
        %s1267 = smul.addr %s1266, 16
        %s1268 = scalar_lea.vmem [#allocation6], %s1267
        %p1269 = pneg %p123
        %p1270 = pneg %p120
        %s1271 = sand.u32 %s90, 1
        %s1272 = scalar_lea.sflag [#allocation10], %s1271
        %s1273 = sand.u32 %s136, 1
        %s1274 = smul.addr %s1273, 8
        %s1275 = scalar_lea.vmem [#allocation9], %s1274
        %p1276 = pneg %p149
        %p1277 = pneg %p146
        %s1278 = sand.u32 %s90, 1
        %s1279 = scalar_lea.sflag [#allocation10], %s1278
        %s1280 = sand.u32 %s164, 1
        %s1281 = smul.addr %s1280, 8
        %s1282 = scalar_lea.vmem [#allocation11], %s1281
        %p1283 = pneg %p177
        %p1284 = pneg %p174
        %s1285 = smul.u32 2, %s95
        %p1286 = scmp.lt.s32.totalorder %s94, 1
        %s1287 = scalar_select %p1286, %s94, 1
        %p1288 = scmp.lt.s32.totalorder %s1285, 3
        %s1289 = scalar_select %p1288, %s1285, 3
        %s1290 = smul.addr %s1287, 4
        %s1291 = sadd.s32 %s1289, %s1290
        %s1292 = smul.addr %s1291, 4
        %s1293 = scalar_lea.vmem %s7, %s1292
        %p1294 = pneg %p205
        %p1295 = pneg %p202
        %p1296 = pneg %p226
        %p1297 = pneg %p223
        %p1298 = pneg %p247
        %p1299 = pneg %p244
        %p1300 = pneg %p268
        %p1301 = pneg %p265
        %p1302 = pneg %p289
        %p1303 = pneg %p286
        %p1304 = pneg %p310
        %p1305 = pneg %p307
        %p1306 = pneg %p331
        %p1307 = pneg %p328
        %p1308 = pneg %p352
        %p1309 = pneg %p349
        %p1310 = pneg %p373
        %p1311 = pneg %p370
        %p1312 = pneg %p394
        %p1313 = pneg %p391
        %p1314 = pneg %p415
        %p1315 = pneg %p412
        %p1316 = pneg %p436
        %p1317 = pneg %p433
        %p1318 = pneg %p457
        %p1319 = pneg %p454
        %p1320 = pneg %p478
        %p1321 = pneg %p475
        %p1322 = pneg %p499
        %p1323 = pneg %p496
        %p1324 = pneg %p520
        %p1325 = pneg %p517
        %p1326 = pneg %p541
        %p1327 = pneg %p538
        %p1328 = pneg %p562
        %p1329 = pneg %p559
        %p1330 = pneg %p583
        %p1331 = pneg %p580
        %p1332 = pneg %p604
        %p1333 = pneg %p601
        %p1334 = pneg %p625
        %p1335 = pneg %p622
        %p1336 = pneg %p646
        %p1337 = pneg %p643
        %p1338 = pneg %p667
        %p1339 = pneg %p664
        %p1340 = pneg %p688
        %p1341 = pneg %p685
        %p1342 = pneg %p709
        %p1343 = pneg %p706
        %p1344 = pneg %p730
        %p1345 = pneg %p727
        %p1346 = pneg %p751
        %p1347 = pneg %p748
        %p1348 = pneg %p779
        %p1349 = pneg %p776
        %s1350 = sand.u32 %s766, 1
        %s1351 = scalar_lea.sflag [#allocation8], %s1350
        %s1352 = sand.u32 %s766, 1
        %s1353 = smul.addr %s1352, 16
        %s1354 = scalar_lea.vmem [#allocation39], %s1353
        %s1355 = smul.u32 2, %s95
        %s1356 = smul.u32 2, %s95
        %p1357 = scmp.lt.s32.totalorder %s94, 1
        %s1358 = scalar_select %p1357, %s94, 1
        %p1359 = scmp.lt.s32.totalorder %s1356, 3
        %s1360 = scalar_select %p1359, %s1356, 3
        %s1361 = smul.addr %s1358, 4
        %s1362 = sadd.s32 %s1360, %s1361
        %s1363 = smul.addr %s1362, 4
        %s1364 = scalar_lea.vmem %s7, %s1363
        %s1365 = smul.u32 2, %s95
        %s1366 = smul.u32 2, %s95
        %p1368 = scmp.eq.s32.totalorder %s95, 0
        // Predicated region
        $region225: #{tpu_custom_call.1} parent=139 // pred_check
          %p1369 = pneg %p1368
        $region226: #{tpu_custom_call.1} parent=139 // pred_check_branch
          %1371 = sbr.rel (%p1369) target = $region228
        $region227: #{tpu_custom_call.1} parent=139 // pred_region
          %v1372 = vld [vmem:[%s1148] sm:$0xf]
          %v1373 = vld [vmem:[%s1148 + $0x4] sm:$0xf]
          %v1374 = vld [vmem:[%s1148 + $0x8] sm:$0xf]
          %v1375 = vld [vmem:[%s1148 + $0xc] sm:$0xf]
          %v1376 = vld [vmem:[#allocation15] sm:$0xf]
          %v1377 = vld [vmem:[#allocation15 + $0x4] sm:$0xf]
          %v1378 = vld [vmem:[#allocation15 + $0x8] sm:$0xf]
          %v1379 = vld [vmem:[#allocation15 + $0xc] sm:$0xf]
          %v1380 = vld [vmem:[#allocation15 + $0x10] sm:$0xf]
          %v1381 = vld [vmem:[#allocation15 + $0x14] sm:$0xf]
          %v1382 = vld [vmem:[#allocation15 + $0x18] sm:$0xf]
          %v1383 = vld [vmem:[#allocation15 + $0x1c] sm:$0xf]
          %v1384 = vld [vmem:[#allocation15 + $0x20] sm:$0xf]
          %v1385 = vld [vmem:[#allocation15 + $0x24] sm:$0xf]
          %v1386 = vld [vmem:[#allocation15 + $0x28] sm:$0xf]
          %v1387 = vld [vmem:[#allocation15 + $0x2c] sm:$0xf]
          %v1388 = vld [vmem:[#allocation15 + $0x30] sm:$0xf]
          %v1389 = vld [vmem:[#allocation15 + $0x34] sm:$0xf]
          %v1390 = vld [vmem:[#allocation15 + $0x38] sm:$0xf]
          %v1391 = vld [vmem:[#allocation15 + $0x3c] sm:$0xf]
          %v1392 = vld [vmem:[#allocation17] sm:$0x1]
          %v1393 = vld [vmem:[#allocation18] sm:$0xf]
          %v1394 = vld [vmem:[#allocation18 + $0x4] sm:$0xf]
          %v1395 = vld [vmem:[#allocation18 + $0x8] sm:$0xf]
          %v1396 = vld [vmem:[#allocation18 + $0xc] sm:$0xf]
          %v1397 = vld [vmem:[#allocation18 + $0x10] sm:$0xf]
          %v1398 = vld [vmem:[#allocation18 + $0x14] sm:$0xf]
          %v1399 = vld [vmem:[#allocation18 + $0x18] sm:$0xf]
          %v1400 = vld [vmem:[#allocation18 + $0x1c] sm:$0xf]
          %v1401 = vld [vmem:[#allocation18 + $0x20] sm:$0xf]
          %v1402 = vld [vmem:[#allocation18 + $0x24] sm:$0xf]
          %v1403 = vld [vmem:[#allocation18 + $0x28] sm:$0xf]
          %v1404 = vld [vmem:[#allocation18 + $0x2c] sm:$0xf]
          %v1405 = vld [vmem:[#allocation18 + $0x30] sm:$0xf]
          %v1406 = vld [vmem:[#allocation18 + $0x34] sm:$0xf]
          %v1407 = vld [vmem:[#allocation18 + $0x38] sm:$0xf]
          %v1408 = vld [vmem:[#allocation18 + $0x3c] sm:$0xf]
          %v1409 = vld [vmem:[#allocation20] sm:$0x1]
          %v1411 = vperm.slane %v1392, 0
          %v1417 = vunpack.c.l.b16 %v1372
          %v1418 = vunpack.c.l.b16 %v1373
          %v1419 = vunpack.c.l.b16 %v1374
          %v1420 = vunpack.c.l.b16 %v1375
          %v1421 = vpack.c.b16 %v1418, %v1417
          %v1422 = vpack.c.b16 %v1420, %v1419
          %v1441 = vunpack.c.l.b16 %v1376
          %v1442 = vunpack.c.l.b16 %v1377
          %v1443 = vunpack.c.l.b16 %v1378
          %v1444 = vunpack.c.l.b16 %v1379
          %v1445 = vunpack.c.l.b16 %v1380
          %v1446 = vunpack.c.l.b16 %v1381
          %v1447 = vunpack.c.l.b16 %v1382
          %v1448 = vunpack.c.l.b16 %v1383
          %v1449 = vunpack.c.l.b16 %v1384
          %v1450 = vunpack.c.l.b16 %v1385
          %v1451 = vunpack.c.l.b16 %v1386
          %v1452 = vunpack.c.l.b16 %v1387
          %v1453 = vunpack.c.l.b16 %v1388
          %v1454 = vunpack.c.l.b16 %v1389
          %v1455 = vunpack.c.l.b16 %v1390
          %v1456 = vunpack.c.l.b16 %v1391
          %v1457 = vpack.c.b16 %v1442, %v1441
          %v1458 = vpack.c.b16 %v1444, %v1443
          %v1459 = vpack.c.b16 %v1446, %v1445
          %v1460 = vpack.c.b16 %v1448, %v1447
          %v1461 = vpack.c.b16 %v1450, %v1449
          %v1462 = vpack.c.b16 %v1452, %v1451
          %v1463 = vpack.c.b16 %v1454, %v1453
          %v1464 = vpack.c.b16 %v1456, %v1455
          %1473 = vmatpush.bf16.msra.mxu0 %v1464
          %1474 = vmatpush.bf16.msra.mxu0 %v1463
          %1475 = vmatpush.bf16.msra.mxu0 %v1462
          %1476 = vmatpush.bf16.msra.mxu0 %v1461
          %1477 = vmatpush.bf16.msra.mxu0 %v1460
          %1478 = vmatpush.bf16.msra.mxu0 %v1459
          %1479 = vmatpush.bf16.msra.mxu0 %v1458
          %1480 = vmatpush.bf16.msra.mxu0 %v1457
          %1481 = vmatmul.bf16.gmra.mxu0 %v1421
          %v1482 = vpop.f32.mrf.mxu0
          %v1483 = vadd.f32 %v1411, %v1482
          %v1484 = vpop.f32.mrf.mxu0
          %v1485 = vadd.f32 %v1411, %v1484
          %1486 = vmatmul.bf16.gmra.mxu0 %v1422
          %v1487 = vpop.f32.mrf.mxu0
          %v1488 = vadd.f32 %v1411, %v1487
          %v1489 = vpop.f32.mrf.mxu0
          %v1490 = vadd.f32 %v1411, %v1489
          %1491 = vdwg.mxu0
          %v1493 = vperm.slane %v1409, 0
          %v1511 = vunpack.c.l.b16 %v1393
          %v1512 = vunpack.c.l.b16 %v1394
          %v1513 = vunpack.c.l.b16 %v1395
          %v1514 = vunpack.c.l.b16 %v1396
          %v1515 = vunpack.c.l.b16 %v1397
          %v1516 = vunpack.c.l.b16 %v1398
          %v1517 = vunpack.c.l.b16 %v1399
          %v1518 = vunpack.c.l.b16 %v1400
          %v1519 = vunpack.c.l.b16 %v1401
          %v1520 = vunpack.c.l.b16 %v1402
          %v1521 = vunpack.c.l.b16 %v1403
          %v1522 = vunpack.c.l.b16 %v1404
          %v1523 = vunpack.c.l.b16 %v1405
          %v1524 = vunpack.c.l.b16 %v1406
          %v1525 = vunpack.c.l.b16 %v1407
          %v1526 = vunpack.c.l.b16 %v1408
          %v1527 = vpack.c.b16 %v1512, %v1511
          %v1528 = vpack.c.b16 %v1514, %v1513
          %v1529 = vpack.c.b16 %v1516, %v1515
          %v1530 = vpack.c.b16 %v1518, %v1517
          %v1531 = vpack.c.b16 %v1520, %v1519
          %v1532 = vpack.c.b16 %v1522, %v1521
          %v1533 = vpack.c.b16 %v1524, %v1523
          %v1534 = vpack.c.b16 %v1526, %v1525
          %1543 = vmatpush.bf16.msra.mxu0 %v1534
          %1544 = vmatpush.bf16.msra.mxu0 %v1533
          %1545 = vmatpush.bf16.msra.mxu0 %v1532
          %1546 = vmatpush.bf16.msra.mxu0 %v1531
          %1547 = vmatpush.bf16.msra.mxu0 %v1530
          %1548 = vmatpush.bf16.msra.mxu0 %v1529
          %1549 = vmatpush.bf16.msra.mxu0 %v1528
          %1550 = vmatpush.bf16.msra.mxu0 %v1527
          %1551 = vmatmul.bf16.gmra.mxu0 %v1421
          %v1552 = vpop.f32.mrf.mxu0
          %v1553 = vadd.f32 %v1493, %v1552
          %v1554 = vpop.f32.mrf.mxu0
          %v1555 = vadd.f32 %v1493, %v1554
          %1556 = vmatmul.bf16.gmra.mxu0 %v1422
          %v1557 = vpop.f32.mrf.mxu0
          %v1558 = vadd.f32 %v1493, %v1557
          %v1559 = vpop.f32.mrf.mxu0
          %v1560 = vadd.f32 %v1493, %v1559
          %1561 = vdwg.mxu0
          %1566 = vrot.lane.b32.xlu0 %v1483, 96
          %v1567 = vpop.permute.xlu0 %1566
          %1568 = vrot.lane.b32.xlu0 %v1485, 96
          %v1569 = vpop.permute.xlu0 %1568
          %1570 = vrot.lane.b32.xlu0 %v1488, 96
          %v1571 = vpop.permute.xlu0 %1570
          %1572 = vrot.lane.b32.xlu0 %v1490, 96
          %v1573 = vpop.permute.xlu0 %1572
          %1578 = vrot.lane.b32.xlu0 %v1483, 64
          %v1579 = vpop.permute.xlu0 %1578
          %1580 = vrot.lane.b32.xlu0 %v1485, 64
          %v1581 = vpop.permute.xlu0 %1580
          %1582 = vrot.lane.b32.xlu0 %v1488, 64
          %v1583 = vpop.permute.xlu0 %1582
          %1584 = vrot.lane.b32.xlu0 %v1490, 64
          %v1585 = vpop.permute.xlu0 %1584
          %1590 = vrot.lane.b32.xlu0 %v1483, 32
          %v1591 = vpop.permute.xlu0 %1590
          %1592 = vrot.lane.b32.xlu0 %v1485, 32
          %v1593 = vpop.permute.xlu0 %1592
          %1594 = vrot.lane.b32.xlu0 %v1488, 32
          %v1595 = vpop.permute.xlu0 %1594
          %1596 = vrot.lane.b32.xlu0 %v1490, 32
          %v1597 = vpop.permute.xlu0 %1596
          %v1602 = vrot.slane %v1579, 4
          %vm1603 = vcmask 1047556
          %v1604 = vsel %vm1603, %v1602, %v1483
          %v1605 = vrot.slane %v1483, 4
          %v1606 = vsel %vm1603, %v1579, %v1605
          %v1608 = vunpack.c.l.s4 1983009808
          %v1609 = vunpack.c.0.s8 %v1608
          %v1610 = vperm.slane %v1604, %v1609
          %v1612 = vunpack.c.l.s4 1983009808
          %v1613 = vunpack.c.0.s8 %v1612
          %v1614 = vperm.slane %v1606, %v1613
          %v1615 = vrot.slane %v1591, 4
          %v1616 = vsel %vm1603, %v1615, %v1567
          %v1617 = vrot.slane %v1567, 4
          %v1618 = vsel %vm1603, %v1591, %v1617
          %v1620 = vunpack.c.l.s4 1983009808
          %v1621 = vunpack.c.0.s8 %v1620
          %v1622 = vperm.slane %v1616, %v1621
          %v1624 = vunpack.c.l.s4 1983009808
          %v1625 = vunpack.c.0.s8 %v1624
          %v1626 = vperm.slane %v1618, %v1625
          %v1627 = vrot.slane %v1622, 4
          %v1628 = vsel %vm1603, %v1627, %v1610
          %v1629 = vrot.slane %v1610, 4
          %v1630 = vsel %vm1603, %v1622, %v1629
          %v1632 = vunpack.c.l.s4 1934713408
          %v1633 = vunpack.c.0.s8 %v1632
          %v1634 = vperm.slane %v1628, %v1633
          %v1636 = vunpack.c.l.s4 1934713408
          %v1637 = vunpack.c.0.s8 %v1636
          %v1638 = vperm.slane %v1630, %v1637
          %v1639 = vrot.slane %v1626, 4
          %v1640 = vsel %vm1603, %v1639, %v1614
          %v1641 = vrot.slane %v1614, 4
          %v1642 = vsel %vm1603, %v1626, %v1641
          %v1644 = vunpack.c.l.s4 1934713408
          %v1645 = vunpack.c.0.s8 %v1644
          %v1646 = vperm.slane %v1640, %v1645
          %v1648 = vunpack.c.l.s4 1934713408
          %v1649 = vunpack.c.0.s8 %v1648
          %v1650 = vperm.slane %v1642, %v1649
          %v1651 = vrot.slane %v1634, 4
          %v1652 = vsel %vm1603, 0.0, %v1651
          %v1653 = vrot.slane %v1638, 4
          %v1654 = vsel %vm1603, 0.0, %v1653
          %v1655 = vrot.slane %v1646, 4
          %v1656 = vsel %vm1603, 0.0, %v1655
          %v1657 = vrot.slane %v1650, 4
          %v1658 = vsel %vm1603, 0.0, %v1657
          %v1659 = vrot.slane %v1581, 4
          %v1660 = vsel %vm1603, %v1659, %v1485
          %v1661 = vrot.slane %v1485, 4
          %v1662 = vsel %vm1603, %v1581, %v1661
          %v1664 = vunpack.c.l.s4 1983009808
          %v1665 = vunpack.c.0.s8 %v1664
          %v1666 = vperm.slane %v1660, %v1665
          %v1668 = vunpack.c.l.s4 1983009808
          %v1669 = vunpack.c.0.s8 %v1668
          %v1670 = vperm.slane %v1662, %v1669
          %v1671 = vrot.slane %v1593, 4
          %v1672 = vsel %vm1603, %v1671, %v1569
          %v1673 = vrot.slane %v1569, 4
          %v1674 = vsel %vm1603, %v1593, %v1673
          %v1676 = vunpack.c.l.s4 1983009808
          %v1677 = vunpack.c.0.s8 %v1676
          %v1678 = vperm.slane %v1672, %v1677
          %v1680 = vunpack.c.l.s4 1983009808
          %v1681 = vunpack.c.0.s8 %v1680
          %v1682 = vperm.slane %v1674, %v1681
          %v1683 = vrot.slane %v1678, 4
          %v1684 = vsel %vm1603, %v1683, %v1666
          %v1685 = vrot.slane %v1666, 4
          %v1686 = vsel %vm1603, %v1678, %v1685
          %v1688 = vunpack.c.l.s4 1934713408
          %v1689 = vunpack.c.0.s8 %v1688
          %v1690 = vperm.slane %v1684, %v1689
          %v1692 = vunpack.c.l.s4 1934713408
          %v1693 = vunpack.c.0.s8 %v1692
          %v1694 = vperm.slane %v1686, %v1693
          %v1695 = vrot.slane %v1682, 4
          %v1696 = vsel %vm1603, %v1695, %v1670
          %v1697 = vrot.slane %v1670, 4
          %v1698 = vsel %vm1603, %v1682, %v1697
          %v1700 = vunpack.c.l.s4 1934713408
          %v1701 = vunpack.c.0.s8 %v1700
          %v1702 = vperm.slane %v1696, %v1701
          %v1704 = vunpack.c.l.s4 1934713408
          %v1705 = vunpack.c.0.s8 %v1704
          %v1706 = vperm.slane %v1698, %v1705
          %v1707 = vrot.slane %v1690, 4
          %v1708 = vsel %vm1603, 0.0, %v1707
          %v1709 = vrot.slane %v1694, 4
          %v1710 = vsel %vm1603, 0.0, %v1709
          %v1711 = vrot.slane %v1702, 4
          %v1712 = vsel %vm1603, 0.0, %v1711
          %v1713 = vrot.slane %v1706, 4
          %v1714 = vsel %vm1603, 0.0, %v1713
          %v1715 = vrot.slane %v1583, 4
          %v1716 = vsel %vm1603, %v1715, %v1488
          %v1717 = vrot.slane %v1488, 4
          %v1718 = vsel %vm1603, %v1583, %v1717
          %v1720 = vunpack.c.l.s4 1983009808
          %v1721 = vunpack.c.0.s8 %v1720
          %v1722 = vperm.slane %v1716, %v1721
          %v1724 = vunpack.c.l.s4 1983009808
          %v1725 = vunpack.c.0.s8 %v1724
          %v1726 = vperm.slane %v1718, %v1725
          %v1727 = vrot.slane %v1595, 4
          %v1728 = vsel %vm1603, %v1727, %v1571
          %v1729 = vrot.slane %v1571, 4
          %v1730 = vsel %vm1603, %v1595, %v1729
          %v1732 = vunpack.c.l.s4 1983009808
          %v1733 = vunpack.c.0.s8 %v1732
          %v1734 = vperm.slane %v1728, %v1733
          %v1736 = vunpack.c.l.s4 1983009808
          %v1737 = vunpack.c.0.s8 %v1736
          %v1738 = vperm.slane %v1730, %v1737
          %v1739 = vrot.slane %v1734, 4
          %v1740 = vsel %vm1603, %v1739, %v1722
          %v1741 = vrot.slane %v1722, 4
          %v1742 = vsel %vm1603, %v1734, %v1741
          %v1744 = vunpack.c.l.s4 1934713408
          %v1745 = vunpack.c.0.s8 %v1744
          %v1746 = vperm.slane %v1740, %v1745
          %v1748 = vunpack.c.l.s4 1934713408
          %v1749 = vunpack.c.0.s8 %v1748
          %v1750 = vperm.slane %v1742, %v1749
          %v1751 = vrot.slane %v1738, 4
          %v1752 = vsel %vm1603, %v1751, %v1726
          %v1753 = vrot.slane %v1726, 4
          %v1754 = vsel %vm1603, %v1738, %v1753
          %v1756 = vunpack.c.l.s4 1934713408
          %v1757 = vunpack.c.0.s8 %v1756
          %v1758 = vperm.slane %v1752, %v1757
          %v1760 = vunpack.c.l.s4 1934713408
          %v1761 = vunpack.c.0.s8 %v1760
          %v1762 = vperm.slane %v1754, %v1761
          %v1763 = vrot.slane %v1746, 4
          %v1764 = vsel %vm1603, 0.0, %v1763
          %v1765 = vrot.slane %v1750, 4
          %v1766 = vsel %vm1603, 0.0, %v1765
          %v1767 = vrot.slane %v1758, 4
          %v1768 = vsel %vm1603, 0.0, %v1767
          %v1769 = vrot.slane %v1762, 4
          %v1770 = vsel %vm1603, 0.0, %v1769
          %v1771 = vrot.slane %v1585, 4
          %v1772 = vsel %vm1603, %v1771, %v1490
          %v1773 = vrot.slane %v1490, 4
          %v1774 = vsel %vm1603, %v1585, %v1773
          %v1776 = vunpack.c.l.s4 1983009808
          %v1777 = vunpack.c.0.s8 %v1776
          %v1778 = vperm.slane %v1772, %v1777
          %v1780 = vunpack.c.l.s4 1983009808
          %v1781 = vunpack.c.0.s8 %v1780
          %v1782 = vperm.slane %v1774, %v1781
          %v1783 = vrot.slane %v1597, 4
          %v1784 = vsel %vm1603, %v1783, %v1573
          %v1785 = vrot.slane %v1573, 4
          %v1786 = vsel %vm1603, %v1597, %v1785
          %v1788 = vunpack.c.l.s4 1983009808
          %v1789 = vunpack.c.0.s8 %v1788
          %v1790 = vperm.slane %v1784, %v1789
          %v1792 = vunpack.c.l.s4 1983009808
          %v1793 = vunpack.c.0.s8 %v1792
          %v1794 = vperm.slane %v1786, %v1793
          %v1795 = vrot.slane %v1790, 4
          %v1796 = vsel %vm1603, %v1795, %v1778
          %v1797 = vrot.slane %v1778, 4
          %v1798 = vsel %vm1603, %v1790, %v1797
          %v1800 = vunpack.c.l.s4 1934713408
          %v1801 = vunpack.c.0.s8 %v1800
          %v1802 = vperm.slane %v1796, %v1801
          %v1804 = vunpack.c.l.s4 1934713408
          %v1805 = vunpack.c.0.s8 %v1804
          %v1806 = vperm.slane %v1798, %v1805
          %v1807 = vrot.slane %v1794, 4
          %v1808 = vsel %vm1603, %v1807, %v1782
          %v1809 = vrot.slane %v1782, 4
          %v1810 = vsel %vm1603, %v1794, %v1809
          %v1812 = vunpack.c.l.s4 1934713408
          %v1813 = vunpack.c.0.s8 %v1812
          %v1814 = vperm.slane %v1808, %v1813
          %v1816 = vunpack.c.l.s4 1934713408
          %v1817 = vunpack.c.0.s8 %v1816
          %v1818 = vperm.slane %v1810, %v1817
          %v1819 = vrot.slane %v1802, 4
          %v1820 = vsel %vm1603, 0.0, %v1819
          %v1821 = vrot.slane %v1806, 4
          %v1822 = vsel %vm1603, 0.0, %v1821
          %v1823 = vrot.slane %v1814, 4
          %v1824 = vsel %vm1603, 0.0, %v1823
          %v1825 = vrot.slane %v1818, 4
          %v1826 = vsel %vm1603, 0.0, %v1825
          %v1827 = vsel %vm1603, %v1653, %v1634
          %v1829 = vunpack.c.l.s4 1983009808
          %v1830 = vunpack.c.0.s8 %v1829
          %v1831 = vperm.slane %v1827, %v1830
          %v1832 = vrot.slane %v1654, 4
          %v1833 = vsel %vm1603, %v1832, %v1652
          %v1835 = vunpack.c.l.s4 1983009808
          %v1836 = vunpack.c.0.s8 %v1835
          %v1837 = vperm.slane %v1833, %v1836
          %v1838 = vsel %vm1603, %v1657, %v1646
          %v1840 = vunpack.c.l.s4 1983009808
          %v1841 = vunpack.c.0.s8 %v1840
          %v1842 = vperm.slane %v1838, %v1841
          %v1843 = vrot.slane %v1658, 4
          %v1844 = vsel %vm1603, %v1843, %v1656
          %v1846 = vunpack.c.l.s4 1983009808
          %v1847 = vunpack.c.0.s8 %v1846
          %v1848 = vperm.slane %v1844, %v1847
          %v1849 = vrot.slane %v1837, 4
          %v1850 = vsel %vm1603, %v1849, %v1831
          %v1851 = vrot.slane %v1831, 4
          %v1852 = vsel %vm1603, %v1837, %v1851
          %v1854 = vunpack.c.l.s4 1934713408
          %v1855 = vunpack.c.0.s8 %v1854
          %v1856 = vperm.slane %v1850, %v1855
          %v1858 = vunpack.c.l.s4 1934713408
          %v1859 = vunpack.c.0.s8 %v1858
          %v1860 = vperm.slane %v1852, %v1859
          %v1861 = vrot.slane %v1848, 4
          %v1862 = vsel %vm1603, %v1861, %v1842
          %v1863 = vrot.slane %v1842, 4
          %v1864 = vsel %vm1603, %v1848, %v1863
          %v1866 = vunpack.c.l.s4 1934713408
          %v1867 = vunpack.c.0.s8 %v1866
          %v1868 = vperm.slane %v1862, %v1867
          %v1870 = vunpack.c.l.s4 1934713408
          %v1871 = vunpack.c.0.s8 %v1870
          %v1872 = vperm.slane %v1864, %v1871
          %v1873 = vrot.slane %v1868, 4
          %v1874 = vsel %vm1603, %v1873, %v1856
          %v1875 = vrot.slane %v1856, 4
          %v1876 = vsel %vm1603, %v1868, %v1875
          %v1877 = vrot.slane %v1872, 4
          %v1878 = vsel %vm1603, %v1877, %v1860
          %v1879 = vrot.slane %v1860, 4
          %v1880 = vsel %vm1603, %v1872, %v1879
          %v1881 = vsel %vm1603, %v1709, %v1690
          %v1883 = vunpack.c.l.s4 1983009808
          %v1884 = vunpack.c.0.s8 %v1883
          %v1885 = vperm.slane %v1881, %v1884
          %v1886 = vrot.slane %v1710, 4
          %v1887 = vsel %vm1603, %v1886, %v1708
          %v1889 = vunpack.c.l.s4 1983009808
          %v1890 = vunpack.c.0.s8 %v1889
          %v1891 = vperm.slane %v1887, %v1890
          %v1892 = vsel %vm1603, %v1713, %v1702
          %v1894 = vunpack.c.l.s4 1983009808
          %v1895 = vunpack.c.0.s8 %v1894
          %v1896 = vperm.slane %v1892, %v1895
          %v1897 = vrot.slane %v1714, 4
          %v1898 = vsel %vm1603, %v1897, %v1712
          %v1900 = vunpack.c.l.s4 1983009808
          %v1901 = vunpack.c.0.s8 %v1900
          %v1902 = vperm.slane %v1898, %v1901
          %v1903 = vrot.slane %v1891, 4
          %v1904 = vsel %vm1603, %v1903, %v1885
          %v1905 = vrot.slane %v1885, 4
          %v1906 = vsel %vm1603, %v1891, %v1905
          %v1908 = vunpack.c.l.s4 1934713408
          %v1909 = vunpack.c.0.s8 %v1908
          %v1910 = vperm.slane %v1904, %v1909
          %v1912 = vunpack.c.l.s4 1934713408
          %v1913 = vunpack.c.0.s8 %v1912
          %v1914 = vperm.slane %v1906, %v1913
          %v1915 = vrot.slane %v1902, 4
          %v1916 = vsel %vm1603, %v1915, %v1896
          %v1917 = vrot.slane %v1896, 4
          %v1918 = vsel %vm1603, %v1902, %v1917
          %v1920 = vunpack.c.l.s4 1934713408
          %v1921 = vunpack.c.0.s8 %v1920
          %v1922 = vperm.slane %v1916, %v1921
          %v1924 = vunpack.c.l.s4 1934713408
          %v1925 = vunpack.c.0.s8 %v1924
          %v1926 = vperm.slane %v1918, %v1925
          %v1927 = vrot.slane %v1922, 4
          %v1928 = vsel %vm1603, %v1927, %v1910
          %v1929 = vrot.slane %v1910, 4
          %v1930 = vsel %vm1603, %v1922, %v1929
          %v1931 = vrot.slane %v1926, 4
          %v1932 = vsel %vm1603, %v1931, %v1914
          %v1933 = vrot.slane %v1914, 4
          %v1934 = vsel %vm1603, %v1926, %v1933
          %v1935 = vsel %vm1603, %v1765, %v1746
          %v1937 = vunpack.c.l.s4 1983009808
          %v1938 = vunpack.c.0.s8 %v1937
          %v1939 = vperm.slane %v1935, %v1938
          %v1940 = vrot.slane %v1766, 4
          %v1941 = vsel %vm1603, %v1940, %v1764
          %v1943 = vunpack.c.l.s4 1983009808
          %v1944 = vunpack.c.0.s8 %v1943
          %v1945 = vperm.slane %v1941, %v1944
          %v1946 = vsel %vm1603, %v1769, %v1758
          %v1948 = vunpack.c.l.s4 1983009808
          %v1949 = vunpack.c.0.s8 %v1948
          %v1950 = vperm.slane %v1946, %v1949
          %v1951 = vrot.slane %v1770, 4
          %v1952 = vsel %vm1603, %v1951, %v1768
          %v1954 = vunpack.c.l.s4 1983009808
          %v1955 = vunpack.c.0.s8 %v1954
          %v1956 = vperm.slane %v1952, %v1955
          %v1957 = vrot.slane %v1945, 4
          %v1958 = vsel %vm1603, %v1957, %v1939
          %v1959 = vrot.slane %v1939, 4
          %v1960 = vsel %vm1603, %v1945, %v1959
          %v1962 = vunpack.c.l.s4 1934713408
          %v1963 = vunpack.c.0.s8 %v1962
          %v1964 = vperm.slane %v1958, %v1963
          %v1966 = vunpack.c.l.s4 1934713408
          %v1967 = vunpack.c.0.s8 %v1966
          %v1968 = vperm.slane %v1960, %v1967
          %v1969 = vrot.slane %v1956, 4
          %v1970 = vsel %vm1603, %v1969, %v1950
          %v1971 = vrot.slane %v1950, 4
          %v1972 = vsel %vm1603, %v1956, %v1971
          %v1974 = vunpack.c.l.s4 1934713408
          %v1975 = vunpack.c.0.s8 %v1974
          %v1976 = vperm.slane %v1970, %v1975
          %v1978 = vunpack.c.l.s4 1934713408
          %v1979 = vunpack.c.0.s8 %v1978
          %v1980 = vperm.slane %v1972, %v1979
          %v1981 = vrot.slane %v1976, 4
          %v1982 = vsel %vm1603, %v1981, %v1964
          %v1983 = vrot.slane %v1964, 4
          %v1984 = vsel %vm1603, %v1976, %v1983
          %v1985 = vrot.slane %v1980, 4
          %v1986 = vsel %vm1603, %v1985, %v1968
          %v1987 = vrot.slane %v1968, 4
          %v1988 = vsel %vm1603, %v1980, %v1987
          %v1989 = vsel %vm1603, %v1821, %v1802
          %v1991 = vunpack.c.l.s4 1983009808
          %v1992 = vunpack.c.0.s8 %v1991
          %v1993 = vperm.slane %v1989, %v1992
          %v1994 = vrot.slane %v1822, 4
          %v1995 = vsel %vm1603, %v1994, %v1820
          %v1997 = vunpack.c.l.s4 1983009808
          %v1998 = vunpack.c.0.s8 %v1997
          %v1999 = vperm.slane %v1995, %v1998
          %v2000 = vsel %vm1603, %v1825, %v1814
          %v2002 = vunpack.c.l.s4 1983009808
          %v2003 = vunpack.c.0.s8 %v2002
          %v2004 = vperm.slane %v2000, %v2003
          %v2005 = vrot.slane %v1826, 4
          %v2006 = vsel %vm1603, %v2005, %v1824
          %v2008 = vunpack.c.l.s4 1983009808
          %v2009 = vunpack.c.0.s8 %v2008
          %v2010 = vperm.slane %v2006, %v2009
          %v2011 = vrot.slane %v1999, 4
          %v2012 = vsel %vm1603, %v2011, %v1993
          %v2013 = vrot.slane %v1993, 4
          %v2014 = vsel %vm1603, %v1999, %v2013
          %v2016 = vunpack.c.l.s4 1934713408
          %v2017 = vunpack.c.0.s8 %v2016
          %v2018 = vperm.slane %v2012, %v2017
          %v2020 = vunpack.c.l.s4 1934713408
          %v2021 = vunpack.c.0.s8 %v2020
          %v2022 = vperm.slane %v2014, %v2021
          %v2023 = vrot.slane %v2010, 4
          %v2024 = vsel %vm1603, %v2023, %v2004
          %v2025 = vrot.slane %v2004, 4
          %v2026 = vsel %vm1603, %v2010, %v2025
          %v2028 = vunpack.c.l.s4 1934713408
          %v2029 = vunpack.c.0.s8 %v2028
          %v2030 = vperm.slane %v2024, %v2029
          %v2032 = vunpack.c.l.s4 1934713408
          %v2033 = vunpack.c.0.s8 %v2032
          %v2034 = vperm.slane %v2026, %v2033
          %v2035 = vrot.slane %v2030, 4
          %v2036 = vsel %vm1603, %v2035, %v2018
          %v2037 = vrot.slane %v2018, 4
          %v2038 = vsel %vm1603, %v2030, %v2037
          %v2039 = vrot.slane %v2034, 4
          %v2040 = vsel %vm1603, %v2039, %v2022
          %v2041 = vrot.slane %v2022, 4
          %v2042 = vsel %vm1603, %v2034, %v2041
          %v2043 = vpack.c.bf16 %v1874, %v1874
          %v2044 = vpack.c.bf16 %v1928, %v1928
          %v2045 = vpack.c.bf16 %v1982, %v1982
          %v2046 = vpack.c.bf16 %v2036, %v2036
          %v2047 = vpack.c.bf16 %v1876, %v1876
          %v2048 = vpack.c.bf16 %v1930, %v1930
          %v2049 = vpack.c.bf16 %v1984, %v1984
          %v2050 = vpack.c.bf16 %v2038, %v2038
          %v2051 = vpack.c.bf16 %v1878, %v1878
          %v2052 = vpack.c.bf16 %v1932, %v1932
          %v2053 = vpack.c.bf16 %v1986, %v1986
          %v2054 = vpack.c.bf16 %v2040, %v2040
          %v2055 = vpack.c.bf16 %v1880, %v1880
          %v2056 = vpack.c.bf16 %v1934, %v1934
          %v2057 = vpack.c.bf16 %v1988, %v1988
          %v2058 = vpack.c.bf16 %v2042, %v2042
          %2063 = vrot.lane.b32.xlu0 %v1553, 96
          %v2064 = vpop.permute.xlu0 %2063
          %2065 = vrot.lane.b32.xlu0 %v1555, 96
          %v2066 = vpop.permute.xlu0 %2065
          %2067 = vrot.lane.b32.xlu0 %v1558, 96
          %v2068 = vpop.permute.xlu0 %2067
          %2069 = vrot.lane.b32.xlu0 %v1560, 96
          %v2070 = vpop.permute.xlu0 %2069
          %2075 = vrot.lane.b32.xlu0 %v1553, 64
          %v2076 = vpop.permute.xlu0 %2075
          %2077 = vrot.lane.b32.xlu0 %v1555, 64
          %v2078 = vpop.permute.xlu0 %2077
          %2079 = vrot.lane.b32.xlu0 %v1558, 64
          %v2080 = vpop.permute.xlu0 %2079
          %2081 = vrot.lane.b32.xlu0 %v1560, 64
          %v2082 = vpop.permute.xlu0 %2081
          %2087 = vrot.lane.b32.xlu0 %v1553, 32
          %v2088 = vpop.permute.xlu0 %2087
          %2089 = vrot.lane.b32.xlu0 %v1555, 32
          %v2090 = vpop.permute.xlu0 %2089
          %2091 = vrot.lane.b32.xlu0 %v1558, 32
          %v2092 = vpop.permute.xlu0 %2091
          %2093 = vrot.lane.b32.xlu0 %v1560, 32
          %v2094 = vpop.permute.xlu0 %2093
          %v2099 = vrot.slane %v2076, 4
          %v2100 = vsel %vm1603, %v2099, %v1553
          %v2101 = vrot.slane %v1553, 4
          %v2102 = vsel %vm1603, %v2076, %v2101
          %v2104 = vunpack.c.l.s4 1983009808
          %v2105 = vunpack.c.0.s8 %v2104
          %v2106 = vperm.slane %v2100, %v2105
          %v2108 = vunpack.c.l.s4 1983009808
          %v2109 = vunpack.c.0.s8 %v2108
          %v2110 = vperm.slane %v2102, %v2109
          %v2111 = vrot.slane %v2088, 4
          %v2112 = vsel %vm1603, %v2111, %v2064
          %v2113 = vrot.slane %v2064, 4
          %v2114 = vsel %vm1603, %v2088, %v2113
          %v2116 = vunpack.c.l.s4 1983009808
          %v2117 = vunpack.c.0.s8 %v2116
          %v2118 = vperm.slane %v2112, %v2117
          %v2120 = vunpack.c.l.s4 1983009808
          %v2121 = vunpack.c.0.s8 %v2120
          %v2122 = vperm.slane %v2114, %v2121
          %v2123 = vrot.slane %v2118, 4
          %v2124 = vsel %vm1603, %v2123, %v2106
          %v2125 = vrot.slane %v2106, 4
          %v2126 = vsel %vm1603, %v2118, %v2125
          %v2128 = vunpack.c.l.s4 1934713408
          %v2129 = vunpack.c.0.s8 %v2128
          %v2130 = vperm.slane %v2124, %v2129
          %v2132 = vunpack.c.l.s4 1934713408
          %v2133 = vunpack.c.0.s8 %v2132
          %v2134 = vperm.slane %v2126, %v2133
          %v2135 = vrot.slane %v2122, 4
          %v2136 = vsel %vm1603, %v2135, %v2110
          %v2137 = vrot.slane %v2110, 4
          %v2138 = vsel %vm1603, %v2122, %v2137
          %v2140 = vunpack.c.l.s4 1934713408
          %v2141 = vunpack.c.0.s8 %v2140
          %v2142 = vperm.slane %v2136, %v2141
          %v2144 = vunpack.c.l.s4 1934713408
          %v2145 = vunpack.c.0.s8 %v2144
          %v2146 = vperm.slane %v2138, %v2145
          %v2147 = vrot.slane %v2130, 4
          %v2148 = vsel %vm1603, 0.0, %v2147
          %v2149 = vrot.slane %v2134, 4
          %v2150 = vsel %vm1603, 0.0, %v2149
          %v2151 = vrot.slane %v2142, 4
          %v2152 = vsel %vm1603, 0.0, %v2151
          %v2153 = vrot.slane %v2146, 4
          %v2154 = vsel %vm1603, 0.0, %v2153
          %v2155 = vrot.slane %v2078, 4
          %v2156 = vsel %vm1603, %v2155, %v1555
          %v2157 = vrot.slane %v1555, 4
          %v2158 = vsel %vm1603, %v2078, %v2157
          %v2160 = vunpack.c.l.s4 1983009808
          %v2161 = vunpack.c.0.s8 %v2160
          %v2162 = vperm.slane %v2156, %v2161
          %v2164 = vunpack.c.l.s4 1983009808
          %v2165 = vunpack.c.0.s8 %v2164
          %v2166 = vperm.slane %v2158, %v2165
          %v2167 = vrot.slane %v2090, 4
          %v2168 = vsel %vm1603, %v2167, %v2066
          %v2169 = vrot.slane %v2066, 4
          %v2170 = vsel %vm1603, %v2090, %v2169
          %v2172 = vunpack.c.l.s4 1983009808
          %v2173 = vunpack.c.0.s8 %v2172
          %v2174 = vperm.slane %v2168, %v2173
          %v2176 = vunpack.c.l.s4 1983009808
          %v2177 = vunpack.c.0.s8 %v2176
          %v2178 = vperm.slane %v2170, %v2177
          %v2179 = vrot.slane %v2174, 4
          %v2180 = vsel %vm1603, %v2179, %v2162
          %v2181 = vrot.slane %v2162, 4
          %v2182 = vsel %vm1603, %v2174, %v2181
          %v2184 = vunpack.c.l.s4 1934713408
          %v2185 = vunpack.c.0.s8 %v2184
          %v2186 = vperm.slane %v2180, %v2185
          %v2188 = vunpack.c.l.s4 1934713408
          %v2189 = vunpack.c.0.s8 %v2188
          %v2190 = vperm.slane %v2182, %v2189
          %v2191 = vrot.slane %v2178, 4
          %v2192 = vsel %vm1603, %v2191, %v2166
          %v2193 = vrot.slane %v2166, 4
          %v2194 = vsel %vm1603, %v2178, %v2193
          %v2196 = vunpack.c.l.s4 1934713408
          %v2197 = vunpack.c.0.s8 %v2196
          %v2198 = vperm.slane %v2192, %v2197
          %v2200 = vunpack.c.l.s4 1934713408
          %v2201 = vunpack.c.0.s8 %v2200
          %v2202 = vperm.slane %v2194, %v2201
          %v2203 = vrot.slane %v2186, 4
          %v2204 = vsel %vm1603, 0.0, %v2203
          %v2205 = vrot.slane %v2190, 4
          %v2206 = vsel %vm1603, 0.0, %v2205
          %v2207 = vrot.slane %v2198, 4
          %v2208 = vsel %vm1603, 0.0, %v2207
          %v2209 = vrot.slane %v2202, 4
          %v2210 = vsel %vm1603, 0.0, %v2209
          %v2211 = vrot.slane %v2080, 4
          %v2212 = vsel %vm1603, %v2211, %v1558
          %v2213 = vrot.slane %v1558, 4
          %v2214 = vsel %vm1603, %v2080, %v2213
          %v2216 = vunpack.c.l.s4 1983009808
          %v2217 = vunpack.c.0.s8 %v2216
          %v2218 = vperm.slane %v2212, %v2217
          %v2220 = vunpack.c.l.s4 1983009808
          %v2221 = vunpack.c.0.s8 %v2220
          %v2222 = vperm.slane %v2214, %v2221
          %v2223 = vrot.slane %v2092, 4
          %v2224 = vsel %vm1603, %v2223, %v2068
          %v2225 = vrot.slane %v2068, 4
          %v2226 = vsel %vm1603, %v2092, %v2225
          %v2228 = vunpack.c.l.s4 1983009808
          %v2229 = vunpack.c.0.s8 %v2228
          %v2230 = vperm.slane %v2224, %v2229
          %v2232 = vunpack.c.l.s4 1983009808
          %v2233 = vunpack.c.0.s8 %v2232
          %v2234 = vperm.slane %v2226, %v2233
          %v2235 = vrot.slane %v2230, 4
          %v2236 = vsel %vm1603, %v2235, %v2218
          %v2237 = vrot.slane %v2218, 4
          %v2238 = vsel %vm1603, %v2230, %v2237
          %v2240 = vunpack.c.l.s4 1934713408
          %v2241 = vunpack.c.0.s8 %v2240
          %v2242 = vperm.slane %v2236, %v2241
          %v2244 = vunpack.c.l.s4 1934713408
          %v2245 = vunpack.c.0.s8 %v2244
          %v2246 = vperm.slane %v2238, %v2245
          %v2247 = vrot.slane %v2234, 4
          %v2248 = vsel %vm1603, %v2247, %v2222
          %v2249 = vrot.slane %v2222, 4
          %v2250 = vsel %vm1603, %v2234, %v2249
          %v2252 = vunpack.c.l.s4 1934713408
          %v2253 = vunpack.c.0.s8 %v2252
          %v2254 = vperm.slane %v2248, %v2253
          %v2256 = vunpack.c.l.s4 1934713408
          %v2257 = vunpack.c.0.s8 %v2256
          %v2258 = vperm.slane %v2250, %v2257
          %v2259 = vrot.slane %v2242, 4
          %v2260 = vsel %vm1603, 0.0, %v2259
          %v2261 = vrot.slane %v2246, 4
          %v2262 = vsel %vm1603, 0.0, %v2261
          %v2263 = vrot.slane %v2254, 4
          %v2264 = vsel %vm1603, 0.0, %v2263
          %v2265 = vrot.slane %v2258, 4
          %v2266 = vsel %vm1603, 0.0, %v2265
          %v2267 = vrot.slane %v2082, 4
          %v2268 = vsel %vm1603, %v2267, %v1560
          %v2269 = vrot.slane %v1560, 4
          %v2270 = vsel %vm1603, %v2082, %v2269
          %v2272 = vunpack.c.l.s4 1983009808
          %v2273 = vunpack.c.0.s8 %v2272
          %v2274 = vperm.slane %v2268, %v2273
          %v2276 = vunpack.c.l.s4 1983009808
          %v2277 = vunpack.c.0.s8 %v2276
          %v2278 = vperm.slane %v2270, %v2277
          %v2279 = vrot.slane %v2094, 4
          %v2280 = vsel %vm1603, %v2279, %v2070
          %v2281 = vrot.slane %v2070, 4
          %v2282 = vsel %vm1603, %v2094, %v2281
          %v2284 = vunpack.c.l.s4 1983009808
          %v2285 = vunpack.c.0.s8 %v2284
          %v2286 = vperm.slane %v2280, %v2285
          %v2288 = vunpack.c.l.s4 1983009808
          %v2289 = vunpack.c.0.s8 %v2288
          %v2290 = vperm.slane %v2282, %v2289
          %v2291 = vrot.slane %v2286, 4
          %v2292 = vsel %vm1603, %v2291, %v2274
          %v2293 = vrot.slane %v2274, 4
          %v2294 = vsel %vm1603, %v2286, %v2293
          %v2296 = vunpack.c.l.s4 1934713408
          %v2297 = vunpack.c.0.s8 %v2296
          %v2298 = vperm.slane %v2292, %v2297
          %v2300 = vunpack.c.l.s4 1934713408
          %v2301 = vunpack.c.0.s8 %v2300
          %v2302 = vperm.slane %v2294, %v2301
          %v2303 = vrot.slane %v2290, 4
          %v2304 = vsel %vm1603, %v2303, %v2278
          %v2305 = vrot.slane %v2278, 4
          %v2306 = vsel %vm1603, %v2290, %v2305
          %v2308 = vunpack.c.l.s4 1934713408
          %v2309 = vunpack.c.0.s8 %v2308
          %v2310 = vperm.slane %v2304, %v2309
          %v2312 = vunpack.c.l.s4 1934713408
          %v2313 = vunpack.c.0.s8 %v2312
          %v2314 = vperm.slane %v2306, %v2313
          %v2315 = vrot.slane %v2298, 4
          %v2316 = vsel %vm1603, 0.0, %v2315
          %v2317 = vrot.slane %v2302, 4
          %v2318 = vsel %vm1603, 0.0, %v2317
          %v2319 = vrot.slane %v2310, 4
          %v2320 = vsel %vm1603, 0.0, %v2319
          %v2321 = vrot.slane %v2314, 4
          %v2322 = vsel %vm1603, 0.0, %v2321
          %v2323 = vsel %vm1603, %v2149, %v2130
          %v2325 = vunpack.c.l.s4 1983009808
          %v2326 = vunpack.c.0.s8 %v2325
          %v2327 = vperm.slane %v2323, %v2326
          %v2328 = vrot.slane %v2150, 4
          %v2329 = vsel %vm1603, %v2328, %v2148
          %v2331 = vunpack.c.l.s4 1983009808
          %v2332 = vunpack.c.0.s8 %v2331
          %v2333 = vperm.slane %v2329, %v2332
          %v2334 = vsel %vm1603, %v2153, %v2142
          %v2336 = vunpack.c.l.s4 1983009808
          %v2337 = vunpack.c.0.s8 %v2336
          %v2338 = vperm.slane %v2334, %v2337
          %v2339 = vrot.slane %v2154, 4
          %v2340 = vsel %vm1603, %v2339, %v2152
          %v2342 = vunpack.c.l.s4 1983009808
          %v2343 = vunpack.c.0.s8 %v2342
          %v2344 = vperm.slane %v2340, %v2343
          %v2345 = vrot.slane %v2333, 4
          %v2346 = vsel %vm1603, %v2345, %v2327
          %v2347 = vrot.slane %v2327, 4
          %v2348 = vsel %vm1603, %v2333, %v2347
          %v2350 = vunpack.c.l.s4 1934713408
          %v2351 = vunpack.c.0.s8 %v2350
          %v2352 = vperm.slane %v2346, %v2351
          %v2354 = vunpack.c.l.s4 1934713408
          %v2355 = vunpack.c.0.s8 %v2354
          %v2356 = vperm.slane %v2348, %v2355
          %v2357 = vrot.slane %v2344, 4
          %v2358 = vsel %vm1603, %v2357, %v2338
          %v2359 = vrot.slane %v2338, 4
          %v2360 = vsel %vm1603, %v2344, %v2359
          %v2362 = vunpack.c.l.s4 1934713408
          %v2363 = vunpack.c.0.s8 %v2362
          %v2364 = vperm.slane %v2358, %v2363
          %v2366 = vunpack.c.l.s4 1934713408
          %v2367 = vunpack.c.0.s8 %v2366
          %v2368 = vperm.slane %v2360, %v2367
          %v2369 = vrot.slane %v2364, 4
          %v2370 = vsel %vm1603, %v2369, %v2352
          %v2371 = vrot.slane %v2352, 4
          %v2372 = vsel %vm1603, %v2364, %v2371
          %v2373 = vrot.slane %v2368, 4
          %v2374 = vsel %vm1603, %v2373, %v2356
          %v2375 = vrot.slane %v2356, 4
          %v2376 = vsel %vm1603, %v2368, %v2375
          %v2377 = vsel %vm1603, %v2205, %v2186
          %v2379 = vunpack.c.l.s4 1983009808
          %v2380 = vunpack.c.0.s8 %v2379
          %v2381 = vperm.slane %v2377, %v2380
          %v2382 = vrot.slane %v2206, 4
          %v2383 = vsel %vm1603, %v2382, %v2204
          %v2385 = vunpack.c.l.s4 1983009808
          %v2386 = vunpack.c.0.s8 %v2385
          %v2387 = vperm.slane %v2383, %v2386
          %v2388 = vsel %vm1603, %v2209, %v2198
          %v2390 = vunpack.c.l.s4 1983009808
          %v2391 = vunpack.c.0.s8 %v2390
          %v2392 = vperm.slane %v2388, %v2391
          %v2393 = vrot.slane %v2210, 4
          %v2394 = vsel %vm1603, %v2393, %v2208
          %v2396 = vunpack.c.l.s4 1983009808
          %v2397 = vunpack.c.0.s8 %v2396
          %v2398 = vperm.slane %v2394, %v2397
          %v2399 = vrot.slane %v2387, 4
          %v2400 = vsel %vm1603, %v2399, %v2381
          %v2401 = vrot.slane %v2381, 4
          %v2402 = vsel %vm1603, %v2387, %v2401
          %v2404 = vunpack.c.l.s4 1934713408
          %v2405 = vunpack.c.0.s8 %v2404
          %v2406 = vperm.slane %v2400, %v2405
          %v2408 = vunpack.c.l.s4 1934713408
          %v2409 = vunpack.c.0.s8 %v2408
          %v2410 = vperm.slane %v2402, %v2409
          %v2411 = vrot.slane %v2398, 4
          %v2412 = vsel %vm1603, %v2411, %v2392
          %v2413 = vrot.slane %v2392, 4
          %v2414 = vsel %vm1603, %v2398, %v2413
          %v2416 = vunpack.c.l.s4 1934713408
          %v2417 = vunpack.c.0.s8 %v2416
          %v2418 = vperm.slane %v2412, %v2417
          %v2420 = vunpack.c.l.s4 1934713408
          %v2421 = vunpack.c.0.s8 %v2420
          %v2422 = vperm.slane %v2414, %v2421
          %v2423 = vrot.slane %v2418, 4
          %v2424 = vsel %vm1603, %v2423, %v2406
          %v2425 = vrot.slane %v2406, 4
          %v2426 = vsel %vm1603, %v2418, %v2425
          %v2427 = vrot.slane %v2422, 4
          %v2428 = vsel %vm1603, %v2427, %v2410
          %v2429 = vrot.slane %v2410, 4
          %v2430 = vsel %vm1603, %v2422, %v2429
          %v2431 = vsel %vm1603, %v2261, %v2242
          %v2433 = vunpack.c.l.s4 1983009808
          %v2434 = vunpack.c.0.s8 %v2433
          %v2435 = vperm.slane %v2431, %v2434
          %v2436 = vrot.slane %v2262, 4
          %v2437 = vsel %vm1603, %v2436, %v2260
          %v2439 = vunpack.c.l.s4 1983009808
          %v2440 = vunpack.c.0.s8 %v2439
          %v2441 = vperm.slane %v2437, %v2440
          %v2442 = vsel %vm1603, %v2265, %v2254
          %v2444 = vunpack.c.l.s4 1983009808
          %v2445 = vunpack.c.0.s8 %v2444
          %v2446 = vperm.slane %v2442, %v2445
          %v2447 = vrot.slane %v2266, 4
          %v2448 = vsel %vm1603, %v2447, %v2264
          %v2450 = vunpack.c.l.s4 1983009808
          %v2451 = vunpack.c.0.s8 %v2450
          %v2452 = vperm.slane %v2448, %v2451
          %v2453 = vrot.slane %v2441, 4
          %v2454 = vsel %vm1603, %v2453, %v2435
          %v2455 = vrot.slane %v2435, 4
          %v2456 = vsel %vm1603, %v2441, %v2455
          %v2458 = vunpack.c.l.s4 1934713408
          %v2459 = vunpack.c.0.s8 %v2458
          %v2460 = vperm.slane %v2454, %v2459
          %v2462 = vunpack.c.l.s4 1934713408
          %v2463 = vunpack.c.0.s8 %v2462
          %v2464 = vperm.slane %v2456, %v2463
          %v2465 = vrot.slane %v2452, 4
          %v2466 = vsel %vm1603, %v2465, %v2446
          %v2467 = vrot.slane %v2446, 4
          %v2468 = vsel %vm1603, %v2452, %v2467
          %v2470 = vunpack.c.l.s4 1934713408
          %v2471 = vunpack.c.0.s8 %v2470
          %v2472 = vperm.slane %v2466, %v2471
          %v2474 = vunpack.c.l.s4 1934713408
          %v2475 = vunpack.c.0.s8 %v2474
          %v2476 = vperm.slane %v2468, %v2475
          %v2477 = vrot.slane %v2472, 4
          %v2478 = vsel %vm1603, %v2477, %v2460
          %v2479 = vrot.slane %v2460, 4
          %v2480 = vsel %vm1603, %v2472, %v2479
          %v2481 = vrot.slane %v2476, 4
          %v2482 = vsel %vm1603, %v2481, %v2464
          %v2483 = vrot.slane %v2464, 4
          %v2484 = vsel %vm1603, %v2476, %v2483
          %v2485 = vsel %vm1603, %v2317, %v2298
          %v2487 = vunpack.c.l.s4 1983009808
          %v2488 = vunpack.c.0.s8 %v2487
          %v2489 = vperm.slane %v2485, %v2488
          %v2490 = vrot.slane %v2318, 4
          %v2491 = vsel %vm1603, %v2490, %v2316
          %v2493 = vunpack.c.l.s4 1983009808
          %v2494 = vunpack.c.0.s8 %v2493
          %v2495 = vperm.slane %v2491, %v2494
          %v2496 = vsel %vm1603, %v2321, %v2310
          %v2498 = vunpack.c.l.s4 1983009808
          %v2499 = vunpack.c.0.s8 %v2498
          %v2500 = vperm.slane %v2496, %v2499
          %v2501 = vrot.slane %v2322, 4
          %v2502 = vsel %vm1603, %v2501, %v2320
          %v2504 = vunpack.c.l.s4 1983009808
          %v2505 = vunpack.c.0.s8 %v2504
          %v2506 = vperm.slane %v2502, %v2505
          %v2507 = vrot.slane %v2495, 4
          %v2508 = vsel %vm1603, %v2507, %v2489
          %v2509 = vrot.slane %v2489, 4
          %v2510 = vsel %vm1603, %v2495, %v2509
          %v2512 = vunpack.c.l.s4 1934713408
          %v2513 = vunpack.c.0.s8 %v2512
          %v2514 = vperm.slane %v2508, %v2513
          %v2516 = vunpack.c.l.s4 1934713408
          %v2517 = vunpack.c.0.s8 %v2516
          %v2518 = vperm.slane %v2510, %v2517
          %v2519 = vrot.slane %v2506, 4
          %v2520 = vsel %vm1603, %v2519, %v2500
          %v2521 = vrot.slane %v2500, 4
          %v2522 = vsel %vm1603, %v2506, %v2521
          %v2524 = vunpack.c.l.s4 1934713408
          %v2525 = vunpack.c.0.s8 %v2524
          %v2526 = vperm.slane %v2520, %v2525
          %v2528 = vunpack.c.l.s4 1934713408
          %v2529 = vunpack.c.0.s8 %v2528
          %v2530 = vperm.slane %v2522, %v2529
          %v2531 = vrot.slane %v2526, 4
          %v2532 = vsel %vm1603, %v2531, %v2514
          %v2533 = vrot.slane %v2514, 4
          %v2534 = vsel %vm1603, %v2526, %v2533
          %v2535 = vrot.slane %v2530, 4
          %v2536 = vsel %vm1603, %v2535, %v2518
          %v2537 = vrot.slane %v2518, 4
          %v2538 = vsel %vm1603, %v2530, %v2537
          %v2539 = vpack.c.bf16 %v2370, %v2370
          %v2540 = vpack.c.bf16 %v2424, %v2424
          %v2541 = vpack.c.bf16 %v2478, %v2478
          %v2542 = vpack.c.bf16 %v2532, %v2532
          %v2543 = vpack.c.bf16 %v2372, %v2372
          %v2544 = vpack.c.bf16 %v2426, %v2426
          %v2545 = vpack.c.bf16 %v2480, %v2480
          %v2546 = vpack.c.bf16 %v2534, %v2534
          %v2547 = vpack.c.bf16 %v2374, %v2374
          %v2548 = vpack.c.bf16 %v2428, %v2428
          %v2549 = vpack.c.bf16 %v2482, %v2482
          %v2550 = vpack.c.bf16 %v2536, %v2536
          %v2551 = vpack.c.bf16 %v2376, %v2376
          %v2552 = vpack.c.bf16 %v2430, %v2430
          %v2553 = vpack.c.bf16 %v2484, %v2484
          %v2554 = vpack.c.bf16 %v2538, %v2538
          %vm2555 = vcmask 257024
          %2556 = vst.msk [vmem:[#allocation2] sm:$0xf] %vm2555, %v2043
          %2557 = vst.msk [vmem:[#allocation2 + $0x4] sm:$0xf] %vm2555, %v2044
          %2558 = vst.msk [vmem:[#allocation2 + $0x8] sm:$0xf] %vm2555, %v2045
          %2559 = vst.msk [vmem:[#allocation2 + $0xc] sm:$0xf] %vm2555, %v2046
          %2560 = vst.msk [vmem:[#allocation2 + $0x10] sm:$0xf] %vm2555, %v2047
          %2561 = vst.msk [vmem:[#allocation2 + $0x14] sm:$0xf] %vm2555, %v2048
          %2562 = vst.msk [vmem:[#allocation2 + $0x18] sm:$0xf] %vm2555, %v2049
          %2563 = vst.msk [vmem:[#allocation2 + $0x1c] sm:$0xf] %vm2555, %v2050
          %2564 = vst.msk [vmem:[#allocation2 + $0x20] sm:$0xf] %vm2555, %v2051
          %2565 = vst.msk [vmem:[#allocation2 + $0x24] sm:$0xf] %vm2555, %v2052
          %2566 = vst.msk [vmem:[#allocation2 + $0x28] sm:$0xf] %vm2555, %v2053
          %2567 = vst.msk [vmem:[#allocation2 + $0x2c] sm:$0xf] %vm2555, %v2054
          %2568 = vst.msk [vmem:[#allocation2 + $0x30] sm:$0xf] %vm2555, %v2055
          %2569 = vst.msk [vmem:[#allocation2 + $0x34] sm:$0xf] %vm2555, %v2056
          %2570 = vst.msk [vmem:[#allocation2 + $0x38] sm:$0xf] %vm2555, %v2057
          %2571 = vst.msk [vmem:[#allocation2 + $0x3c] sm:$0xf] %vm2555, %v2058
          %2572 = vst.msk [vmem:[#allocation3] sm:$0xf] %vm2555, %v2539
          %2573 = vst.msk [vmem:[#allocation3 + $0x4] sm:$0xf] %vm2555, %v2540
          %2574 = vst.msk [vmem:[#allocation3 + $0x8] sm:$0xf] %vm2555, %v2541
          %2575 = vst.msk [vmem:[#allocation3 + $0xc] sm:$0xf] %vm2555, %v2542
          %2576 = vst.msk [vmem:[#allocation3 + $0x10] sm:$0xf] %vm2555, %v2543
          %2577 = vst.msk [vmem:[#allocation3 + $0x14] sm:$0xf] %vm2555, %v2544
          %2578 = vst.msk [vmem:[#allocation3 + $0x18] sm:$0xf] %vm2555, %v2545
          %2579 = vst.msk [vmem:[#allocation3 + $0x1c] sm:$0xf] %vm2555, %v2546
          %2580 = vst.msk [vmem:[#allocation3 + $0x20] sm:$0xf] %vm2555, %v2547
          %2581 = vst.msk [vmem:[#allocation3 + $0x24] sm:$0xf] %vm2555, %v2548
          %2582 = vst.msk [vmem:[#allocation3 + $0x28] sm:$0xf] %vm2555, %v2549
          %2583 = vst.msk [vmem:[#allocation3 + $0x2c] sm:$0xf] %vm2555, %v2550
          %2584 = vst.msk [vmem:[#allocation3 + $0x30] sm:$0xf] %vm2555, %v2551
          %2585 = vst.msk [vmem:[#allocation3 + $0x34] sm:$0xf] %vm2555, %v2552
          %2586 = vst.msk [vmem:[#allocation3 + $0x38] sm:$0xf] %vm2555, %v2553
          %2587 = vst.msk [vmem:[#allocation3 + $0x3c] sm:$0xf] %vm2555, %v2554
          %v2588 = vld [vmem:[%s1158] sm:$0xf]
          %v2589 = vld [vmem:[%s1158 + $0x4] sm:$0xf]
          %v2590 = vld [vmem:[#allocation30] sm:$0xf]
          %v2591 = vld [vmem:[#allocation30 + $0x4] sm:$0xf]
          %v2592 = vld [vmem:[#allocation30 + $0x8] sm:$0xf]
          %v2593 = vld [vmem:[#allocation30 + $0xc] sm:$0xf]
          %v2594 = vld [vmem:[#allocation30 + $0x10] sm:$0xf]
          %v2595 = vld [vmem:[#allocation30 + $0x14] sm:$0xf]
          %v2596 = vld [vmem:[#allocation30 + $0x18] sm:$0xf]
          %v2597 = vld [vmem:[#allocation30 + $0x1c] sm:$0xf]
          %v2598 = vld [vmem:[#allocation30 + $0x20] sm:$0xf]
          %v2599 = vld [vmem:[#allocation30 + $0x24] sm:$0xf]
          %v2600 = vld [vmem:[#allocation30 + $0x28] sm:$0xf]
          %v2601 = vld [vmem:[#allocation30 + $0x2c] sm:$0xf]
          %v2602 = vld [vmem:[#allocation30 + $0x30] sm:$0xf]
          %v2603 = vld [vmem:[#allocation30 + $0x34] sm:$0xf]
          %v2604 = vld [vmem:[#allocation30 + $0x38] sm:$0xf]
          %v2605 = vld [vmem:[#allocation30 + $0x3c] sm:$0xf]
          %v2606 = vld [vmem:[#allocation32] sm:$0x1]
          %v2607 = vld [vmem:[%s37] sm:$0xf]
          %v2608 = vld [vmem:[%s37 + $0x4] sm:$0xf]
          %v2609 = vld [vmem:[%s37 + $0x8] sm:$0xf]
          %v2610 = vld [vmem:[%s37 + $0xc] sm:$0xf]
          %v2611 = vld [vmem:[%s37 + $0x10] sm:$0xf]
          %v2612 = vld [vmem:[%s37 + $0x14] sm:$0xf]
          %v2613 = vld [vmem:[%s37 + $0x18] sm:$0xf]
          %v2614 = vld [vmem:[%s37 + $0x1c] sm:$0xf]
          %v2615 = vld [vmem:[%s37 + $0x20] sm:$0xf]
          %v2616 = vld [vmem:[%s37 + $0x24] sm:$0xf]
          %v2617 = vld [vmem:[%s37 + $0x28] sm:$0xf]
          %v2618 = vld [vmem:[%s37 + $0x2c] sm:$0xf]
          %v2619 = vld [vmem:[%s37 + $0x30] sm:$0xf]
          %v2620 = vld [vmem:[%s37 + $0x34] sm:$0xf]
          %v2621 = vld [vmem:[%s37 + $0x38] sm:$0xf]
          %v2622 = vld [vmem:[%s37 + $0x3c] sm:$0xf]
          %v2623 = vld [vmem:[#allocation33] sm:$0x1]
          %v2625 = vperm.slane %v2606, 0
          %v2629 = vunpack.c.l.b16 %v2588
          %v2630 = vunpack.c.l.b16 %v2589
          %v2631 = vpack.c.b16 %v2630, %v2629
          %v2649 = vunpack.c.l.b16 %v2590
          %v2650 = vunpack.c.l.b16 %v2591
          %v2651 = vunpack.c.l.b16 %v2592
          %v2652 = vunpack.c.l.b16 %v2593
          %v2653 = vunpack.c.l.b16 %v2594
          %v2654 = vunpack.c.l.b16 %v2595
          %v2655 = vunpack.c.l.b16 %v2596
          %v2656 = vunpack.c.l.b16 %v2597
          %v2657 = vunpack.c.l.b16 %v2598
          %v2658 = vunpack.c.l.b16 %v2599
          %v2659 = vunpack.c.l.b16 %v2600
          %v2660 = vunpack.c.l.b16 %v2601
          %v2661 = vunpack.c.l.b16 %v2602
          %v2662 = vunpack.c.l.b16 %v2603
          %v2663 = vunpack.c.l.b16 %v2604
          %v2664 = vunpack.c.l.b16 %v2605
          %v2665 = vpack.c.b16 %v2650, %v2649
          %v2666 = vpack.c.b16 %v2652, %v2651
          %v2667 = vpack.c.b16 %v2654, %v2653
          %v2668 = vpack.c.b16 %v2656, %v2655
          %v2669 = vpack.c.b16 %v2658, %v2657
          %v2670 = vpack.c.b16 %v2660, %v2659
          %v2671 = vpack.c.b16 %v2662, %v2661
          %v2672 = vpack.c.b16 %v2664, %v2663
          %2681 = vmatpush.bf16.msra.mxu0 %v2672
          %2682 = vmatpush.bf16.msra.mxu0 %v2671
          %2683 = vmatpush.bf16.msra.mxu0 %v2670
          %2684 = vmatpush.bf16.msra.mxu0 %v2669
          %2685 = vmatpush.bf16.msra.mxu0 %v2668
          %2686 = vmatpush.bf16.msra.mxu0 %v2667
          %2687 = vmatpush.bf16.msra.mxu0 %v2666
          %2688 = vmatpush.bf16.msra.mxu0 %v2665
          %2689 = vmatmul.bf16.gmra.mxu0 %v2631
          %v2690 = vpop.f32.mrf.mxu0
          %v2691 = vadd.f32 %v2625, %v2690
          %v2692 = vpop.f32.mrf.mxu0
          %v2693 = vadd.f32 %v2625, %v2692
          %2694 = vdwg.mxu0
          %v2696 = vperm.slane %v2623, 0
          %v2714 = vunpack.c.l.b16 %v2607
          %v2715 = vunpack.c.l.b16 %v2608
          %v2716 = vunpack.c.l.b16 %v2609
          %v2717 = vunpack.c.l.b16 %v2610
          %v2718 = vunpack.c.l.b16 %v2611
          %v2719 = vunpack.c.l.b16 %v2612
          %v2720 = vunpack.c.l.b16 %v2613
          %v2721 = vunpack.c.l.b16 %v2614
          %v2722 = vunpack.c.l.b16 %v2615
          %v2723 = vunpack.c.l.b16 %v2616
          %v2724 = vunpack.c.l.b16 %v2617
          %v2725 = vunpack.c.l.b16 %v2618
          %v2726 = vunpack.c.l.b16 %v2619
          %v2727 = vunpack.c.l.b16 %v2620
          %v2728 = vunpack.c.l.b16 %v2621
          %v2729 = vunpack.c.l.b16 %v2622
          %v2730 = vpack.c.b16 %v2715, %v2714
          %v2731 = vpack.c.b16 %v2717, %v2716
          %v2732 = vpack.c.b16 %v2719, %v2718
          %v2733 = vpack.c.b16 %v2721, %v2720
          %v2734 = vpack.c.b16 %v2723, %v2722
          %v2735 = vpack.c.b16 %v2725, %v2724
          %v2736 = vpack.c.b16 %v2727, %v2726
          %v2737 = vpack.c.b16 %v2729, %v2728
          %2746 = vmatpush.bf16.msra.mxu0 %v2737
          %2747 = vmatpush.bf16.msra.mxu0 %v2736
          %2748 = vmatpush.bf16.msra.mxu0 %v2735
          %2749 = vmatpush.bf16.msra.mxu0 %v2734
          %2750 = vmatpush.bf16.msra.mxu0 %v2733
          %2751 = vmatpush.bf16.msra.mxu0 %v2732
          %2752 = vmatpush.bf16.msra.mxu0 %v2731
          %2753 = vmatpush.bf16.msra.mxu0 %v2730
          %2754 = vmatmul.bf16.gmra.mxu0 %v2631
          %v2755 = vpop.f32.mrf.mxu0
          %v2756 = vadd.f32 %v2696, %v2755
          %v2757 = vpop.f32.mrf.mxu0
          %v2758 = vadd.f32 %v2696, %v2757
          %2759 = vdwg.mxu0
          %2762 = vrot.lane.b32.xlu0 %v2691, 96
          %v2763 = vpop.permute.xlu0 %2762
          %2764 = vrot.lane.b32.xlu0 %v2693, 96
          %v2765 = vpop.permute.xlu0 %2764
          %2768 = vrot.lane.b32.xlu0 %v2691, 64
          %v2769 = vpop.permute.xlu0 %2768
          %2770 = vrot.lane.b32.xlu0 %v2693, 64
          %v2771 = vpop.permute.xlu0 %2770
          %2774 = vrot.lane.b32.xlu0 %v2691, 32
          %v2775 = vpop.permute.xlu0 %2774
          %2776 = vrot.lane.b32.xlu0 %v2693, 32
          %v2777 = vpop.permute.xlu0 %2776
          %v2780 = vrot.slane %v2769, 4
          %v2781 = vsel %vm1603, %v2780, %v2691
          %v2782 = vrot.slane %v2691, 4
          %v2783 = vsel %vm1603, %v2769, %v2782
          %v2785 = vunpack.c.l.s4 1983009808
          %v2786 = vunpack.c.0.s8 %v2785
          %v2787 = vperm.slane %v2781, %v2786
          %v2789 = vunpack.c.l.s4 1983009808
          %v2790 = vunpack.c.0.s8 %v2789
          %v2791 = vperm.slane %v2783, %v2790
          %v2792 = vrot.slane %v2775, 4
          %v2793 = vsel %vm1603, %v2792, %v2763
          %v2794 = vrot.slane %v2763, 4
          %v2795 = vsel %vm1603, %v2775, %v2794
          %v2797 = vunpack.c.l.s4 1983009808
          %v2798 = vunpack.c.0.s8 %v2797
          %v2799 = vperm.slane %v2793, %v2798
          %v2801 = vunpack.c.l.s4 1983009808
          %v2802 = vunpack.c.0.s8 %v2801
          %v2803 = vperm.slane %v2795, %v2802
          %v2804 = vrot.slane %v2799, 4
          %v2805 = vsel %vm1603, %v2804, %v2787
          %v2806 = vrot.slane %v2787, 4
          %v2807 = vsel %vm1603, %v2799, %v2806
          %v2809 = vunpack.c.l.s4 1934713408
          %v2810 = vunpack.c.0.s8 %v2809
          %v2811 = vperm.slane %v2805, %v2810
          %v2813 = vunpack.c.l.s4 1934713408
          %v2814 = vunpack.c.0.s8 %v2813
          %v2815 = vperm.slane %v2807, %v2814
          %v2816 = vrot.slane %v2803, 4
          %v2817 = vsel %vm1603, %v2816, %v2791
          %v2818 = vrot.slane %v2791, 4
          %v2819 = vsel %vm1603, %v2803, %v2818
          %v2821 = vunpack.c.l.s4 1934713408
          %v2822 = vunpack.c.0.s8 %v2821
          %v2823 = vperm.slane %v2817, %v2822
          %v2825 = vunpack.c.l.s4 1934713408
          %v2826 = vunpack.c.0.s8 %v2825
          %v2827 = vperm.slane %v2819, %v2826
          %v2828 = vrot.slane %v2811, 4
          %v2829 = vsel %vm1603, 0.0, %v2828
          %v2830 = vrot.slane %v2815, 4
          %v2831 = vsel %vm1603, 0.0, %v2830
          %v2832 = vrot.slane %v2823, 4
          %v2833 = vsel %vm1603, 0.0, %v2832
          %v2834 = vrot.slane %v2827, 4
          %v2835 = vsel %vm1603, 0.0, %v2834
          %v2836 = vrot.slane %v2771, 4
          %v2837 = vsel %vm1603, %v2836, %v2693
          %v2838 = vrot.slane %v2693, 4
          %v2839 = vsel %vm1603, %v2771, %v2838
          %v2841 = vunpack.c.l.s4 1983009808
          %v2842 = vunpack.c.0.s8 %v2841
          %v2843 = vperm.slane %v2837, %v2842
          %v2845 = vunpack.c.l.s4 1983009808
          %v2846 = vunpack.c.0.s8 %v2845
          %v2847 = vperm.slane %v2839, %v2846
          %v2848 = vrot.slane %v2777, 4
          %v2849 = vsel %vm1603, %v2848, %v2765
          %v2850 = vrot.slane %v2765, 4
          %v2851 = vsel %vm1603, %v2777, %v2850
          %v2853 = vunpack.c.l.s4 1983009808
          %v2854 = vunpack.c.0.s8 %v2853
          %v2855 = vperm.slane %v2849, %v2854
          %v2857 = vunpack.c.l.s4 1983009808
          %v2858 = vunpack.c.0.s8 %v2857
          %v2859 = vperm.slane %v2851, %v2858
          %v2860 = vrot.slane %v2855, 4
          %v2861 = vsel %vm1603, %v2860, %v2843
          %v2862 = vrot.slane %v2843, 4
          %v2863 = vsel %vm1603, %v2855, %v2862
          %v2865 = vunpack.c.l.s4 1934713408
          %v2866 = vunpack.c.0.s8 %v2865
          %v2867 = vperm.slane %v2861, %v2866
          %v2869 = vunpack.c.l.s4 1934713408
          %v2870 = vunpack.c.0.s8 %v2869
          %v2871 = vperm.slane %v2863, %v2870
          %v2872 = vrot.slane %v2859, 4
          %v2873 = vsel %vm1603, %v2872, %v2847
          %v2874 = vrot.slane %v2847, 4
          %v2875 = vsel %vm1603, %v2859, %v2874
          %v2877 = vunpack.c.l.s4 1934713408
          %v2878 = vunpack.c.0.s8 %v2877
          %v2879 = vperm.slane %v2873, %v2878
          %v2881 = vunpack.c.l.s4 1934713408
          %v2882 = vunpack.c.0.s8 %v2881
          %v2883 = vperm.slane %v2875, %v2882
          %v2884 = vrot.slane %v2867, 4
          %v2885 = vsel %vm1603, 0.0, %v2884
          %v2886 = vrot.slane %v2871, 4
          %v2887 = vsel %vm1603, 0.0, %v2886
          %v2888 = vrot.slane %v2879, 4
          %v2889 = vsel %vm1603, 0.0, %v2888
          %v2890 = vrot.slane %v2883, 4
          %v2891 = vsel %vm1603, 0.0, %v2890
          %v2892 = vsel %vm1603, %v2830, %v2811
          %v2894 = vunpack.c.l.s4 1983009808
          %v2895 = vunpack.c.0.s8 %v2894
          %v2896 = vperm.slane %v2892, %v2895
          %v2897 = vrot.slane %v2831, 4
          %v2898 = vsel %vm1603, %v2897, %v2829
          %v2900 = vunpack.c.l.s4 1983009808
          %v2901 = vunpack.c.0.s8 %v2900
          %v2902 = vperm.slane %v2898, %v2901
          %v2903 = vsel %vm1603, %v2834, %v2823
          %v2905 = vunpack.c.l.s4 1983009808
          %v2906 = vunpack.c.0.s8 %v2905
          %v2907 = vperm.slane %v2903, %v2906
          %v2908 = vrot.slane %v2835, 4
          %v2909 = vsel %vm1603, %v2908, %v2833
          %v2911 = vunpack.c.l.s4 1983009808
          %v2912 = vunpack.c.0.s8 %v2911
          %v2913 = vperm.slane %v2909, %v2912
          %v2914 = vrot.slane %v2902, 4
          %v2915 = vsel %vm1603, %v2914, %v2896
          %v2916 = vrot.slane %v2896, 4
          %v2917 = vsel %vm1603, %v2902, %v2916
          %v2919 = vunpack.c.l.s4 1934713408
          %v2920 = vunpack.c.0.s8 %v2919
          %v2921 = vperm.slane %v2915, %v2920
          %v2923 = vunpack.c.l.s4 1934713408
          %v2924 = vunpack.c.0.s8 %v2923
          %v2925 = vperm.slane %v2917, %v2924
          %v2926 = vrot.slane %v2913, 4
          %v2927 = vsel %vm1603, %v2926, %v2907
          %v2928 = vrot.slane %v2907, 4
          %v2929 = vsel %vm1603, %v2913, %v2928
          %v2931 = vunpack.c.l.s4 1934713408
          %v2932 = vunpack.c.0.s8 %v2931
          %v2933 = vperm.slane %v2927, %v2932
          %v2935 = vunpack.c.l.s4 1934713408
          %v2936 = vunpack.c.0.s8 %v2935
          %v2937 = vperm.slane %v2929, %v2936
          %v2938 = vrot.slane %v2933, 4
          %v2939 = vsel %vm1603, %v2938, %v2921
          %v2940 = vrot.slane %v2921, 4
          %v2941 = vsel %vm1603, %v2933, %v2940
          %v2942 = vrot.slane %v2937, 4
          %v2943 = vsel %vm1603, %v2942, %v2925
          %v2944 = vrot.slane %v2925, 4
          %v2945 = vsel %vm1603, %v2937, %v2944
          %v2946 = vsel %vm1603, %v2886, %v2867
          %v2948 = vunpack.c.l.s4 1983009808
          %v2949 = vunpack.c.0.s8 %v2948
          %v2950 = vperm.slane %v2946, %v2949
          %v2951 = vrot.slane %v2887, 4
          %v2952 = vsel %vm1603, %v2951, %v2885
          %v2954 = vunpack.c.l.s4 1983009808
          %v2955 = vunpack.c.0.s8 %v2954
          %v2956 = vperm.slane %v2952, %v2955
          %v2957 = vsel %vm1603, %v2890, %v2879
          %v2959 = vunpack.c.l.s4 1983009808
          %v2960 = vunpack.c.0.s8 %v2959
          %v2961 = vperm.slane %v2957, %v2960
          %v2962 = vrot.slane %v2891, 4
          %v2963 = vsel %vm1603, %v2962, %v2889
          %v2965 = vunpack.c.l.s4 1983009808
          %v2966 = vunpack.c.0.s8 %v2965
          %v2967 = vperm.slane %v2963, %v2966
          %v2968 = vrot.slane %v2956, 4
          %v2969 = vsel %vm1603, %v2968, %v2950
          %v2970 = vrot.slane %v2950, 4
          %v2971 = vsel %vm1603, %v2956, %v2970
          %v2973 = vunpack.c.l.s4 1934713408
          %v2974 = vunpack.c.0.s8 %v2973
          %v2975 = vperm.slane %v2969, %v2974
          %v2977 = vunpack.c.l.s4 1934713408
          %v2978 = vunpack.c.0.s8 %v2977
          %v2979 = vperm.slane %v2971, %v2978
          %v2980 = vrot.slane %v2967, 4
          %v2981 = vsel %vm1603, %v2980, %v2961
          %v2982 = vrot.slane %v2961, 4
          %v2983 = vsel %vm1603, %v2967, %v2982
          %v2985 = vunpack.c.l.s4 1934713408
          %v2986 = vunpack.c.0.s8 %v2985
          %v2987 = vperm.slane %v2981, %v2986
          %v2989 = vunpack.c.l.s4 1934713408
          %v2990 = vunpack.c.0.s8 %v2989
          %v2991 = vperm.slane %v2983, %v2990
          %v2992 = vrot.slane %v2987, 4
          %v2993 = vsel %vm1603, %v2992, %v2975
          %v2994 = vrot.slane %v2975, 4
          %v2995 = vsel %vm1603, %v2987, %v2994
          %v2996 = vrot.slane %v2991, 4
          %v2997 = vsel %vm1603, %v2996, %v2979
          %v2998 = vrot.slane %v2979, 4
          %v2999 = vsel %vm1603, %v2991, %v2998
          %v3000 = vpack.c.bf16 %v2939, %v2939
          %v3001 = vpack.c.bf16 %v2993, %v2993
          %v3002 = vpack.c.bf16 %v2941, %v2941
          %v3003 = vpack.c.bf16 %v2995, %v2995
          %v3004 = vpack.c.bf16 %v2943, %v2943
          %v3005 = vpack.c.bf16 %v2997, %v2997
          %v3006 = vpack.c.bf16 %v2945, %v2945
          %v3007 = vpack.c.bf16 %v2999, %v2999
          %3010 = vrot.lane.b32.xlu0 %v2756, 96
          %v3011 = vpop.permute.xlu0 %3010
          %3012 = vrot.lane.b32.xlu0 %v2758, 96
          %v3013 = vpop.permute.xlu0 %3012
          %3016 = vrot.lane.b32.xlu0 %v2756, 64
          %v3017 = vpop.permute.xlu0 %3016
          %3018 = vrot.lane.b32.xlu0 %v2758, 64
          %v3019 = vpop.permute.xlu0 %3018
          %3022 = vrot.lane.b32.xlu0 %v2756, 32
          %v3023 = vpop.permute.xlu0 %3022
          %3024 = vrot.lane.b32.xlu0 %v2758, 32
          %v3025 = vpop.permute.xlu0 %3024
          %v3028 = vrot.slane %v3017, 4
          %v3029 = vsel %vm1603, %v3028, %v2756
          %v3030 = vrot.slane %v2756, 4
          %v3031 = vsel %vm1603, %v3017, %v3030
          %v3033 = vunpack.c.l.s4 1983009808
          %v3034 = vunpack.c.0.s8 %v3033
          %v3035 = vperm.slane %v3029, %v3034
          %v3037 = vunpack.c.l.s4 1983009808
          %v3038 = vunpack.c.0.s8 %v3037
          %v3039 = vperm.slane %v3031, %v3038
          %v3040 = vrot.slane %v3023, 4
          %v3041 = vsel %vm1603, %v3040, %v3011
          %v3042 = vrot.slane %v3011, 4
          %v3043 = vsel %vm1603, %v3023, %v3042
          %v3045 = vunpack.c.l.s4 1983009808
          %v3046 = vunpack.c.0.s8 %v3045
          %v3047 = vperm.slane %v3041, %v3046
          %v3049 = vunpack.c.l.s4 1983009808
          %v3050 = vunpack.c.0.s8 %v3049
          %v3051 = vperm.slane %v3043, %v3050
          %v3052 = vrot.slane %v3047, 4
          %v3053 = vsel %vm1603, %v3052, %v3035
          %v3054 = vrot.slane %v3035, 4
          %v3055 = vsel %vm1603, %v3047, %v3054
          %v3057 = vunpack.c.l.s4 1934713408
          %v3058 = vunpack.c.0.s8 %v3057
          %v3059 = vperm.slane %v3053, %v3058
          %v3061 = vunpack.c.l.s4 1934713408
          %v3062 = vunpack.c.0.s8 %v3061
          %v3063 = vperm.slane %v3055, %v3062
          %v3064 = vrot.slane %v3051, 4
          %v3065 = vsel %vm1603, %v3064, %v3039
          %v3066 = vrot.slane %v3039, 4
          %v3067 = vsel %vm1603, %v3051, %v3066
          %v3069 = vunpack.c.l.s4 1934713408
          %v3070 = vunpack.c.0.s8 %v3069
          %v3071 = vperm.slane %v3065, %v3070
          %v3073 = vunpack.c.l.s4 1934713408
          %v3074 = vunpack.c.0.s8 %v3073
          %v3075 = vperm.slane %v3067, %v3074
          %v3076 = vrot.slane %v3059, 4
          %v3077 = vsel %vm1603, 0.0, %v3076
          %v3078 = vrot.slane %v3063, 4
          %v3079 = vsel %vm1603, 0.0, %v3078
          %v3080 = vrot.slane %v3071, 4
          %v3081 = vsel %vm1603, 0.0, %v3080
          %v3082 = vrot.slane %v3075, 4
          %v3083 = vsel %vm1603, 0.0, %v3082
          %v3084 = vrot.slane %v3019, 4
          %v3085 = vsel %vm1603, %v3084, %v2758
          %v3086 = vrot.slane %v2758, 4
          %v3087 = vsel %vm1603, %v3019, %v3086
          %v3089 = vunpack.c.l.s4 1983009808
          %v3090 = vunpack.c.0.s8 %v3089
          %v3091 = vperm.slane %v3085, %v3090
          %v3093 = vunpack.c.l.s4 1983009808
          %v3094 = vunpack.c.0.s8 %v3093
          %v3095 = vperm.slane %v3087, %v3094
          %v3096 = vrot.slane %v3025, 4
          %v3097 = vsel %vm1603, %v3096, %v3013
          %v3098 = vrot.slane %v3013, 4
          %v3099 = vsel %vm1603, %v3025, %v3098
          %v3101 = vunpack.c.l.s4 1983009808
          %v3102 = vunpack.c.0.s8 %v3101
          %v3103 = vperm.slane %v3097, %v3102
          %v3105 = vunpack.c.l.s4 1983009808
          %v3106 = vunpack.c.0.s8 %v3105
          %v3107 = vperm.slane %v3099, %v3106
          %v3108 = vrot.slane %v3103, 4
          %v3109 = vsel %vm1603, %v3108, %v3091
          %v3110 = vrot.slane %v3091, 4
          %v3111 = vsel %vm1603, %v3103, %v3110
          %v3113 = vunpack.c.l.s4 1934713408
          %v3114 = vunpack.c.0.s8 %v3113
          %v3115 = vperm.slane %v3109, %v3114
          %v3117 = vunpack.c.l.s4 1934713408
          %v3118 = vunpack.c.0.s8 %v3117
          %v3119 = vperm.slane %v3111, %v3118
          %v3120 = vrot.slane %v3107, 4
          %v3121 = vsel %vm1603, %v3120, %v3095
          %v3122 = vrot.slane %v3095, 4
          %v3123 = vsel %vm1603, %v3107, %v3122
          %v3125 = vunpack.c.l.s4 1934713408
          %v3126 = vunpack.c.0.s8 %v3125
          %v3127 = vperm.slane %v3121, %v3126
          %v3129 = vunpack.c.l.s4 1934713408
          %v3130 = vunpack.c.0.s8 %v3129
          %v3131 = vperm.slane %v3123, %v3130
          %v3132 = vrot.slane %v3115, 4
          %v3133 = vsel %vm1603, 0.0, %v3132
          %v3134 = vrot.slane %v3119, 4
          %v3135 = vsel %vm1603, 0.0, %v3134
          %v3136 = vrot.slane %v3127, 4
          %v3137 = vsel %vm1603, 0.0, %v3136
          %v3138 = vrot.slane %v3131, 4
          %v3139 = vsel %vm1603, 0.0, %v3138
          %v3140 = vsel %vm1603, %v3078, %v3059
          %v3142 = vunpack.c.l.s4 1983009808
          %v3143 = vunpack.c.0.s8 %v3142
          %v3144 = vperm.slane %v3140, %v3143
          %v3145 = vrot.slane %v3079, 4
          %v3146 = vsel %vm1603, %v3145, %v3077
          %v3148 = vunpack.c.l.s4 1983009808
          %v3149 = vunpack.c.0.s8 %v3148
          %v3150 = vperm.slane %v3146, %v3149
          %v3151 = vsel %vm1603, %v3082, %v3071
          %v3153 = vunpack.c.l.s4 1983009808
          %v3154 = vunpack.c.0.s8 %v3153
          %v3155 = vperm.slane %v3151, %v3154
          %v3156 = vrot.slane %v3083, 4
          %v3157 = vsel %vm1603, %v3156, %v3081
          %v3159 = vunpack.c.l.s4 1983009808
          %v3160 = vunpack.c.0.s8 %v3159
          %v3161 = vperm.slane %v3157, %v3160
          %v3162 = vrot.slane %v3150, 4
          %v3163 = vsel %vm1603, %v3162, %v3144
          %v3164 = vrot.slane %v3144, 4
          %v3165 = vsel %vm1603, %v3150, %v3164
          %v3167 = vunpack.c.l.s4 1934713408
          %v3168 = vunpack.c.0.s8 %v3167
          %v3169 = vperm.slane %v3163, %v3168
          %v3171 = vunpack.c.l.s4 1934713408
          %v3172 = vunpack.c.0.s8 %v3171
          %v3173 = vperm.slane %v3165, %v3172
          %v3174 = vrot.slane %v3161, 4
          %v3175 = vsel %vm1603, %v3174, %v3155
          %v3176 = vrot.slane %v3155, 4
          %v3177 = vsel %vm1603, %v3161, %v3176
          %v3179 = vunpack.c.l.s4 1934713408
          %v3180 = vunpack.c.0.s8 %v3179
          %v3181 = vperm.slane %v3175, %v3180
          %v3183 = vunpack.c.l.s4 1934713408
          %v3184 = vunpack.c.0.s8 %v3183
          %v3185 = vperm.slane %v3177, %v3184
          %v3186 = vrot.slane %v3181, 4
          %v3187 = vsel %vm1603, %v3186, %v3169
          %v3188 = vrot.slane %v3169, 4
          %v3189 = vsel %vm1603, %v3181, %v3188
          %v3190 = vrot.slane %v3185, 4
          %v3191 = vsel %vm1603, %v3190, %v3173
          %v3192 = vrot.slane %v3173, 4
          %v3193 = vsel %vm1603, %v3185, %v3192
          %v3194 = vsel %vm1603, %v3134, %v3115
          %v3196 = vunpack.c.l.s4 1983009808
          %v3197 = vunpack.c.0.s8 %v3196
          %v3198 = vperm.slane %v3194, %v3197
          %v3199 = vrot.slane %v3135, 4
          %v3200 = vsel %vm1603, %v3199, %v3133
          %v3202 = vunpack.c.l.s4 1983009808
          %v3203 = vunpack.c.0.s8 %v3202
          %v3204 = vperm.slane %v3200, %v3203
          %v3205 = vsel %vm1603, %v3138, %v3127
          %v3207 = vunpack.c.l.s4 1983009808
          %v3208 = vunpack.c.0.s8 %v3207
          %v3209 = vperm.slane %v3205, %v3208
          %v3210 = vrot.slane %v3139, 4
          %v3211 = vsel %vm1603, %v3210, %v3137
          %v3213 = vunpack.c.l.s4 1983009808
          %v3214 = vunpack.c.0.s8 %v3213
          %v3215 = vperm.slane %v3211, %v3214
          %v3216 = vrot.slane %v3204, 4
          %v3217 = vsel %vm1603, %v3216, %v3198
          %v3218 = vrot.slane %v3198, 4
          %v3219 = vsel %vm1603, %v3204, %v3218
          %v3221 = vunpack.c.l.s4 1934713408
          %v3222 = vunpack.c.0.s8 %v3221
          %v3223 = vperm.slane %v3217, %v3222
          %v3225 = vunpack.c.l.s4 1934713408
          %v3226 = vunpack.c.0.s8 %v3225
          %v3227 = vperm.slane %v3219, %v3226
          %v3228 = vrot.slane %v3215, 4
          %v3229 = vsel %vm1603, %v3228, %v3209
          %v3230 = vrot.slane %v3209, 4
          %v3231 = vsel %vm1603, %v3215, %v3230
          %v3233 = vunpack.c.l.s4 1934713408
          %v3234 = vunpack.c.0.s8 %v3233
          %v3235 = vperm.slane %v3229, %v3234
          %v3237 = vunpack.c.l.s4 1934713408
          %v3238 = vunpack.c.0.s8 %v3237
          %v3239 = vperm.slane %v3231, %v3238
          %v3240 = vrot.slane %v3235, 4
          %v3241 = vsel %vm1603, %v3240, %v3223
          %v3242 = vrot.slane %v3223, 4
          %v3243 = vsel %vm1603, %v3235, %v3242
          %v3244 = vrot.slane %v3239, 4
          %v3245 = vsel %vm1603, %v3244, %v3227
          %v3246 = vrot.slane %v3227, 4
          %v3247 = vsel %vm1603, %v3239, %v3246
          %v3248 = vpack.c.bf16 %v3187, %v3187
          %v3249 = vpack.c.bf16 %v3241, %v3241
          %v3250 = vpack.c.bf16 %v3189, %v3189
          %v3251 = vpack.c.bf16 %v3243, %v3243
          %v3252 = vpack.c.bf16 %v3191, %v3191
          %v3253 = vpack.c.bf16 %v3245, %v3245
          %v3254 = vpack.c.bf16 %v3193, %v3193
          %v3255 = vpack.c.bf16 %v3247, %v3247
          %3256 = vst.msk [vmem:[#allocation4] sm:$0xf] %vm2555, %v3000
          %3257 = vst.msk [vmem:[#allocation4 + $0x4] sm:$0xf] %vm2555, %v3001
          %3258 = vst.msk [vmem:[#allocation4 + $0x8] sm:$0xf] %vm2555, %v3002
          %3259 = vst.msk [vmem:[#allocation4 + $0xc] sm:$0xf] %vm2555, %v3003
          %3260 = vst.msk [vmem:[#allocation4 + $0x10] sm:$0xf] %vm2555, %v3004
          %3261 = vst.msk [vmem:[#allocation4 + $0x14] sm:$0xf] %vm2555, %v3005
          %3262 = vst.msk [vmem:[#allocation4 + $0x18] sm:$0xf] %vm2555, %v3006
          %3263 = vst.msk [vmem:[#allocation4 + $0x1c] sm:$0xf] %vm2555, %v3007
          %3264 = vst.msk [vmem:[#allocation5] sm:$0xf] %vm2555, %v3248
          %3265 = vst.msk [vmem:[#allocation5 + $0x4] sm:$0xf] %vm2555, %v3249
          %3266 = vst.msk [vmem:[#allocation5 + $0x8] sm:$0xf] %vm2555, %v3250
          %3267 = vst.msk [vmem:[#allocation5 + $0xc] sm:$0xf] %vm2555, %v3251
          %3268 = vst.msk [vmem:[#allocation5 + $0x10] sm:$0xf] %vm2555, %v3252
          %3269 = vst.msk [vmem:[#allocation5 + $0x14] sm:$0xf] %vm2555, %v3253
          %3270 = vst.msk [vmem:[#allocation5 + $0x18] sm:$0xf] %vm2555, %v3254
          %3271 = vst.msk [vmem:[#allocation5 + $0x1c] sm:$0xf] %vm2555, %v3255
        $region228: #{tpu_custom_call.1} parent=139 // pred_fallthru
          _
        %s3272 = smul.u32 %s95, 16
        %s3273 = sshra.s32 %s3272, 3
        %s3274 = sand.u32 %s3272, 7
        %s3275 = smul.addr %s3273, 4
        %s3276 = scalar_lea.vmem %s1148, %s3275 [#allocation6]
        %v3277 = vld [vmem:[%s3276] sm:$0xf]
        %v3278 = vld [vmem:[%s3276 + $0x4] sm:$0xf]
        %v3279 = vunpack.c.l.bf16 %v3277
        %v3280 = vunpack.c.l.bf16 %v3278
        %v3281 = vld [vmem:[#allocation2] sm:$0xf]
        %v3282 = vld [vmem:[#allocation2 + $0x4] sm:$0xf]
        %v3283 = vld [vmem:[#allocation2 + $0x8] sm:$0xf]
        %v3284 = vld [vmem:[#allocation2 + $0xc] sm:$0xf]
        %v3285 = vld [vmem:[#allocation2 + $0x10] sm:$0xf]
        %v3286 = vld [vmem:[#allocation2 + $0x14] sm:$0xf]
        %v3287 = vld [vmem:[#allocation2 + $0x18] sm:$0xf]
        %v3288 = vld [vmem:[#allocation2 + $0x1c] sm:$0xf]
        %v3289 = vld [vmem:[#allocation2 + $0x20] sm:$0xf]
        %v3290 = vld [vmem:[#allocation2 + $0x24] sm:$0xf]
        %v3291 = vld [vmem:[#allocation2 + $0x28] sm:$0xf]
        %v3292 = vld [vmem:[#allocation2 + $0x2c] sm:$0xf]
        %v3293 = vld [vmem:[#allocation2 + $0x30] sm:$0xf]
        %v3294 = vld [vmem:[#allocation2 + $0x34] sm:$0xf]
        %v3295 = vld [vmem:[#allocation2 + $0x38] sm:$0xf]
        %v3296 = vld [vmem:[#allocation2 + $0x3c] sm:$0xf]
        %v3297 = vld [vmem:[#allocation3] sm:$0xf]
        %v3298 = vld [vmem:[#allocation3 + $0x4] sm:$0xf]
        %v3299 = vld [vmem:[#allocation3 + $0x8] sm:$0xf]
        %v3300 = vld [vmem:[#allocation3 + $0xc] sm:$0xf]
        %v3301 = vld [vmem:[#allocation3 + $0x10] sm:$0xf]
        %v3302 = vld [vmem:[#allocation3 + $0x14] sm:$0xf]
        %v3303 = vld [vmem:[#allocation3 + $0x18] sm:$0xf]
        %v3304 = vld [vmem:[#allocation3 + $0x1c] sm:$0xf]
        %v3305 = vld [vmem:[#allocation3 + $0x20] sm:$0xf]
        %v3306 = vld [vmem:[#allocation3 + $0x24] sm:$0xf]
        %v3307 = vld [vmem:[#allocation3 + $0x28] sm:$0xf]
        %v3308 = vld [vmem:[#allocation3 + $0x2c] sm:$0xf]
        %v3309 = vld [vmem:[#allocation3 + $0x30] sm:$0xf]
        %v3310 = vld [vmem:[#allocation3 + $0x34] sm:$0xf]
        %v3311 = vld [vmem:[#allocation3 + $0x38] sm:$0xf]
        %v3312 = vld [vmem:[#allocation3 + $0x3c] sm:$0xf]
        %v3313 = vld [vmem:[%s1168] sm:$0xf]
        %v3314 = vld [vmem:[%s1168 + $0x4] sm:$0xf]
        %v3315 = vld [vmem:[#allocation12] sm:$0xf]
        %v3316 = vld [vmem:[#allocation12 + $0x4] sm:$0xf]
        %v3317 = vld [vmem:[#allocation12 + $0x8] sm:$0xf]
        %v3318 = vld [vmem:[#allocation12 + $0xc] sm:$0xf]
        %v3319 = vld [vmem:[#allocation12 + $0x10] sm:$0xf]
        %v3320 = vld [vmem:[#allocation12 + $0x14] sm:$0xf]
        %v3321 = vld [vmem:[#allocation12 + $0x18] sm:$0xf]
        %v3322 = vld [vmem:[#allocation12 + $0x1c] sm:$0xf]
        %v3323 = vld [vmem:[#allocation12 + $0x20] sm:$0xf]
        %v3324 = vld [vmem:[#allocation12 + $0x24] sm:$0xf]
        %v3325 = vld [vmem:[#allocation12 + $0x28] sm:$0xf]
        %v3326 = vld [vmem:[#allocation12 + $0x2c] sm:$0xf]
        %v3327 = vld [vmem:[#allocation12 + $0x30] sm:$0xf]
        %v3328 = vld [vmem:[#allocation12 + $0x34] sm:$0xf]
        %v3329 = vld [vmem:[#allocation12 + $0x38] sm:$0xf]
        %v3330 = vld [vmem:[#allocation12 + $0x3c] sm:$0xf]
        %v3331 = vld [vmem:[#allocation14] sm:$0x1]
        %v3332 = vld [vmem:[#allocation21] sm:$0xf]
        %v3333 = vld [vmem:[#allocation21 + $0x4] sm:$0xf]
        %v3334 = vld [vmem:[#allocation21 + $0x8] sm:$0xf]
        %v3335 = vld [vmem:[#allocation21 + $0xc] sm:$0xf]
        %v3336 = vld [vmem:[#allocation21 + $0x10] sm:$0xf]
        %v3337 = vld [vmem:[#allocation21 + $0x14] sm:$0xf]
        %v3338 = vld [vmem:[#allocation21 + $0x18] sm:$0xf]
        %v3339 = vld [vmem:[#allocation21 + $0x1c] sm:$0xf]
        %v3340 = vld [vmem:[#allocation21 + $0x20] sm:$0xf]
        %v3341 = vld [vmem:[#allocation21 + $0x24] sm:$0xf]
        %v3342 = vld [vmem:[#allocation21 + $0x28] sm:$0xf]
        %v3343 = vld [vmem:[#allocation21 + $0x2c] sm:$0xf]
        %v3344 = vld [vmem:[#allocation21 + $0x30] sm:$0xf]
        %v3345 = vld [vmem:[#allocation21 + $0x34] sm:$0xf]
        %v3346 = vld [vmem:[#allocation21 + $0x38] sm:$0xf]
        %v3347 = vld [vmem:[#allocation21 + $0x3c] sm:$0xf]
        %v3348 = vld [vmem:[#allocation23] sm:$0x1]
        %v3350 = vperm.slane %v3331, 0
        %v3354 = vunpack.c.l.b16 %v3277
        %v3355 = vunpack.c.l.b16 %v3278
        %v3356 = vpack.c.b16 %v3355, %v3354
        %v3374 = vunpack.c.l.b16 %v3315
        %v3375 = vunpack.c.l.b16 %v3316
        %v3376 = vunpack.c.l.b16 %v3317
        %v3377 = vunpack.c.l.b16 %v3318
        %v3378 = vunpack.c.l.b16 %v3319
        %v3379 = vunpack.c.l.b16 %v3320
        %v3380 = vunpack.c.l.b16 %v3321
        %v3381 = vunpack.c.l.b16 %v3322
        %v3382 = vunpack.c.l.b16 %v3323
        %v3383 = vunpack.c.l.b16 %v3324
        %v3384 = vunpack.c.l.b16 %v3325
        %v3385 = vunpack.c.l.b16 %v3326
        %v3386 = vunpack.c.l.b16 %v3327
        %v3387 = vunpack.c.l.b16 %v3328
        %v3388 = vunpack.c.l.b16 %v3329
        %v3389 = vunpack.c.l.b16 %v3330
        %v3390 = vpack.c.b16 %v3375, %v3374
        %v3391 = vpack.c.b16 %v3377, %v3376
        %v3392 = vpack.c.b16 %v3379, %v3378
        %v3393 = vpack.c.b16 %v3381, %v3380
        %v3394 = vpack.c.b16 %v3383, %v3382
        %v3395 = vpack.c.b16 %v3385, %v3384
        %v3396 = vpack.c.b16 %v3387, %v3386
        %v3397 = vpack.c.b16 %v3389, %v3388
        %3406 = vmatpush.bf16.msra.mxu0 %v3397
        %3407 = vmatpush.bf16.msra.mxu0 %v3396
        %3408 = vmatpush.bf16.msra.mxu0 %v3395
        %3409 = vmatpush.bf16.msra.mxu0 %v3394
        %3410 = vmatpush.bf16.msra.mxu0 %v3393
        %3411 = vmatpush.bf16.msra.mxu0 %v3392
        %3412 = vmatpush.bf16.msra.mxu0 %v3391
        %3413 = vmatpush.bf16.msra.mxu0 %v3390
        %3414 = vmatmul.bf16.gmra.mxu0 %v3356
        %v3415 = vpop.f32.mrf.mxu0
        %v3416 = vadd.f32 %v3350, %v3415
        %v3417 = vpop.f32.mrf.mxu0
        %v3418 = vadd.f32 %v3350, %v3417
        %3419 = vdwg.mxu0
        %3422 = vrot.lane.b32.xlu0 %v3416, 96
        %v3423 = vpop.permute.xlu0 %3422
        %3424 = vrot.lane.b32.xlu0 %v3418, 96
        %v3425 = vpop.permute.xlu0 %3424
        %3428 = vrot.lane.b32.xlu0 %v3416, 64
        %v3429 = vpop.permute.xlu0 %3428
        %3430 = vrot.lane.b32.xlu0 %v3418, 64
        %v3431 = vpop.permute.xlu0 %3430
        %3434 = vrot.lane.b32.xlu0 %v3416, 32
        %v3435 = vpop.permute.xlu0 %3434
        %3436 = vrot.lane.b32.xlu0 %v3418, 32
        %v3437 = vpop.permute.xlu0 %3436
        %v3440 = vrot.slane %v3429, 4
        %vm3441 = vcmask 1047556
        %v3442 = vsel %vm3441, %v3440, %v3416
        %v3443 = vrot.slane %v3416, 4
        %v3444 = vsel %vm3441, %v3429, %v3443
        %v3446 = vunpack.c.l.s4 1983009808
        %v3447 = vunpack.c.0.s8 %v3446
        %v3448 = vperm.slane %v3442, %v3447
        %v3450 = vunpack.c.l.s4 1983009808
        %v3451 = vunpack.c.0.s8 %v3450
        %v3452 = vperm.slane %v3444, %v3451
        %v3453 = vrot.slane %v3435, 4
        %v3454 = vsel %vm3441, %v3453, %v3423
        %v3455 = vrot.slane %v3423, 4
        %v3456 = vsel %vm3441, %v3435, %v3455
        %v3458 = vunpack.c.l.s4 1983009808
        %v3459 = vunpack.c.0.s8 %v3458
        %v3460 = vperm.slane %v3454, %v3459
        %v3462 = vunpack.c.l.s4 1983009808
        %v3463 = vunpack.c.0.s8 %v3462
        %v3464 = vperm.slane %v3456, %v3463
        %v3465 = vrot.slane %v3460, 4
        %v3466 = vsel %vm3441, %v3465, %v3448
        %v3467 = vrot.slane %v3448, 4
        %v3468 = vsel %vm3441, %v3460, %v3467
        %v3470 = vunpack.c.l.s4 1934713408
        %v3471 = vunpack.c.0.s8 %v3470
        %v3472 = vperm.slane %v3466, %v3471
        %v3474 = vunpack.c.l.s4 1934713408
        %v3475 = vunpack.c.0.s8 %v3474
        %v3476 = vperm.slane %v3468, %v3475
        %v3477 = vrot.slane %v3464, 4
        %v3478 = vsel %vm3441, %v3477, %v3452
        %v3479 = vrot.slane %v3452, 4
        %v3480 = vsel %vm3441, %v3464, %v3479
        %v3482 = vunpack.c.l.s4 1934713408
        %v3483 = vunpack.c.0.s8 %v3482
        %v3484 = vperm.slane %v3478, %v3483
        %v3486 = vunpack.c.l.s4 1934713408
        %v3487 = vunpack.c.0.s8 %v3486
        %v3488 = vperm.slane %v3480, %v3487
        %v3489 = vrot.slane %v3472, 4
        %v3490 = vsel %vm3441, 0.0, %v3489
        %v3491 = vrot.slane %v3476, 4
        %v3492 = vsel %vm3441, 0.0, %v3491
        %v3493 = vrot.slane %v3484, 4
        %v3494 = vsel %vm3441, 0.0, %v3493
        %v3495 = vrot.slane %v3488, 4
        %v3496 = vsel %vm3441, 0.0, %v3495
        %v3497 = vrot.slane %v3431, 4
        %v3498 = vsel %vm3441, %v3497, %v3418
        %v3499 = vrot.slane %v3418, 4
        %v3500 = vsel %vm3441, %v3431, %v3499
        %v3502 = vunpack.c.l.s4 1983009808
        %v3503 = vunpack.c.0.s8 %v3502
        %v3504 = vperm.slane %v3498, %v3503
        %v3506 = vunpack.c.l.s4 1983009808
        %v3507 = vunpack.c.0.s8 %v3506
        %v3508 = vperm.slane %v3500, %v3507
        %v3509 = vrot.slane %v3437, 4
        %v3510 = vsel %vm3441, %v3509, %v3425
        %v3511 = vrot.slane %v3425, 4
        %v3512 = vsel %vm3441, %v3437, %v3511
        %v3514 = vunpack.c.l.s4 1983009808
        %v3515 = vunpack.c.0.s8 %v3514
        %v3516 = vperm.slane %v3510, %v3515
        %v3518 = vunpack.c.l.s4 1983009808
        %v3519 = vunpack.c.0.s8 %v3518
        %v3520 = vperm.slane %v3512, %v3519
        %v3521 = vrot.slane %v3516, 4
        %v3522 = vsel %vm3441, %v3521, %v3504
        %v3523 = vrot.slane %v3504, 4
        %v3524 = vsel %vm3441, %v3516, %v3523
        %v3526 = vunpack.c.l.s4 1934713408
        %v3527 = vunpack.c.0.s8 %v3526
        %v3528 = vperm.slane %v3522, %v3527
        %v3530 = vunpack.c.l.s4 1934713408
        %v3531 = vunpack.c.0.s8 %v3530
        %v3532 = vperm.slane %v3524, %v3531
        %v3533 = vrot.slane %v3520, 4
        %v3534 = vsel %vm3441, %v3533, %v3508
        %v3535 = vrot.slane %v3508, 4
        %v3536 = vsel %vm3441, %v3520, %v3535
        %v3538 = vunpack.c.l.s4 1934713408
        %v3539 = vunpack.c.0.s8 %v3538
        %v3540 = vperm.slane %v3534, %v3539
        %v3542 = vunpack.c.l.s4 1934713408
        %v3543 = vunpack.c.0.s8 %v3542
        %v3544 = vperm.slane %v3536, %v3543
        %v3545 = vrot.slane %v3528, 4
        %v3546 = vsel %vm3441, 0.0, %v3545
        %v3547 = vrot.slane %v3532, 4
        %v3548 = vsel %vm3441, 0.0, %v3547
        %v3549 = vrot.slane %v3540, 4
        %v3550 = vsel %vm3441, 0.0, %v3549
        %v3551 = vrot.slane %v3544, 4
        %v3552 = vsel %vm3441, 0.0, %v3551
        %v3553 = vsel %vm3441, %v3491, %v3472
        %v3555 = vunpack.c.l.s4 1983009808
        %v3556 = vunpack.c.0.s8 %v3555
        %v3557 = vperm.slane %v3553, %v3556
        %v3558 = vrot.slane %v3492, 4
        %v3559 = vsel %vm3441, %v3558, %v3490
        %v3561 = vunpack.c.l.s4 1983009808
        %v3562 = vunpack.c.0.s8 %v3561
        %v3563 = vperm.slane %v3559, %v3562
        %v3564 = vsel %vm3441, %v3495, %v3484
        %v3566 = vunpack.c.l.s4 1983009808
        %v3567 = vunpack.c.0.s8 %v3566
        %v3568 = vperm.slane %v3564, %v3567
        %v3569 = vrot.slane %v3496, 4
        %v3570 = vsel %vm3441, %v3569, %v3494
        %v3572 = vunpack.c.l.s4 1983009808
        %v3573 = vunpack.c.0.s8 %v3572
        %v3574 = vperm.slane %v3570, %v3573
        %v3575 = vrot.slane %v3563, 4
        %v3576 = vsel %vm3441, %v3575, %v3557
        %v3577 = vrot.slane %v3557, 4
        %v3578 = vsel %vm3441, %v3563, %v3577
        %v3580 = vunpack.c.l.s4 1934713408
        %v3581 = vunpack.c.0.s8 %v3580
        %v3582 = vperm.slane %v3576, %v3581
        %v3584 = vunpack.c.l.s4 1934713408
        %v3585 = vunpack.c.0.s8 %v3584
        %v3586 = vperm.slane %v3578, %v3585
        %v3587 = vrot.slane %v3574, 4
        %v3588 = vsel %vm3441, %v3587, %v3568
        %v3589 = vrot.slane %v3568, 4
        %v3590 = vsel %vm3441, %v3574, %v3589
        %v3592 = vunpack.c.l.s4 1934713408
        %v3593 = vunpack.c.0.s8 %v3592
        %v3594 = vperm.slane %v3588, %v3593
        %v3596 = vunpack.c.l.s4 1934713408
        %v3597 = vunpack.c.0.s8 %v3596
        %v3598 = vperm.slane %v3590, %v3597
        %v3599 = vrot.slane %v3594, 4
        %v3600 = vsel %vm3441, %v3599, %v3582
        %v3601 = vrot.slane %v3582, 4
        %v3602 = vsel %vm3441, %v3594, %v3601
        %v3603 = vrot.slane %v3598, 4
        %v3604 = vsel %vm3441, %v3603, %v3586
        %v3605 = vrot.slane %v3586, 4
        %v3606 = vsel %vm3441, %v3598, %v3605
        %v3607 = vsel %vm3441, %v3547, %v3528
        %v3609 = vunpack.c.l.s4 1983009808
        %v3610 = vunpack.c.0.s8 %v3609
        %v3611 = vperm.slane %v3607, %v3610
        %v3612 = vrot.slane %v3548, 4
        %v3613 = vsel %vm3441, %v3612, %v3546
        %v3615 = vunpack.c.l.s4 1983009808
        %v3616 = vunpack.c.0.s8 %v3615
        %v3617 = vperm.slane %v3613, %v3616
        %v3618 = vsel %vm3441, %v3551, %v3540
        %v3620 = vunpack.c.l.s4 1983009808
        %v3621 = vunpack.c.0.s8 %v3620
        %v3622 = vperm.slane %v3618, %v3621
        %v3623 = vrot.slane %v3552, 4
        %v3624 = vsel %vm3441, %v3623, %v3550
        %v3626 = vunpack.c.l.s4 1983009808
        %v3627 = vunpack.c.0.s8 %v3626
        %v3628 = vperm.slane %v3624, %v3627
        %v3629 = vrot.slane %v3617, 4
        %v3630 = vsel %vm3441, %v3629, %v3611
        %v3631 = vrot.slane %v3611, 4
        %v3632 = vsel %vm3441, %v3617, %v3631
        %v3634 = vunpack.c.l.s4 1934713408
        %v3635 = vunpack.c.0.s8 %v3634
        %v3636 = vperm.slane %v3630, %v3635
        %v3638 = vunpack.c.l.s4 1934713408
        %v3639 = vunpack.c.0.s8 %v3638
        %v3640 = vperm.slane %v3632, %v3639
        %v3641 = vrot.slane %v3628, 4
        %v3642 = vsel %vm3441, %v3641, %v3622
        %v3643 = vrot.slane %v3622, 4
        %v3644 = vsel %vm3441, %v3628, %v3643
        %v3646 = vunpack.c.l.s4 1934713408
        %v3647 = vunpack.c.0.s8 %v3646
        %v3648 = vperm.slane %v3642, %v3647
        %v3650 = vunpack.c.l.s4 1934713408
        %v3651 = vunpack.c.0.s8 %v3650
        %v3652 = vperm.slane %v3644, %v3651
        %v3653 = vrot.slane %v3648, 4
        %v3654 = vsel %vm3441, %v3653, %v3636
        %v3655 = vrot.slane %v3636, 4
        %v3656 = vsel %vm3441, %v3648, %v3655
        %v3657 = vrot.slane %v3652, 4
        %v3658 = vsel %vm3441, %v3657, %v3640
        %v3659 = vrot.slane %v3640, 4
        %v3660 = vsel %vm3441, %v3652, %v3659
        %v3661 = vpack.c.bf16 %v3600, %v3600
        %v3662 = vpack.c.bf16 %v3654, %v3654
        %v3663 = vpack.c.bf16 %v3602, %v3602
        %v3664 = vpack.c.bf16 %v3656, %v3656
        %v3665 = vpack.c.bf16 %v3604, %v3604
        %v3666 = vpack.c.bf16 %v3658, %v3658
        %v3667 = vpack.c.bf16 %v3606, %v3606
        %v3668 = vpack.c.bf16 %v3660, %v3660
        %v3669 = vunpack.c.l.bf16 %v3313
        %v3670 = vunpack.c.l.bf16 %v3314
        %v3673 = vunpack.c.l.b16 %v3661
        %v3674 = vunpack.c.l.b16 %v3662
        %v3675 = vpack.c.b16 %v3674, %v3673
        %v3680 = vunpack.c.l.b16 %v3281
        %v3681 = vunpack.c.l.b16 %v3282
        %v3682 = vunpack.c.l.b16 %v3283
        %v3683 = vunpack.c.l.b16 %v3284
        %v3684 = vpack.c.b16 %v3681, %v3680
        %v3685 = vpack.c.b16 %v3683, %v3682
        %vm3686 = vcmask 261120
        %v3688 = vsel %vm3686, %v3675, 0
        %v3691 = vsel %vm3686, %v3684, 0
        %v3694 = vsel %vm3686, %v3685, 0
        %3696 = vmatpush.bf16.xpose.msra.mxu0 0
        %3697 = vmatpush.bf16.xpose.msra.mxu0 0
        %3698 = vmatpush.bf16.xpose.msra.mxu0 0
        %3699 = vmatpush.bf16.xpose.msra.mxu0 0
        %3700 = vmatpush.bf16.xpose.msra.mxu0 0
        %3701 = vmatpush.bf16.xpose.msra.mxu0 0
        %3702 = vmatpush.bf16.xpose.msra.mxu0 %v3694
        %3703 = vmatpush.bf16.xpose.msra.mxu0 %v3691
        %3704 = vmatmul.bf16.gmra.mxu0 %v3688
        %v3705 = vpop.f32.mrf.mxu0
        %v3706 = vadd.f32 %v3669, %v3705
        %v3707 = vpop.f32.mrf.mxu0
        %v3708 = vadd.f32 %v3670, %v3707
        %3709 = vdwg.mxu0
        %v3712 = vunpack.c.l.b16 %v3663
        %v3713 = vunpack.c.l.b16 %v3664
        %v3714 = vpack.c.b16 %v3713, %v3712
        %v3719 = vunpack.c.l.b16 %v3285
        %v3720 = vunpack.c.l.b16 %v3286
        %v3721 = vunpack.c.l.b16 %v3287
        %v3722 = vunpack.c.l.b16 %v3288
        %v3723 = vpack.c.b16 %v3720, %v3719
        %v3724 = vpack.c.b16 %v3722, %v3721
        %v3726 = vsel %vm3686, %v3714, 0
        %v3729 = vsel %vm3686, %v3723, 0
        %v3732 = vsel %vm3686, %v3724, 0
        %3734 = vmatpush.bf16.xpose.msra.mxu0 0
        %3735 = vmatpush.bf16.xpose.msra.mxu0 0
        %3736 = vmatpush.bf16.xpose.msra.mxu0 0
        %3737 = vmatpush.bf16.xpose.msra.mxu0 0
        %3738 = vmatpush.bf16.xpose.msra.mxu0 0
        %3739 = vmatpush.bf16.xpose.msra.mxu0 0
        %3740 = vmatpush.bf16.xpose.msra.mxu0 %v3732
        %3741 = vmatpush.bf16.xpose.msra.mxu0 %v3729
        %3742 = vmatmul.bf16.gmra.mxu0 %v3726
        %v3743 = vpop.f32.mrf.mxu0
        %v3744 = vadd.f32 %v3669, %v3743
        %v3745 = vpop.f32.mrf.mxu0
        %v3746 = vadd.f32 %v3670, %v3745
        %3747 = vdwg.mxu0
        %v3750 = vunpack.c.l.b16 %v3665
        %v3751 = vunpack.c.l.b16 %v3666
        %v3752 = vpack.c.b16 %v3751, %v3750
        %v3757 = vunpack.c.l.b16 %v3289
        %v3758 = vunpack.c.l.b16 %v3290
        %v3759 = vunpack.c.l.b16 %v3291
        %v3760 = vunpack.c.l.b16 %v3292
        %v3761 = vpack.c.b16 %v3758, %v3757
        %v3762 = vpack.c.b16 %v3760, %v3759
        %v3764 = vsel %vm3686, %v3752, 0
        %v3767 = vsel %vm3686, %v3761, 0
        %v3770 = vsel %vm3686, %v3762, 0
        %3772 = vmatpush.bf16.xpose.msra.mxu0 0
        %3773 = vmatpush.bf16.xpose.msra.mxu0 0
        %3774 = vmatpush.bf16.xpose.msra.mxu0 0
        %3775 = vmatpush.bf16.xpose.msra.mxu0 0
        %3776 = vmatpush.bf16.xpose.msra.mxu0 0
        %3777 = vmatpush.bf16.xpose.msra.mxu0 0
        %3778 = vmatpush.bf16.xpose.msra.mxu0 %v3770
        %3779 = vmatpush.bf16.xpose.msra.mxu0 %v3767
        %3780 = vmatmul.bf16.gmra.mxu0 %v3764
        %v3781 = vpop.f32.mrf.mxu0
        %v3782 = vadd.f32 %v3669, %v3781
        %v3783 = vpop.f32.mrf.mxu0
        %v3784 = vadd.f32 %v3670, %v3783
        %3785 = vdwg.mxu0
        %v3788 = vunpack.c.l.b16 %v3667
        %v3789 = vunpack.c.l.b16 %v3668
        %v3790 = vpack.c.b16 %v3789, %v3788
        %v3795 = vunpack.c.l.b16 %v3293
        %v3796 = vunpack.c.l.b16 %v3294
        %v3797 = vunpack.c.l.b16 %v3295
        %v3798 = vunpack.c.l.b16 %v3296
        %v3799 = vpack.c.b16 %v3796, %v3795
        %v3800 = vpack.c.b16 %v3798, %v3797
        %v3802 = vsel %vm3686, %v3790, 0
        %v3805 = vsel %vm3686, %v3799, 0
        %v3808 = vsel %vm3686, %v3800, 0
        %3810 = vmatpush.bf16.xpose.msra.mxu0 0
        %3811 = vmatpush.bf16.xpose.msra.mxu0 0
        %3812 = vmatpush.bf16.xpose.msra.mxu0 0
        %3813 = vmatpush.bf16.xpose.msra.mxu0 0
        %3814 = vmatpush.bf16.xpose.msra.mxu0 0
        %3815 = vmatpush.bf16.xpose.msra.mxu0 0
        %3816 = vmatpush.bf16.xpose.msra.mxu0 %v3808
        %3817 = vmatpush.bf16.xpose.msra.mxu0 %v3805
        %3818 = vmatmul.bf16.gmra.mxu0 %v3802
        %v3819 = vpop.f32.mrf.mxu0
        %v3820 = vadd.f32 %v3669, %v3819
        %v3821 = vpop.f32.mrf.mxu0
        %v3822 = vadd.f32 %v3670, %v3821
        %3823 = vdwg.mxu0
        %v3824 = vsel %vm3686, %v3706, -inf
        %3825 = vmax.xlane.f32.xlu0 %v3824
        %v3826 = vpop.xlane.xlu0 %3825
        %v3827 = vsel %vm3686, %v3708, -inf
        %3828 = vmax.xlane.f32.xlu0 %v3827
        %v3829 = vpop.xlane.xlu0 %3828
        %v3830 = vsel %vm3686, %v3744, -inf
        %3831 = vmax.xlane.f32.xlu0 %v3830
        %v3832 = vpop.xlane.xlu0 %3831
        %v3833 = vsel %vm3686, %v3746, -inf
        %3834 = vmax.xlane.f32.xlu0 %v3833
        %v3835 = vpop.xlane.xlu0 %3834
        %v3836 = vsel %vm3686, %v3782, -inf
        %3837 = vmax.xlane.f32.xlu0 %v3836
        %v3838 = vpop.xlane.xlu0 %3837
        %v3839 = vsel %vm3686, %v3784, -inf
        %3840 = vmax.xlane.f32.xlu0 %v3839
        %v3841 = vpop.xlane.xlu0 %3840
        %v3842 = vsel %vm3686, %v3820, -inf
        %3843 = vmax.xlane.f32.xlu0 %v3842
        %v3844 = vpop.xlane.xlu0 %3843
        %v3845 = vsel %vm3686, %v3822, -inf
        %3846 = vmax.xlane.f32.xlu0 %v3845
        %v3847 = vpop.xlane.xlu0 %3846
        %v3848 = vsub.f32 %v3706, %v3826
        %v3849 = vsub.f32 %v3708, %v3829
        %v3850 = vsub.f32 %v3744, %v3832
        %v3851 = vsub.f32 %v3746, %v3835
        %v3852 = vsub.f32 %v3782, %v3838
        %v3853 = vsub.f32 %v3784, %v3841
        %v3854 = vsub.f32 %v3820, %v3844
        %v3855 = vsub.f32 %v3822, %v3847
        %v3856 = vmul.f32 %v3848, 1.442695
        %v3857 = vpow.pop %v3856
        %v3858 = vmul.f32 %v3849, 1.442695
        %v3859 = vpow.pop %v3858
        %v3860 = vmul.f32 %v3850, 1.442695
        %v3861 = vpow.pop %v3860
        %v3862 = vmul.f32 %v3851, 1.442695
        %v3863 = vpow.pop %v3862
        %v3864 = vmul.f32 %v3852, 1.442695
        %v3865 = vpow.pop %v3864
        %v3866 = vmul.f32 %v3853, 1.442695
        %v3867 = vpow.pop %v3866
        %v3868 = vmul.f32 %v3854, 1.442695
        %v3869 = vpow.pop %v3868
        %v3870 = vmul.f32 %v3855, 1.442695
        %v3871 = vpow.pop %v3870
        %v3872 = vsel %vm3686, %v3857, 0.0
        %3873 = vadd.xlane.f32.xlu0 %v3872
        %v3874 = vpop.xlane.xlu0 %3873
        %v3875 = vsel %vm3686, %v3859, 0.0
        %3876 = vadd.xlane.f32.xlu0 %v3875
        %v3877 = vpop.xlane.xlu0 %3876
        %v3878 = vsel %vm3686, %v3861, 0.0
        %3879 = vadd.xlane.f32.xlu0 %v3878
        %v3880 = vpop.xlane.xlu0 %3879
        %v3881 = vsel %vm3686, %v3863, 0.0
        %3882 = vadd.xlane.f32.xlu0 %v3881
        %v3883 = vpop.xlane.xlu0 %3882
        %v3884 = vsel %vm3686, %v3865, 0.0
        %3885 = vadd.xlane.f32.xlu0 %v3884
        %v3886 = vpop.xlane.xlu0 %3885
        %v3887 = vsel %vm3686, %v3867, 0.0
        %3888 = vadd.xlane.f32.xlu0 %v3887
        %v3889 = vpop.xlane.xlu0 %3888
        %v3890 = vsel %vm3686, %v3869, 0.0
        %3891 = vadd.xlane.f32.xlu0 %v3890
        %v3892 = vpop.xlane.xlu0 %3891
        %v3893 = vsel %vm3686, %v3871, 0.0
        %3894 = vadd.xlane.f32.xlu0 %v3893
        %v3895 = vpop.xlane.xlu0 %3894
        %v3896 = vrcp.pop %v3874
        %v3897 = vrcp.pop %v3877
        %v3898 = vrcp.pop %v3880
        %v3899 = vrcp.pop %v3883
        %v3900 = vrcp.pop %v3886
        %v3901 = vrcp.pop %v3889
        %v3902 = vrcp.pop %v3892
        %v3903 = vrcp.pop %v3895
        %v3904 = vmul.f32 %v3857, %v3896
        %v3905 = vmul.f32 %v3859, %v3897
        %v3906 = vmul.f32 %v3861, %v3898
        %v3907 = vmul.f32 %v3863, %v3899
        %v3908 = vmul.f32 %v3865, %v3900
        %v3909 = vmul.f32 %v3867, %v3901
        %v3910 = vmul.f32 %v3869, %v3902
        %v3911 = vmul.f32 %v3871, %v3903
        %v3912 = vpack.c.bf16 %v3904, %v3904
        %v3913 = vpack.c.bf16 %v3905, %v3905
        %v3914 = vpack.c.bf16 %v3906, %v3906
        %v3915 = vpack.c.bf16 %v3907, %v3907
        %v3916 = vpack.c.bf16 %v3908, %v3908
        %v3917 = vpack.c.bf16 %v3909, %v3909
        %v3918 = vpack.c.bf16 %v3910, %v3910
        %v3919 = vpack.c.bf16 %v3911, %v3911
        %v3922 = vunpack.c.l.b16 %v3912
        %v3923 = vunpack.c.l.b16 %v3913
        %v3924 = vpack.c.b16 %v3923, %v3922
        %v3929 = vunpack.c.l.b16 %v3297
        %v3930 = vunpack.c.l.b16 %v3298
        %v3931 = vunpack.c.l.b16 %v3299
        %v3932 = vunpack.c.l.b16 %v3300
        %v3933 = vpack.c.b16 %v3930, %v3929
        %v3934 = vpack.c.b16 %v3932, %v3931
        %v3938 = vsel %vm3686, %v3924, 0
        %3940 = vmatpush.bf16.msra.mxu0 0
        %3941 = vmatpush.bf16.msra.mxu0 0
        %3942 = vmatpush.bf16.msra.mxu0 0
        %3943 = vmatpush.bf16.msra.mxu0 0
        %3944 = vmatpush.bf16.msra.mxu0 0
        %3945 = vmatpush.bf16.msra.mxu0 0
        %3946 = vmatpush.bf16.msra.mxu0 %v3934
        %3947 = vmatpush.bf16.msra.mxu0 %v3933
        %3948 = vmatmul.bf16.gmra.mxu0 %v3938
        %v3949 = vpop.f32.mrf.mxu0
        %v3950 = vadd.f32 0.0, %v3949
        %v3951 = vpop.f32.mrf.mxu0
        %v3952 = vadd.f32 0.0, %v3951
        %3953 = vdwg.mxu0
        %v3956 = vunpack.c.l.b16 %v3914
        %v3957 = vunpack.c.l.b16 %v3915
        %v3958 = vpack.c.b16 %v3957, %v3956
        %v3963 = vunpack.c.l.b16 %v3301
        %v3964 = vunpack.c.l.b16 %v3302
        %v3965 = vunpack.c.l.b16 %v3303
        %v3966 = vunpack.c.l.b16 %v3304
        %v3967 = vpack.c.b16 %v3964, %v3963
        %v3968 = vpack.c.b16 %v3966, %v3965
        %v3972 = vsel %vm3686, %v3958, 0
        %3974 = vmatpush.bf16.msra.mxu0 0
        %3975 = vmatpush.bf16.msra.mxu0 0
        %3976 = vmatpush.bf16.msra.mxu0 0
        %3977 = vmatpush.bf16.msra.mxu0 0
        %3978 = vmatpush.bf16.msra.mxu0 0
        %3979 = vmatpush.bf16.msra.mxu0 0
        %3980 = vmatpush.bf16.msra.mxu0 %v3968
        %3981 = vmatpush.bf16.msra.mxu0 %v3967
        %3982 = vmatmul.bf16.gmra.mxu0 %v3972
        %v3983 = vpop.f32.mrf.mxu0
        %v3984 = vadd.f32 0.0, %v3983
        %v3985 = vpop.f32.mrf.mxu0
        %v3986 = vadd.f32 0.0, %v3985
        %3987 = vdwg.mxu0
        %v3990 = vunpack.c.l.b16 %v3916
        %v3991 = vunpack.c.l.b16 %v3917
        %v3992 = vpack.c.b16 %v3991, %v3990
        %v3997 = vunpack.c.l.b16 %v3305
        %v3998 = vunpack.c.l.b16 %v3306
        %v3999 = vunpack.c.l.b16 %v3307
        %v4000 = vunpack.c.l.b16 %v3308
        %v4001 = vpack.c.b16 %v3998, %v3997
        %v4002 = vpack.c.b16 %v4000, %v3999
        %v4006 = vsel %vm3686, %v3992, 0
        %4008 = vmatpush.bf16.msra.mxu0 0
        %4009 = vmatpush.bf16.msra.mxu0 0
        %4010 = vmatpush.bf16.msra.mxu0 0
        %4011 = vmatpush.bf16.msra.mxu0 0
        %4012 = vmatpush.bf16.msra.mxu0 0
        %4013 = vmatpush.bf16.msra.mxu0 0
        %4014 = vmatpush.bf16.msra.mxu0 %v4002
        %4015 = vmatpush.bf16.msra.mxu0 %v4001
        %4016 = vmatmul.bf16.gmra.mxu0 %v4006
        %v4017 = vpop.f32.mrf.mxu0
        %v4018 = vadd.f32 0.0, %v4017
        %v4019 = vpop.f32.mrf.mxu0
        %v4020 = vadd.f32 0.0, %v4019
        %4021 = vdwg.mxu0
        %v4024 = vunpack.c.l.b16 %v3918
        %v4025 = vunpack.c.l.b16 %v3919
        %v4026 = vpack.c.b16 %v4025, %v4024
        %v4031 = vunpack.c.l.b16 %v3309
        %v4032 = vunpack.c.l.b16 %v3310
        %v4033 = vunpack.c.l.b16 %v3311
        %v4034 = vunpack.c.l.b16 %v3312
        %v4035 = vpack.c.b16 %v4032, %v4031
        %v4036 = vpack.c.b16 %v4034, %v4033
        %v4040 = vsel %vm3686, %v4026, 0
        %4042 = vmatpush.bf16.msra.mxu0 0
        %4043 = vmatpush.bf16.msra.mxu0 0
        %4044 = vmatpush.bf16.msra.mxu0 0
        %4045 = vmatpush.bf16.msra.mxu0 0
        %4046 = vmatpush.bf16.msra.mxu0 0
        %4047 = vmatpush.bf16.msra.mxu0 0
        %4048 = vmatpush.bf16.msra.mxu0 %v4036
        %4049 = vmatpush.bf16.msra.mxu0 %v4035
        %4050 = vmatmul.bf16.gmra.mxu0 %v4040
        %v4051 = vpop.f32.mrf.mxu0
        %v4052 = vadd.f32 0.0, %v4051
        %v4053 = vpop.f32.mrf.mxu0
        %v4054 = vadd.f32 0.0, %v4053
        %4055 = vdwg.mxu0
        %v4056 = vrot.slane %v4018, 4
        %v4057 = vsel %vm3441, %v4056, %v3950
        %v4058 = vrot.slane %v3950, 4
        %v4059 = vsel %vm3441, %v4018, %v4058
        %v4061 = vunpack.c.l.s4 1983009808
        %v4062 = vunpack.c.0.s8 %v4061
        %v4063 = vperm.slane %v4057, %v4062
        %v4065 = vunpack.c.l.s4 1983009808
        %v4066 = vunpack.c.0.s8 %v4065
        %v4067 = vperm.slane %v4059, %v4066
        %v4068 = vrot.slane %v4052, 4
        %v4069 = vsel %vm3441, %v4068, %v3984
        %v4070 = vrot.slane %v3984, 4
        %v4071 = vsel %vm3441, %v4052, %v4070
        %v4073 = vunpack.c.l.s4 1983009808
        %v4074 = vunpack.c.0.s8 %v4073
        %v4075 = vperm.slane %v4069, %v4074
        %v4077 = vunpack.c.l.s4 1983009808
        %v4078 = vunpack.c.0.s8 %v4077
        %v4079 = vperm.slane %v4071, %v4078
        %v4080 = vrot.slane %v4075, 4
        %v4081 = vsel %vm3441, %v4080, %v4063
        %v4082 = vrot.slane %v4063, 4
        %v4083 = vsel %vm3441, %v4075, %v4082
        %v4085 = vunpack.c.l.s4 1934713408
        %v4086 = vunpack.c.0.s8 %v4085
        %v4087 = vperm.slane %v4081, %v4086
        %v4089 = vunpack.c.l.s4 1934713408
        %v4090 = vunpack.c.0.s8 %v4089
        %v4091 = vperm.slane %v4083, %v4090
        %v4092 = vrot.slane %v4079, 4
        %v4093 = vsel %vm3441, %v4092, %v4067
        %v4094 = vrot.slane %v4067, 4
        %v4095 = vsel %vm3441, %v4079, %v4094
        %v4097 = vunpack.c.l.s4 1934713408
        %v4098 = vunpack.c.0.s8 %v4097
        %v4099 = vperm.slane %v4093, %v4098
        %v4101 = vunpack.c.l.s4 1934713408
        %v4102 = vunpack.c.0.s8 %v4101
        %v4103 = vperm.slane %v4095, %v4102
        %v4104 = vrot.slane %v4087, 4
        %v4105 = vsel %vm3441, 0.0, %v4104
        %v4106 = vrot.slane %v4091, 4
        %v4107 = vsel %vm3441, 0.0, %v4106
        %v4108 = vrot.slane %v4099, 4
        %v4109 = vsel %vm3441, 0.0, %v4108
        %v4110 = vrot.slane %v4103, 4
        %v4111 = vsel %vm3441, 0.0, %v4110
        %v4112 = vrot.slane %v4020, 4
        %v4113 = vsel %vm3441, %v4112, %v3952
        %v4114 = vrot.slane %v3952, 4
        %v4115 = vsel %vm3441, %v4020, %v4114
        %v4117 = vunpack.c.l.s4 1983009808
        %v4118 = vunpack.c.0.s8 %v4117
        %v4119 = vperm.slane %v4113, %v4118
        %v4121 = vunpack.c.l.s4 1983009808
        %v4122 = vunpack.c.0.s8 %v4121
        %v4123 = vperm.slane %v4115, %v4122
        %v4124 = vrot.slane %v4054, 4
        %v4125 = vsel %vm3441, %v4124, %v3986
        %v4126 = vrot.slane %v3986, 4
        %v4127 = vsel %vm3441, %v4054, %v4126
        %v4129 = vunpack.c.l.s4 1983009808
        %v4130 = vunpack.c.0.s8 %v4129
        %v4131 = vperm.slane %v4125, %v4130
        %v4133 = vunpack.c.l.s4 1983009808
        %v4134 = vunpack.c.0.s8 %v4133
        %v4135 = vperm.slane %v4127, %v4134
        %v4136 = vrot.slane %v4131, 4
        %v4137 = vsel %vm3441, %v4136, %v4119
        %v4138 = vrot.slane %v4119, 4
        %v4139 = vsel %vm3441, %v4131, %v4138
        %v4141 = vunpack.c.l.s4 1934713408
        %v4142 = vunpack.c.0.s8 %v4141
        %v4143 = vperm.slane %v4137, %v4142
        %v4145 = vunpack.c.l.s4 1934713408
        %v4146 = vunpack.c.0.s8 %v4145
        %v4147 = vperm.slane %v4139, %v4146
        %v4148 = vrot.slane %v4135, 4
        %v4149 = vsel %vm3441, %v4148, %v4123
        %v4150 = vrot.slane %v4123, 4
        %v4151 = vsel %vm3441, %v4135, %v4150
        %v4153 = vunpack.c.l.s4 1934713408
        %v4154 = vunpack.c.0.s8 %v4153
        %v4155 = vperm.slane %v4149, %v4154
        %v4157 = vunpack.c.l.s4 1934713408
        %v4158 = vunpack.c.0.s8 %v4157
        %v4159 = vperm.slane %v4151, %v4158
        %v4160 = vrot.slane %v4143, 4
        %v4161 = vsel %vm3441, 0.0, %v4160
        %v4162 = vrot.slane %v4147, 4
        %v4163 = vsel %vm3441, 0.0, %v4162
        %v4164 = vrot.slane %v4155, 4
        %v4165 = vsel %vm3441, 0.0, %v4164
        %v4166 = vrot.slane %v4159, 4
        %v4167 = vsel %vm3441, 0.0, %v4166
        %v4168 = vsel %vm3441, %v4106, %v4087
        %v4170 = vunpack.c.l.s4 1983009808
        %v4171 = vunpack.c.0.s8 %v4170
        %v4172 = vperm.slane %v4168, %v4171
        %v4173 = vrot.slane %v4107, 4
        %v4174 = vsel %vm3441, %v4173, %v4105
        %v4176 = vunpack.c.l.s4 1983009808
        %v4177 = vunpack.c.0.s8 %v4176
        %v4178 = vperm.slane %v4174, %v4177
        %v4179 = vsel %vm3441, %v4110, %v4099
        %v4181 = vunpack.c.l.s4 1983009808
        %v4182 = vunpack.c.0.s8 %v4181
        %v4183 = vperm.slane %v4179, %v4182
        %v4184 = vrot.slane %v4111, 4
        %v4185 = vsel %vm3441, %v4184, %v4109
        %v4187 = vunpack.c.l.s4 1983009808
        %v4188 = vunpack.c.0.s8 %v4187
        %v4189 = vperm.slane %v4185, %v4188
        %v4190 = vrot.slane %v4178, 4
        %v4191 = vsel %vm3441, %v4190, %v4172
        %v4192 = vrot.slane %v4172, 4
        %v4193 = vsel %vm3441, %v4178, %v4192
        %v4195 = vunpack.c.l.s4 1934713408
        %v4196 = vunpack.c.0.s8 %v4195
        %v4197 = vperm.slane %v4191, %v4196
        %v4199 = vunpack.c.l.s4 1934713408
        %v4200 = vunpack.c.0.s8 %v4199
        %v4201 = vperm.slane %v4193, %v4200
        %v4202 = vrot.slane %v4189, 4
        %v4203 = vsel %vm3441, %v4202, %v4183
        %v4204 = vrot.slane %v4183, 4
        %v4205 = vsel %vm3441, %v4189, %v4204
        %v4207 = vunpack.c.l.s4 1934713408
        %v4208 = vunpack.c.0.s8 %v4207
        %v4209 = vperm.slane %v4203, %v4208
        %v4211 = vunpack.c.l.s4 1934713408
        %v4212 = vunpack.c.0.s8 %v4211
        %v4213 = vperm.slane %v4205, %v4212
        %v4214 = vrot.slane %v4209, 4
        %v4215 = vsel %vm3441, %v4214, %v4197
        %v4216 = vrot.slane %v4197, 4
        %v4217 = vsel %vm3441, %v4209, %v4216
        %v4218 = vrot.slane %v4213, 4
        %v4219 = vsel %vm3441, %v4218, %v4201
        %v4220 = vrot.slane %v4201, 4
        %v4221 = vsel %vm3441, %v4213, %v4220
        %v4222 = vsel %vm3441, %v4162, %v4143
        %v4224 = vunpack.c.l.s4 1983009808
        %v4225 = vunpack.c.0.s8 %v4224
        %v4226 = vperm.slane %v4222, %v4225
        %v4227 = vrot.slane %v4163, 4
        %v4228 = vsel %vm3441, %v4227, %v4161
        %v4230 = vunpack.c.l.s4 1983009808
        %v4231 = vunpack.c.0.s8 %v4230
        %v4232 = vperm.slane %v4228, %v4231
        %v4233 = vsel %vm3441, %v4166, %v4155
        %v4235 = vunpack.c.l.s4 1983009808
        %v4236 = vunpack.c.0.s8 %v4235
        %v4237 = vperm.slane %v4233, %v4236
        %v4238 = vrot.slane %v4167, 4
        %v4239 = vsel %vm3441, %v4238, %v4165
        %v4241 = vunpack.c.l.s4 1983009808
        %v4242 = vunpack.c.0.s8 %v4241
        %v4243 = vperm.slane %v4239, %v4242
        %v4244 = vrot.slane %v4232, 4
        %v4245 = vsel %vm3441, %v4244, %v4226
        %v4246 = vrot.slane %v4226, 4
        %v4247 = vsel %vm3441, %v4232, %v4246
        %v4249 = vunpack.c.l.s4 1934713408
        %v4250 = vunpack.c.0.s8 %v4249
        %v4251 = vperm.slane %v4245, %v4250
        %v4253 = vunpack.c.l.s4 1934713408
        %v4254 = vunpack.c.0.s8 %v4253
        %v4255 = vperm.slane %v4247, %v4254
        %v4256 = vrot.slane %v4243, 4
        %v4257 = vsel %vm3441, %v4256, %v4237
        %v4258 = vrot.slane %v4237, 4
        %v4259 = vsel %vm3441, %v4243, %v4258
        %v4261 = vunpack.c.l.s4 1934713408
        %v4262 = vunpack.c.0.s8 %v4261
        %v4263 = vperm.slane %v4257, %v4262
        %v4265 = vunpack.c.l.s4 1934713408
        %v4266 = vunpack.c.0.s8 %v4265
        %v4267 = vperm.slane %v4259, %v4266
        %v4268 = vrot.slane %v4263, 4
        %v4269 = vsel %vm3441, %v4268, %v4251
        %v4270 = vrot.slane %v4251, 4
        %v4271 = vsel %vm3441, %v4263, %v4270
        %v4272 = vrot.slane %v4267, 4
        %v4273 = vsel %vm3441, %v4272, %v4255
        %v4274 = vrot.slane %v4255, 4
        %v4275 = vsel %vm3441, %v4267, %v4274
        %4278 = vrot.lane.b32.xlu0 %v4217, 32
        %v4279 = vpop.permute.xlu0 %4278
        %4280 = vrot.lane.b32.xlu0 %v4271, 32
        %v4281 = vpop.permute.xlu0 %4280
        %4286 = vrot.lane.b32.xlu0 %v4219, 64
        %v4287 = vpop.permute.xlu0 %4286
        %4288 = vrot.lane.b32.xlu0 %v4273, 64
        %v4289 = vpop.permute.xlu0 %4288
        %4294 = vrot.lane.b32.xlu0 %v4221, 96
        %v4295 = vpop.permute.xlu0 %4294
        %4296 = vrot.lane.b32.xlu0 %v4275, 96
        %v4297 = vpop.permute.xlu0 %4296
        %v4300 = vsel %vm3686, %v4215, %v4279
        %v4301 = vsel %vm3686, %v4269, %v4281
        %vm4302 = vcmask 523264
        %v4303 = vsel %vm4302, %v4300, %v4287
        %v4304 = vsel %vm4302, %v4301, %v4289
        %vm4305 = vcmask 785408
        %v4306 = vsel %vm4305, %v4303, %v4295
        %v4307 = vsel %vm4305, %v4304, %v4297
        %v4308 = vpack.c.bf16 %v4307, %v4306
        %v4310 = vperm.slane %v3348, 0
        %v4328 = vunpack.c.l.b16 %v3332
        %v4329 = vunpack.c.l.b16 %v3333
        %v4330 = vunpack.c.l.b16 %v3334
        %v4331 = vunpack.c.l.b16 %v3335
        %v4332 = vunpack.c.l.b16 %v3336
        %v4333 = vunpack.c.l.b16 %v3337
        %v4334 = vunpack.c.l.b16 %v3338
        %v4335 = vunpack.c.l.b16 %v3339
        %v4336 = vunpack.c.l.b16 %v3340
        %v4337 = vunpack.c.l.b16 %v3341
        %v4338 = vunpack.c.l.b16 %v3342
        %v4339 = vunpack.c.l.b16 %v3343
        %v4340 = vunpack.c.l.b16 %v3344
        %v4341 = vunpack.c.l.b16 %v3345
        %v4342 = vunpack.c.l.b16 %v3346
        %v4343 = vunpack.c.l.b16 %v3347
        %v4344 = vpack.c.b16 %v4329, %v4328
        %v4345 = vpack.c.b16 %v4331, %v4330
        %v4346 = vpack.c.b16 %v4333, %v4332
        %v4347 = vpack.c.b16 %v4335, %v4334
        %v4348 = vpack.c.b16 %v4337, %v4336
        %v4349 = vpack.c.b16 %v4339, %v4338
        %v4350 = vpack.c.b16 %v4341, %v4340
        %v4351 = vpack.c.b16 %v4343, %v4342
        %4360 = vmatpush.bf16.msra.mxu0 %v4351
        %4361 = vmatpush.bf16.msra.mxu0 %v4350
        %4362 = vmatpush.bf16.msra.mxu0 %v4349
        %4363 = vmatpush.bf16.msra.mxu0 %v4348
        %4364 = vmatpush.bf16.msra.mxu0 %v4347
        %4365 = vmatpush.bf16.msra.mxu0 %v4346
        %4366 = vmatpush.bf16.msra.mxu0 %v4345
        %4367 = vmatpush.bf16.msra.mxu0 %v4344
        %4368 = vmatmul.bf16.gmra.mxu0 %v4308
        %v4369 = vpop.f32.mrf.mxu0
        %v4370 = vadd.f32 %v4310, %v4369
        %v4371 = vpop.f32.mrf.mxu0
        %v4372 = vadd.f32 %v4310, %v4371
        %4373 = vdwg.mxu0
        %v4374 = vadd.f32 %v3279, %v4370
        %v4375 = vadd.f32 %v3280, %v4372
        %v4376 = vld [vmem:[#allocation24] sm:$0x1]
        %v4377 = vld [vmem:[#allocation26] sm:$0x1]
        %4378 = vadd.xlane.f32.xlu0 %v4374
        %v4379 = vpop.xlane.xlu0 %4378
        %4380 = vadd.xlane.f32.xlu0 %v4375
        %v4381 = vpop.xlane.xlu0 %4380
        %v4382 = vrcp.pop 128.0
        %v4383 = vmul.f32 128.0, %v4382
        %v4384 = vsub.f32 1.0, %v4383
        %v4385 = vmul.f32 %v4382, %v4384
        %v4386 = vadd.f32 %v4382, %v4385
        %vm4387 = vweird.f32 %v4382
        %v4388 = vsel %vm4387, %v4382, %v4386
        %v4389 = vmul.f32 %v4379, %v4388
        %v4390 = vmul.f32 %v4381, %v4388
        %v4391 = vsub.f32 %v4374, %v4389
        %v4392 = vsub.f32 %v4375, %v4390
        %v4393 = vmul.f32 %v4391, %v4391
        %v4394 = vmul.f32 %v4392, %v4392
        %4395 = vadd.xlane.f32.xlu0 %v4393
        %v4396 = vpop.xlane.xlu0 %4395
        %4397 = vadd.xlane.f32.xlu0 %v4394
        %v4398 = vpop.xlane.xlu0 %4397
        %v4399 = vmul.f32 %v4396, %v4388
        %v4400 = vmul.f32 %v4398, %v4388
        %v4401 = vadd.f32 %v4399, 1e-12
        %v4402 = vadd.f32 %v4400, 1e-12
        %v4403 = vrsqrt.pop %v4401
        %v4404 = vmul.f32 %v4403, %v4401
        %v4405 = vmul.f32 %v4404, %v4403
        %v4406 = vmul.f32 0.5, %v4405
        %v4407 = vsub.f32 1.5, %v4406
        %v4408 = vmul.f32 %v4403, %v4407
        %vm4409 = vweird.f32 %v4401
        %vm4410 = vweird.f32 %v4403
        %vm4411 = vmor %vm4409, %vm4410
        %v4412 = vsel %vm4411, %v4403, %v4408
        %v4413 = vrsqrt.pop %v4402
        %v4414 = vmul.f32 %v4413, %v4402
        %v4415 = vmul.f32 %v4414, %v4413
        %v4416 = vmul.f32 0.5, %v4415
        %v4417 = vsub.f32 1.5, %v4416
        %v4418 = vmul.f32 %v4413, %v4417
        %vm4419 = vweird.f32 %v4402
        %vm4420 = vweird.f32 %v4413
        %vm4421 = vmor %vm4419, %vm4420
        %v4422 = vsel %vm4421, %v4413, %v4418
        %v4423 = vmul.f32 %v4391, %v4412
        %v4424 = vmul.f32 %v4392, %v4422
        %v4426 = vperm.slane %v4376, 0
        %v4428 = vmul.f32 %v4423, %v4426
        %v4429 = vmul.f32 %v4424, %v4426
        %v4431 = vperm.slane %v4377, 0
        %v4433 = vadd.f32 %v4428, %v4431
        %v4434 = vadd.f32 %v4429, %v4431
        %v4435 = vpack.c.bf16 %v4434, %v4433
        %v4436 = vld [vmem:[#allocation4] sm:$0xf]
        %v4437 = vld [vmem:[#allocation4 + $0x4] sm:$0xf]
        %v4438 = vld [vmem:[#allocation4 + $0x8] sm:$0xf]
        %v4439 = vld [vmem:[#allocation4 + $0xc] sm:$0xf]
        %v4440 = vld [vmem:[#allocation4 + $0x10] sm:$0xf]
        %v4441 = vld [vmem:[#allocation4 + $0x14] sm:$0xf]
        %v4442 = vld [vmem:[#allocation4 + $0x18] sm:$0xf]
        %v4443 = vld [vmem:[#allocation4 + $0x1c] sm:$0xf]
        %v4444 = vld [vmem:[#allocation5] sm:$0xf]
        %v4445 = vld [vmem:[#allocation5 + $0x4] sm:$0xf]
        %v4446 = vld [vmem:[#allocation5 + $0x8] sm:$0xf]
        %v4447 = vld [vmem:[#allocation5 + $0xc] sm:$0xf]
        %v4448 = vld [vmem:[#allocation5 + $0x10] sm:$0xf]
        %v4449 = vld [vmem:[#allocation5 + $0x14] sm:$0xf]
        %v4450 = vld [vmem:[#allocation5 + $0x18] sm:$0xf]
        %v4451 = vld [vmem:[#allocation5 + $0x1c] sm:$0xf]
        %v4452 = vld [vmem:[%s1364] sm:$0xf]
        %v4453 = vld [vmem:[%s1364 + $0x4] sm:$0xf]
        %v4454 = vld [vmem:[#allocation27] sm:$0xf]
        %v4455 = vld [vmem:[#allocation27 + $0x4] sm:$0xf]
        %v4456 = vld [vmem:[#allocation27 + $0x8] sm:$0xf]
        %v4457 = vld [vmem:[#allocation27 + $0xc] sm:$0xf]
        %v4458 = vld [vmem:[#allocation27 + $0x10] sm:$0xf]
        %v4459 = vld [vmem:[#allocation27 + $0x14] sm:$0xf]
        %v4460 = vld [vmem:[#allocation27 + $0x18] sm:$0xf]
        %v4461 = vld [vmem:[#allocation27 + $0x1c] sm:$0xf]
        %v4462 = vld [vmem:[#allocation27 + $0x20] sm:$0xf]
        %v4463 = vld [vmem:[#allocation27 + $0x24] sm:$0xf]
        %v4464 = vld [vmem:[#allocation27 + $0x28] sm:$0xf]
        %v4465 = vld [vmem:[#allocation27 + $0x2c] sm:$0xf]
        %v4466 = vld [vmem:[#allocation27 + $0x30] sm:$0xf]
        %v4467 = vld [vmem:[#allocation27 + $0x34] sm:$0xf]
        %v4468 = vld [vmem:[#allocation27 + $0x38] sm:$0xf]
        %v4469 = vld [vmem:[#allocation27 + $0x3c] sm:$0xf]
        %v4470 = vld [vmem:[#allocation29] sm:$0x1]
        %v4471 = vld [vmem:[#allocation35] sm:$0xf]
        %v4472 = vld [vmem:[#allocation35 + $0x4] sm:$0xf]
        %v4473 = vld [vmem:[#allocation35 + $0x8] sm:$0xf]
        %v4474 = vld [vmem:[#allocation35 + $0xc] sm:$0xf]
        %v4475 = vld [vmem:[#allocation35 + $0x10] sm:$0xf]
        %v4476 = vld [vmem:[#allocation35 + $0x14] sm:$0xf]
        %v4477 = vld [vmem:[#allocation35 + $0x18] sm:$0xf]
        %v4478 = vld [vmem:[#allocation35 + $0x1c] sm:$0xf]
        %v4479 = vld [vmem:[#allocation35 + $0x20] sm:$0xf]
        %v4480 = vld [vmem:[#allocation35 + $0x24] sm:$0xf]
        %v4481 = vld [vmem:[#allocation35 + $0x28] sm:$0xf]
        %v4482 = vld [vmem:[#allocation35 + $0x2c] sm:$0xf]
        %v4483 = vld [vmem:[#allocation35 + $0x30] sm:$0xf]
        %v4484 = vld [vmem:[#allocation35 + $0x34] sm:$0xf]
        %v4485 = vld [vmem:[#allocation35 + $0x38] sm:$0xf]
        %v4486 = vld [vmem:[#allocation35 + $0x3c] sm:$0xf]
        %v4487 = vld [vmem:[%s43] sm:$0x1]
        %v4489 = vperm.slane %v4470, 0
        %v4507 = vunpack.c.l.b16 %v4454
        %v4508 = vunpack.c.l.b16 %v4455
        %v4509 = vunpack.c.l.b16 %v4456
        %v4510 = vunpack.c.l.b16 %v4457
        %v4511 = vunpack.c.l.b16 %v4458
        %v4512 = vunpack.c.l.b16 %v4459
        %v4513 = vunpack.c.l.b16 %v4460
        %v4514 = vunpack.c.l.b16 %v4461
        %v4515 = vunpack.c.l.b16 %v4462
        %v4516 = vunpack.c.l.b16 %v4463
        %v4517 = vunpack.c.l.b16 %v4464
        %v4518 = vunpack.c.l.b16 %v4465
        %v4519 = vunpack.c.l.b16 %v4466
        %v4520 = vunpack.c.l.b16 %v4467
        %v4521 = vunpack.c.l.b16 %v4468
        %v4522 = vunpack.c.l.b16 %v4469
        %v4523 = vpack.c.b16 %v4508, %v4507
        %v4524 = vpack.c.b16 %v4510, %v4509
        %v4525 = vpack.c.b16 %v4512, %v4511
        %v4526 = vpack.c.b16 %v4514, %v4513
        %v4527 = vpack.c.b16 %v4516, %v4515
        %v4528 = vpack.c.b16 %v4518, %v4517
        %v4529 = vpack.c.b16 %v4520, %v4519
        %v4530 = vpack.c.b16 %v4522, %v4521
        %4539 = vmatpush.bf16.msra.mxu0 %v4530
        %4540 = vmatpush.bf16.msra.mxu0 %v4529
        %4541 = vmatpush.bf16.msra.mxu0 %v4528
        %4542 = vmatpush.bf16.msra.mxu0 %v4527
        %4543 = vmatpush.bf16.msra.mxu0 %v4526
        %4544 = vmatpush.bf16.msra.mxu0 %v4525
        %4545 = vmatpush.bf16.msra.mxu0 %v4524
        %4546 = vmatpush.bf16.msra.mxu0 %v4523
        %4547 = vmatmul.bf16.gmra.mxu0 %v4435
        %v4548 = vpop.f32.mrf.mxu0
        %v4549 = vadd.f32 %v4489, %v4548
        %v4550 = vpop.f32.mrf.mxu0
        %v4551 = vadd.f32 %v4489, %v4550
        %4552 = vdwg.mxu0
        %4555 = vrot.lane.b32.xlu0 %v4549, 96
        %v4556 = vpop.permute.xlu0 %4555
        %4557 = vrot.lane.b32.xlu0 %v4551, 96
        %v4558 = vpop.permute.xlu0 %4557
        %4561 = vrot.lane.b32.xlu0 %v4549, 64
        %v4562 = vpop.permute.xlu0 %4561
        %4563 = vrot.lane.b32.xlu0 %v4551, 64
        %v4564 = vpop.permute.xlu0 %4563
        %4567 = vrot.lane.b32.xlu0 %v4549, 32
        %v4568 = vpop.permute.xlu0 %4567
        %4569 = vrot.lane.b32.xlu0 %v4551, 32
        %v4570 = vpop.permute.xlu0 %4569
        %v4573 = vrot.slane %v4562, 4
        %v4574 = vsel %vm3441, %v4573, %v4549
        %v4575 = vrot.slane %v4549, 4
        %v4576 = vsel %vm3441, %v4562, %v4575
        %v4578 = vunpack.c.l.s4 1983009808
        %v4579 = vunpack.c.0.s8 %v4578
        %v4580 = vperm.slane %v4574, %v4579
        %v4582 = vunpack.c.l.s4 1983009808
        %v4583 = vunpack.c.0.s8 %v4582
        %v4584 = vperm.slane %v4576, %v4583
        %v4585 = vrot.slane %v4568, 4
        %v4586 = vsel %vm3441, %v4585, %v4556
        %v4587 = vrot.slane %v4556, 4
        %v4588 = vsel %vm3441, %v4568, %v4587
        %v4590 = vunpack.c.l.s4 1983009808
        %v4591 = vunpack.c.0.s8 %v4590
        %v4592 = vperm.slane %v4586, %v4591
        %v4594 = vunpack.c.l.s4 1983009808
        %v4595 = vunpack.c.0.s8 %v4594
        %v4596 = vperm.slane %v4588, %v4595
        %v4597 = vrot.slane %v4592, 4
        %v4598 = vsel %vm3441, %v4597, %v4580
        %v4599 = vrot.slane %v4580, 4
        %v4600 = vsel %vm3441, %v4592, %v4599
        %v4602 = vunpack.c.l.s4 1934713408
        %v4603 = vunpack.c.0.s8 %v4602
        %v4604 = vperm.slane %v4598, %v4603
        %v4606 = vunpack.c.l.s4 1934713408
        %v4607 = vunpack.c.0.s8 %v4606
        %v4608 = vperm.slane %v4600, %v4607
        %v4609 = vrot.slane %v4596, 4
        %v4610 = vsel %vm3441, %v4609, %v4584
        %v4611 = vrot.slane %v4584, 4
        %v4612 = vsel %vm3441, %v4596, %v4611
        %v4614 = vunpack.c.l.s4 1934713408
        %v4615 = vunpack.c.0.s8 %v4614
        %v4616 = vperm.slane %v4610, %v4615
        %v4618 = vunpack.c.l.s4 1934713408
        %v4619 = vunpack.c.0.s8 %v4618
        %v4620 = vperm.slane %v4612, %v4619
        %v4621 = vrot.slane %v4604, 4
        %v4622 = vsel %vm3441, 0.0, %v4621
        %v4623 = vrot.slane %v4608, 4
        %v4624 = vsel %vm3441, 0.0, %v4623
        %v4625 = vrot.slane %v4616, 4
        %v4626 = vsel %vm3441, 0.0, %v4625
        %v4627 = vrot.slane %v4620, 4
        %v4628 = vsel %vm3441, 0.0, %v4627
        %v4629 = vrot.slane %v4564, 4
        %v4630 = vsel %vm3441, %v4629, %v4551
        %v4631 = vrot.slane %v4551, 4
        %v4632 = vsel %vm3441, %v4564, %v4631
        %v4634 = vunpack.c.l.s4 1983009808
        %v4635 = vunpack.c.0.s8 %v4634
        %v4636 = vperm.slane %v4630, %v4635
        %v4638 = vunpack.c.l.s4 1983009808
        %v4639 = vunpack.c.0.s8 %v4638
        %v4640 = vperm.slane %v4632, %v4639
        %v4641 = vrot.slane %v4570, 4
        %v4642 = vsel %vm3441, %v4641, %v4558
        %v4643 = vrot.slane %v4558, 4
        %v4644 = vsel %vm3441, %v4570, %v4643
        %v4646 = vunpack.c.l.s4 1983009808
        %v4647 = vunpack.c.0.s8 %v4646
        %v4648 = vperm.slane %v4642, %v4647
        %v4650 = vunpack.c.l.s4 1983009808
        %v4651 = vunpack.c.0.s8 %v4650
        %v4652 = vperm.slane %v4644, %v4651
        %v4653 = vrot.slane %v4648, 4
        %v4654 = vsel %vm3441, %v4653, %v4636
        %v4655 = vrot.slane %v4636, 4
        %v4656 = vsel %vm3441, %v4648, %v4655
        %v4658 = vunpack.c.l.s4 1934713408
        %v4659 = vunpack.c.0.s8 %v4658
        %v4660 = vperm.slane %v4654, %v4659
        %v4662 = vunpack.c.l.s4 1934713408
        %v4663 = vunpack.c.0.s8 %v4662
        %v4664 = vperm.slane %v4656, %v4663
        %v4665 = vrot.slane %v4652, 4
        %v4666 = vsel %vm3441, %v4665, %v4640
        %v4667 = vrot.slane %v4640, 4
        %v4668 = vsel %vm3441, %v4652, %v4667
        %v4670 = vunpack.c.l.s4 1934713408
        %v4671 = vunpack.c.0.s8 %v4670
        %v4672 = vperm.slane %v4666, %v4671
        %v4674 = vunpack.c.l.s4 1934713408
        %v4675 = vunpack.c.0.s8 %v4674
        %v4676 = vperm.slane %v4668, %v4675
        %v4677 = vrot.slane %v4660, 4
        %v4678 = vsel %vm3441, 0.0, %v4677
        %v4679 = vrot.slane %v4664, 4
        %v4680 = vsel %vm3441, 0.0, %v4679
        %v4681 = vrot.slane %v4672, 4
        %v4682 = vsel %vm3441, 0.0, %v4681
        %v4683 = vrot.slane %v4676, 4
        %v4684 = vsel %vm3441, 0.0, %v4683
        %v4685 = vsel %vm3441, %v4623, %v4604
        %v4687 = vunpack.c.l.s4 1983009808
        %v4688 = vunpack.c.0.s8 %v4687
        %v4689 = vperm.slane %v4685, %v4688
        %v4690 = vrot.slane %v4624, 4
        %v4691 = vsel %vm3441, %v4690, %v4622
        %v4693 = vunpack.c.l.s4 1983009808
        %v4694 = vunpack.c.0.s8 %v4693
        %v4695 = vperm.slane %v4691, %v4694
        %v4696 = vsel %vm3441, %v4627, %v4616
        %v4698 = vunpack.c.l.s4 1983009808
        %v4699 = vunpack.c.0.s8 %v4698
        %v4700 = vperm.slane %v4696, %v4699
        %v4701 = vrot.slane %v4628, 4
        %v4702 = vsel %vm3441, %v4701, %v4626
        %v4704 = vunpack.c.l.s4 1983009808
        %v4705 = vunpack.c.0.s8 %v4704
        %v4706 = vperm.slane %v4702, %v4705
        %v4707 = vrot.slane %v4695, 4
        %v4708 = vsel %vm3441, %v4707, %v4689
        %v4709 = vrot.slane %v4689, 4
        %v4710 = vsel %vm3441, %v4695, %v4709
        %v4712 = vunpack.c.l.s4 1934713408
        %v4713 = vunpack.c.0.s8 %v4712
        %v4714 = vperm.slane %v4708, %v4713
        %v4716 = vunpack.c.l.s4 1934713408
        %v4717 = vunpack.c.0.s8 %v4716
        %v4718 = vperm.slane %v4710, %v4717
        %v4719 = vrot.slane %v4706, 4
        %v4720 = vsel %vm3441, %v4719, %v4700
        %v4721 = vrot.slane %v4700, 4
        %v4722 = vsel %vm3441, %v4706, %v4721
        %v4724 = vunpack.c.l.s4 1934713408
        %v4725 = vunpack.c.0.s8 %v4724
        %v4726 = vperm.slane %v4720, %v4725
        %v4728 = vunpack.c.l.s4 1934713408
        %v4729 = vunpack.c.0.s8 %v4728
        %v4730 = vperm.slane %v4722, %v4729
        %v4731 = vrot.slane %v4726, 4
        %v4732 = vsel %vm3441, %v4731, %v4714
        %v4733 = vrot.slane %v4714, 4
        %v4734 = vsel %vm3441, %v4726, %v4733
        %v4735 = vrot.slane %v4730, 4
        %v4736 = vsel %vm3441, %v4735, %v4718
        %v4737 = vrot.slane %v4718, 4
        %v4738 = vsel %vm3441, %v4730, %v4737
        %v4739 = vsel %vm3441, %v4679, %v4660
        %v4741 = vunpack.c.l.s4 1983009808
        %v4742 = vunpack.c.0.s8 %v4741
        %v4743 = vperm.slane %v4739, %v4742
        %v4744 = vrot.slane %v4680, 4
        %v4745 = vsel %vm3441, %v4744, %v4678
        %v4747 = vunpack.c.l.s4 1983009808
        %v4748 = vunpack.c.0.s8 %v4747
        %v4749 = vperm.slane %v4745, %v4748
        %v4750 = vsel %vm3441, %v4683, %v4672
        %v4752 = vunpack.c.l.s4 1983009808
        %v4753 = vunpack.c.0.s8 %v4752
        %v4754 = vperm.slane %v4750, %v4753
        %v4755 = vrot.slane %v4684, 4
        %v4756 = vsel %vm3441, %v4755, %v4682
        %v4758 = vunpack.c.l.s4 1983009808
        %v4759 = vunpack.c.0.s8 %v4758
        %v4760 = vperm.slane %v4756, %v4759
        %v4761 = vrot.slane %v4749, 4
        %v4762 = vsel %vm3441, %v4761, %v4743
        %v4763 = vrot.slane %v4743, 4
        %v4764 = vsel %vm3441, %v4749, %v4763
        %v4766 = vunpack.c.l.s4 1934713408
        %v4767 = vunpack.c.0.s8 %v4766
        %v4768 = vperm.slane %v4762, %v4767
        %v4770 = vunpack.c.l.s4 1934713408
        %v4771 = vunpack.c.0.s8 %v4770
        %v4772 = vperm.slane %v4764, %v4771
        %v4773 = vrot.slane %v4760, 4
        %v4774 = vsel %vm3441, %v4773, %v4754
        %v4775 = vrot.slane %v4754, 4
        %v4776 = vsel %vm3441, %v4760, %v4775
        %v4778 = vunpack.c.l.s4 1934713408
        %v4779 = vunpack.c.0.s8 %v4778
        %v4780 = vperm.slane %v4774, %v4779
        %v4782 = vunpack.c.l.s4 1934713408
        %v4783 = vunpack.c.0.s8 %v4782
        %v4784 = vperm.slane %v4776, %v4783
        %v4785 = vrot.slane %v4780, 4
        %v4786 = vsel %vm3441, %v4785, %v4768
        %v4787 = vrot.slane %v4768, 4
        %v4788 = vsel %vm3441, %v4780, %v4787
        %v4789 = vrot.slane %v4784, 4
        %v4790 = vsel %vm3441, %v4789, %v4772
        %v4791 = vrot.slane %v4772, 4
        %v4792 = vsel %vm3441, %v4784, %v4791
        %v4793 = vpack.c.bf16 %v4732, %v4732
        %v4794 = vpack.c.bf16 %v4786, %v4786
        %v4795 = vpack.c.bf16 %v4734, %v4734
        %v4796 = vpack.c.bf16 %v4788, %v4788
        %v4797 = vpack.c.bf16 %v4736, %v4736
        %v4798 = vpack.c.bf16 %v4790, %v4790
        %v4799 = vpack.c.bf16 %v4738, %v4738
        %v4800 = vpack.c.bf16 %v4792, %v4792
        %v4801 = vunpack.c.l.bf16 %v4452
        %v4802 = vunpack.c.l.bf16 %v4453
        %v4805 = vunpack.c.l.b16 %v4793
        %v4806 = vunpack.c.l.b16 %v4794
        %v4807 = vpack.c.b16 %v4806, %v4805
        %v4810 = vunpack.c.l.b16 %v4436
        %v4811 = vunpack.c.l.b16 %v4437
        %v4812 = vpack.c.b16 %v4811, %v4810
        %v4814 = vsel %vm3686, %v4807, 0
        %v4817 = vsel %vm3686, %v4812, 0
        %4819 = vmatpush.bf16.xpose.msra.mxu0 0
        %4820 = vmatpush.bf16.xpose.msra.mxu0 0
        %4821 = vmatpush.bf16.xpose.msra.mxu0 0
        %4822 = vmatpush.bf16.xpose.msra.mxu0 0
        %4823 = vmatpush.bf16.xpose.msra.mxu0 0
        %4824 = vmatpush.bf16.xpose.msra.mxu0 0
        %4825 = vmatpush.bf16.xpose.msra.mxu0 0
        %4826 = vmatpush.bf16.xpose.msra.mxu0 %v4817
        %4827 = vmatmul.bf16.gmra.mxu0 %v4814
        %v4828 = vpop.f32.mrf.mxu0
        %v4829 = vadd.f32 %v4801, %v4828
        %v4830 = vpop.f32.mrf.mxu0
        %v4831 = vadd.f32 %v4802, %v4830
        %4832 = vdwg.mxu0
        %v4835 = vunpack.c.l.b16 %v4795
        %v4836 = vunpack.c.l.b16 %v4796
        %v4837 = vpack.c.b16 %v4836, %v4835
        %v4840 = vunpack.c.l.b16 %v4438
        %v4841 = vunpack.c.l.b16 %v4439
        %v4842 = vpack.c.b16 %v4841, %v4840
        %v4844 = vsel %vm3686, %v4837, 0
        %v4847 = vsel %vm3686, %v4842, 0
        %4849 = vmatpush.bf16.xpose.msra.mxu0 0
        %4850 = vmatpush.bf16.xpose.msra.mxu0 0
        %4851 = vmatpush.bf16.xpose.msra.mxu0 0
        %4852 = vmatpush.bf16.xpose.msra.mxu0 0
        %4853 = vmatpush.bf16.xpose.msra.mxu0 0
        %4854 = vmatpush.bf16.xpose.msra.mxu0 0
        %4855 = vmatpush.bf16.xpose.msra.mxu0 0
        %4856 = vmatpush.bf16.xpose.msra.mxu0 %v4847
        %4857 = vmatmul.bf16.gmra.mxu0 %v4844
        %v4858 = vpop.f32.mrf.mxu0
        %v4859 = vadd.f32 %v4801, %v4858
        %v4860 = vpop.f32.mrf.mxu0
        %v4861 = vadd.f32 %v4802, %v4860
        %4862 = vdwg.mxu0
        %v4865 = vunpack.c.l.b16 %v4797
        %v4866 = vunpack.c.l.b16 %v4798
        %v4867 = vpack.c.b16 %v4866, %v4865
        %v4870 = vunpack.c.l.b16 %v4440
        %v4871 = vunpack.c.l.b16 %v4441
        %v4872 = vpack.c.b16 %v4871, %v4870
        %v4874 = vsel %vm3686, %v4867, 0
        %v4877 = vsel %vm3686, %v4872, 0
        %4879 = vmatpush.bf16.xpose.msra.mxu0 0
        %4880 = vmatpush.bf16.xpose.msra.mxu0 0
        %4881 = vmatpush.bf16.xpose.msra.mxu0 0
        %4882 = vmatpush.bf16.xpose.msra.mxu0 0
        %4883 = vmatpush.bf16.xpose.msra.mxu0 0
        %4884 = vmatpush.bf16.xpose.msra.mxu0 0
        %4885 = vmatpush.bf16.xpose.msra.mxu0 0
        %4886 = vmatpush.bf16.xpose.msra.mxu0 %v4877
        %4887 = vmatmul.bf16.gmra.mxu0 %v4874
        %v4888 = vpop.f32.mrf.mxu0
        %v4889 = vadd.f32 %v4801, %v4888
        %v4890 = vpop.f32.mrf.mxu0
        %v4891 = vadd.f32 %v4802, %v4890
        %4892 = vdwg.mxu0
        %v4895 = vunpack.c.l.b16 %v4799
        %v4896 = vunpack.c.l.b16 %v4800
        %v4897 = vpack.c.b16 %v4896, %v4895
        %v4900 = vunpack.c.l.b16 %v4442
        %v4901 = vunpack.c.l.b16 %v4443
        %v4902 = vpack.c.b16 %v4901, %v4900
        %v4904 = vsel %vm3686, %v4897, 0
        %v4907 = vsel %vm3686, %v4902, 0
        %4909 = vmatpush.bf16.xpose.msra.mxu0 0
        %4910 = vmatpush.bf16.xpose.msra.mxu0 0
        %4911 = vmatpush.bf16.xpose.msra.mxu0 0
        %4912 = vmatpush.bf16.xpose.msra.mxu0 0
        %4913 = vmatpush.bf16.xpose.msra.mxu0 0
        %4914 = vmatpush.bf16.xpose.msra.mxu0 0
        %4915 = vmatpush.bf16.xpose.msra.mxu0 0
        %4916 = vmatpush.bf16.xpose.msra.mxu0 %v4907
        %4917 = vmatmul.bf16.gmra.mxu0 %v4904
        %v4918 = vpop.f32.mrf.mxu0
        %v4919 = vadd.f32 %v4801, %v4918
        %v4920 = vpop.f32.mrf.mxu0
        %v4921 = vadd.f32 %v4802, %v4920
        %4922 = vdwg.mxu0
        %vm4923 = vcmask 130048
        %v4924 = vsel %vm4923, %v4829, -inf
        %4925 = vmax.xlane.f32.xlu0 %v4924
        %v4926 = vpop.xlane.xlu0 %4925
        %v4927 = vsel %vm4923, %v4831, -inf
        %4928 = vmax.xlane.f32.xlu0 %v4927
        %v4929 = vpop.xlane.xlu0 %4928
        %v4930 = vsel %vm4923, %v4859, -inf
        %4931 = vmax.xlane.f32.xlu0 %v4930
        %v4932 = vpop.xlane.xlu0 %4931
        %v4933 = vsel %vm4923, %v4861, -inf
        %4934 = vmax.xlane.f32.xlu0 %v4933
        %v4935 = vpop.xlane.xlu0 %4934
        %v4936 = vsel %vm4923, %v4889, -inf
        %4937 = vmax.xlane.f32.xlu0 %v4936
        %v4938 = vpop.xlane.xlu0 %4937
        %v4939 = vsel %vm4923, %v4891, -inf
        %4940 = vmax.xlane.f32.xlu0 %v4939
        %v4941 = vpop.xlane.xlu0 %4940
        %v4942 = vsel %vm4923, %v4919, -inf
        %4943 = vmax.xlane.f32.xlu0 %v4942
        %v4944 = vpop.xlane.xlu0 %4943
        %v4945 = vsel %vm4923, %v4921, -inf
        %4946 = vmax.xlane.f32.xlu0 %v4945
        %v4947 = vpop.xlane.xlu0 %4946
        %v4948 = vsub.f32 %v4829, %v4926
        %v4949 = vsub.f32 %v4831, %v4929
        %v4950 = vsub.f32 %v4859, %v4932
        %v4951 = vsub.f32 %v4861, %v4935
        %v4952 = vsub.f32 %v4889, %v4938
        %v4953 = vsub.f32 %v4891, %v4941
        %v4954 = vsub.f32 %v4919, %v4944
        %v4955 = vsub.f32 %v4921, %v4947
        %v4956 = vmul.f32 %v4948, 1.442695
        %v4957 = vpow.pop %v4956
        %v4958 = vmul.f32 %v4949, 1.442695
        %v4959 = vpow.pop %v4958
        %v4960 = vmul.f32 %v4950, 1.442695
        %v4961 = vpow.pop %v4960
        %v4962 = vmul.f32 %v4951, 1.442695
        %v4963 = vpow.pop %v4962
        %v4964 = vmul.f32 %v4952, 1.442695
        %v4965 = vpow.pop %v4964
        %v4966 = vmul.f32 %v4953, 1.442695
        %v4967 = vpow.pop %v4966
        %v4968 = vmul.f32 %v4954, 1.442695
        %v4969 = vpow.pop %v4968
        %v4970 = vmul.f32 %v4955, 1.442695
        %v4971 = vpow.pop %v4970
        %v4972 = vsel %vm4923, %v4957, 0.0
        %4973 = vadd.xlane.f32.xlu0 %v4972
        %v4974 = vpop.xlane.xlu0 %4973
        %v4975 = vsel %vm4923, %v4959, 0.0
        %4976 = vadd.xlane.f32.xlu0 %v4975
        %v4977 = vpop.xlane.xlu0 %4976
        %v4978 = vsel %vm4923, %v4961, 0.0
        %4979 = vadd.xlane.f32.xlu0 %v4978
        %v4980 = vpop.xlane.xlu0 %4979
        %v4981 = vsel %vm4923, %v4963, 0.0
        %4982 = vadd.xlane.f32.xlu0 %v4981
        %v4983 = vpop.xlane.xlu0 %4982
        %v4984 = vsel %vm4923, %v4965, 0.0
        %4985 = vadd.xlane.f32.xlu0 %v4984
        %v4986 = vpop.xlane.xlu0 %4985
        %v4987 = vsel %vm4923, %v4967, 0.0
        %4988 = vadd.xlane.f32.xlu0 %v4987
        %v4989 = vpop.xlane.xlu0 %4988
        %v4990 = vsel %vm4923, %v4969, 0.0
        %4991 = vadd.xlane.f32.xlu0 %v4990
        %v4992 = vpop.xlane.xlu0 %4991
        %v4993 = vsel %vm4923, %v4971, 0.0
        %4994 = vadd.xlane.f32.xlu0 %v4993
        %v4995 = vpop.xlane.xlu0 %4994
        %v4996 = vrcp.pop %v4974
        %v4997 = vrcp.pop %v4977
        %v4998 = vrcp.pop %v4980
        %v4999 = vrcp.pop %v4983
        %v5000 = vrcp.pop %v4986
        %v5001 = vrcp.pop %v4989
        %v5002 = vrcp.pop %v4992
        %v5003 = vrcp.pop %v4995
        %v5004 = vmul.f32 %v4957, %v4996
        %v5005 = vmul.f32 %v4959, %v4997
        %v5006 = vmul.f32 %v4961, %v4998
        %v5007 = vmul.f32 %v4963, %v4999
        %v5008 = vmul.f32 %v4965, %v5000
        %v5009 = vmul.f32 %v4967, %v5001
        %v5010 = vmul.f32 %v4969, %v5002
        %v5011 = vmul.f32 %v4971, %v5003
        %v5012 = vpack.c.bf16 %v5004, %v5004
        %v5013 = vpack.c.bf16 %v5005, %v5005
        %v5014 = vpack.c.bf16 %v5006, %v5006
        %v5015 = vpack.c.bf16 %v5007, %v5007
        %v5016 = vpack.c.bf16 %v5008, %v5008
        %v5017 = vpack.c.bf16 %v5009, %v5009
        %v5018 = vpack.c.bf16 %v5010, %v5010
        %v5019 = vpack.c.bf16 %v5011, %v5011
        %v5022 = vunpack.c.l.b16 %v5012
        %v5023 = vunpack.c.l.b16 %v5013
        %v5024 = vpack.c.b16 %v5023, %v5022
        %v5027 = vunpack.c.l.b16 %v4444
        %v5028 = vunpack.c.l.b16 %v4445
        %v5029 = vpack.c.b16 %v5028, %v5027
        %v5032 = vsel %vm4923, %v5024, 0
        %5034 = vmatpush.bf16.msra.mxu0 0
        %5035 = vmatpush.bf16.msra.mxu0 0
        %5036 = vmatpush.bf16.msra.mxu0 0
        %5037 = vmatpush.bf16.msra.mxu0 0
        %5038 = vmatpush.bf16.msra.mxu0 0
        %5039 = vmatpush.bf16.msra.mxu0 0
        %5040 = vmatpush.bf16.msra.mxu0 0
        %5041 = vmatpush.bf16.msra.mxu0 %v5029
        %5042 = vmatmul.bf16.gmra.mxu0 %v5032
        %v5043 = vpop.f32.mrf.mxu0
        %v5044 = vadd.f32 0.0, %v5043
        %v5045 = vpop.f32.mrf.mxu0
        %v5046 = vadd.f32 0.0, %v5045
        %5047 = vdwg.mxu0
        %v5050 = vunpack.c.l.b16 %v5014
        %v5051 = vunpack.c.l.b16 %v5015
        %v5052 = vpack.c.b16 %v5051, %v5050
        %v5055 = vunpack.c.l.b16 %v4446
        %v5056 = vunpack.c.l.b16 %v4447
        %v5057 = vpack.c.b16 %v5056, %v5055
        %v5060 = vsel %vm4923, %v5052, 0
        %5062 = vmatpush.bf16.msra.mxu0 0
        %5063 = vmatpush.bf16.msra.mxu0 0
        %5064 = vmatpush.bf16.msra.mxu0 0
        %5065 = vmatpush.bf16.msra.mxu0 0
        %5066 = vmatpush.bf16.msra.mxu0 0
        %5067 = vmatpush.bf16.msra.mxu0 0
        %5068 = vmatpush.bf16.msra.mxu0 0
        %5069 = vmatpush.bf16.msra.mxu0 %v5057
        %5070 = vmatmul.bf16.gmra.mxu0 %v5060
        %v5071 = vpop.f32.mrf.mxu0
        %v5072 = vadd.f32 0.0, %v5071
        %v5073 = vpop.f32.mrf.mxu0
        %v5074 = vadd.f32 0.0, %v5073
        %5075 = vdwg.mxu0
        %v5078 = vunpack.c.l.b16 %v5016
        %v5079 = vunpack.c.l.b16 %v5017
        %v5080 = vpack.c.b16 %v5079, %v5078
        %v5083 = vunpack.c.l.b16 %v4448
        %v5084 = vunpack.c.l.b16 %v4449
        %v5085 = vpack.c.b16 %v5084, %v5083
        %v5088 = vsel %vm4923, %v5080, 0
        %5090 = vmatpush.bf16.msra.mxu0 0
        %5091 = vmatpush.bf16.msra.mxu0 0
        %5092 = vmatpush.bf16.msra.mxu0 0
        %5093 = vmatpush.bf16.msra.mxu0 0
        %5094 = vmatpush.bf16.msra.mxu0 0
        %5095 = vmatpush.bf16.msra.mxu0 0
        %5096 = vmatpush.bf16.msra.mxu0 0
        %5097 = vmatpush.bf16.msra.mxu0 %v5085
        %5098 = vmatmul.bf16.gmra.mxu0 %v5088
        %v5099 = vpop.f32.mrf.mxu0
        %v5100 = vadd.f32 0.0, %v5099
        %v5101 = vpop.f32.mrf.mxu0
        %v5102 = vadd.f32 0.0, %v5101
        %5103 = vdwg.mxu0
        %v5106 = vunpack.c.l.b16 %v5018
        %v5107 = vunpack.c.l.b16 %v5019
        %v5108 = vpack.c.b16 %v5107, %v5106
        %v5111 = vunpack.c.l.b16 %v4450
        %v5112 = vunpack.c.l.b16 %v4451
        %v5113 = vpack.c.b16 %v5112, %v5111
        %v5116 = vsel %vm4923, %v5108, 0
        %5118 = vmatpush.bf16.msra.mxu0 0
        %5119 = vmatpush.bf16.msra.mxu0 0
        %5120 = vmatpush.bf16.msra.mxu0 0
        %5121 = vmatpush.bf16.msra.mxu0 0
        %5122 = vmatpush.bf16.msra.mxu0 0
        %5123 = vmatpush.bf16.msra.mxu0 0
        %5124 = vmatpush.bf16.msra.mxu0 0
        %5125 = vmatpush.bf16.msra.mxu0 %v5113
        %5126 = vmatmul.bf16.gmra.mxu0 %v5116
        %v5127 = vpop.f32.mrf.mxu0
        %v5128 = vadd.f32 0.0, %v5127
        %v5129 = vpop.f32.mrf.mxu0
        %v5130 = vadd.f32 0.0, %v5129
        %5131 = vdwg.mxu0
        %v5132 = vrot.slane %v5100, 4
        %v5133 = vsel %vm3441, %v5132, %v5044
        %v5134 = vrot.slane %v5044, 4
        %v5135 = vsel %vm3441, %v5100, %v5134
        %v5137 = vunpack.c.l.s4 1983009808
        %v5138 = vunpack.c.0.s8 %v5137
        %v5139 = vperm.slane %v5133, %v5138
        %v5141 = vunpack.c.l.s4 1983009808
        %v5142 = vunpack.c.0.s8 %v5141
        %v5143 = vperm.slane %v5135, %v5142
        %v5144 = vrot.slane %v5128, 4
        %v5145 = vsel %vm3441, %v5144, %v5072
        %v5146 = vrot.slane %v5072, 4
        %v5147 = vsel %vm3441, %v5128, %v5146
        %v5149 = vunpack.c.l.s4 1983009808
        %v5150 = vunpack.c.0.s8 %v5149
        %v5151 = vperm.slane %v5145, %v5150
        %v5153 = vunpack.c.l.s4 1983009808
        %v5154 = vunpack.c.0.s8 %v5153
        %v5155 = vperm.slane %v5147, %v5154
        %v5156 = vrot.slane %v5151, 4
        %v5157 = vsel %vm3441, %v5156, %v5139
        %v5158 = vrot.slane %v5139, 4
        %v5159 = vsel %vm3441, %v5151, %v5158
        %v5161 = vunpack.c.l.s4 1934713408
        %v5162 = vunpack.c.0.s8 %v5161
        %v5163 = vperm.slane %v5157, %v5162
        %v5165 = vunpack.c.l.s4 1934713408
        %v5166 = vunpack.c.0.s8 %v5165
        %v5167 = vperm.slane %v5159, %v5166
        %v5168 = vrot.slane %v5155, 4
        %v5169 = vsel %vm3441, %v5168, %v5143
        %v5170 = vrot.slane %v5143, 4
        %v5171 = vsel %vm3441, %v5155, %v5170
        %v5173 = vunpack.c.l.s4 1934713408
        %v5174 = vunpack.c.0.s8 %v5173
        %v5175 = vperm.slane %v5169, %v5174
        %v5177 = vunpack.c.l.s4 1934713408
        %v5178 = vunpack.c.0.s8 %v5177
        %v5179 = vperm.slane %v5171, %v5178
        %v5180 = vrot.slane %v5163, 4
        %v5181 = vsel %vm3441, 0.0, %v5180
        %v5182 = vrot.slane %v5167, 4
        %v5183 = vsel %vm3441, 0.0, %v5182
        %v5184 = vrot.slane %v5175, 4
        %v5185 = vsel %vm3441, 0.0, %v5184
        %v5186 = vrot.slane %v5179, 4
        %v5187 = vsel %vm3441, 0.0, %v5186
        %v5188 = vrot.slane %v5102, 4
        %v5189 = vsel %vm3441, %v5188, %v5046
        %v5190 = vrot.slane %v5046, 4
        %v5191 = vsel %vm3441, %v5102, %v5190
        %v5193 = vunpack.c.l.s4 1983009808
        %v5194 = vunpack.c.0.s8 %v5193
        %v5195 = vperm.slane %v5189, %v5194
        %v5197 = vunpack.c.l.s4 1983009808
        %v5198 = vunpack.c.0.s8 %v5197
        %v5199 = vperm.slane %v5191, %v5198
        %v5200 = vrot.slane %v5130, 4
        %v5201 = vsel %vm3441, %v5200, %v5074
        %v5202 = vrot.slane %v5074, 4
        %v5203 = vsel %vm3441, %v5130, %v5202
        %v5205 = vunpack.c.l.s4 1983009808
        %v5206 = vunpack.c.0.s8 %v5205
        %v5207 = vperm.slane %v5201, %v5206
        %v5209 = vunpack.c.l.s4 1983009808
        %v5210 = vunpack.c.0.s8 %v5209
        %v5211 = vperm.slane %v5203, %v5210
        %v5212 = vrot.slane %v5207, 4
        %v5213 = vsel %vm3441, %v5212, %v5195
        %v5214 = vrot.slane %v5195, 4
        %v5215 = vsel %vm3441, %v5207, %v5214
        %v5217 = vunpack.c.l.s4 1934713408
        %v5218 = vunpack.c.0.s8 %v5217
        %v5219 = vperm.slane %v5213, %v5218
        %v5221 = vunpack.c.l.s4 1934713408
        %v5222 = vunpack.c.0.s8 %v5221
        %v5223 = vperm.slane %v5215, %v5222
        %v5224 = vrot.slane %v5211, 4
        %v5225 = vsel %vm3441, %v5224, %v5199
        %v5226 = vrot.slane %v5199, 4
        %v5227 = vsel %vm3441, %v5211, %v5226
        %v5229 = vunpack.c.l.s4 1934713408
        %v5230 = vunpack.c.0.s8 %v5229
        %v5231 = vperm.slane %v5225, %v5230
        %v5233 = vunpack.c.l.s4 1934713408
        %v5234 = vunpack.c.0.s8 %v5233
        %v5235 = vperm.slane %v5227, %v5234
        %v5236 = vrot.slane %v5219, 4
        %v5237 = vsel %vm3441, 0.0, %v5236
        %v5238 = vrot.slane %v5223, 4
        %v5239 = vsel %vm3441, 0.0, %v5238
        %v5240 = vrot.slane %v5231, 4
        %v5241 = vsel %vm3441, 0.0, %v5240
        %v5242 = vrot.slane %v5235, 4
        %v5243 = vsel %vm3441, 0.0, %v5242
        %v5244 = vsel %vm3441, %v5182, %v5163
        %v5246 = vunpack.c.l.s4 1983009808
        %v5247 = vunpack.c.0.s8 %v5246
        %v5248 = vperm.slane %v5244, %v5247
        %v5249 = vrot.slane %v5183, 4
        %v5250 = vsel %vm3441, %v5249, %v5181
        %v5252 = vunpack.c.l.s4 1983009808
        %v5253 = vunpack.c.0.s8 %v5252
        %v5254 = vperm.slane %v5250, %v5253
        %v5255 = vsel %vm3441, %v5186, %v5175
        %v5257 = vunpack.c.l.s4 1983009808
        %v5258 = vunpack.c.0.s8 %v5257
        %v5259 = vperm.slane %v5255, %v5258
        %v5260 = vrot.slane %v5187, 4
        %v5261 = vsel %vm3441, %v5260, %v5185
        %v5263 = vunpack.c.l.s4 1983009808
        %v5264 = vunpack.c.0.s8 %v5263
        %v5265 = vperm.slane %v5261, %v5264
        %v5266 = vrot.slane %v5254, 4
        %v5267 = vsel %vm3441, %v5266, %v5248
        %v5268 = vrot.slane %v5248, 4
        %v5269 = vsel %vm3441, %v5254, %v5268
        %v5271 = vunpack.c.l.s4 1934713408
        %v5272 = vunpack.c.0.s8 %v5271
        %v5273 = vperm.slane %v5267, %v5272
        %v5275 = vunpack.c.l.s4 1934713408
        %v5276 = vunpack.c.0.s8 %v5275
        %v5277 = vperm.slane %v5269, %v5276
        %v5278 = vrot.slane %v5265, 4
        %v5279 = vsel %vm3441, %v5278, %v5259
        %v5280 = vrot.slane %v5259, 4
        %v5281 = vsel %vm3441, %v5265, %v5280
        %v5283 = vunpack.c.l.s4 1934713408
        %v5284 = vunpack.c.0.s8 %v5283
        %v5285 = vperm.slane %v5279, %v5284
        %v5287 = vunpack.c.l.s4 1934713408
        %v5288 = vunpack.c.0.s8 %v5287
        %v5289 = vperm.slane %v5281, %v5288
        %v5290 = vrot.slane %v5285, 4
        %v5291 = vsel %vm3441, %v5290, %v5273
        %v5292 = vrot.slane %v5273, 4
        %v5293 = vsel %vm3441, %v5285, %v5292
        %v5294 = vrot.slane %v5289, 4
        %v5295 = vsel %vm3441, %v5294, %v5277
        %v5296 = vrot.slane %v5277, 4
        %v5297 = vsel %vm3441, %v5289, %v5296
        %v5298 = vsel %vm3441, %v5238, %v5219
        %v5300 = vunpack.c.l.s4 1983009808
        %v5301 = vunpack.c.0.s8 %v5300
        %v5302 = vperm.slane %v5298, %v5301
        %v5303 = vrot.slane %v5239, 4
        %v5304 = vsel %vm3441, %v5303, %v5237
        %v5306 = vunpack.c.l.s4 1983009808
        %v5307 = vunpack.c.0.s8 %v5306
        %v5308 = vperm.slane %v5304, %v5307
        %v5309 = vsel %vm3441, %v5242, %v5231
        %v5311 = vunpack.c.l.s4 1983009808
        %v5312 = vunpack.c.0.s8 %v5311
        %v5313 = vperm.slane %v5309, %v5312
        %v5314 = vrot.slane %v5243, 4
        %v5315 = vsel %vm3441, %v5314, %v5241
        %v5317 = vunpack.c.l.s4 1983009808
        %v5318 = vunpack.c.0.s8 %v5317
        %v5319 = vperm.slane %v5315, %v5318
        %v5320 = vrot.slane %v5308, 4
        %v5321 = vsel %vm3441, %v5320, %v5302
        %v5322 = vrot.slane %v5302, 4
        %v5323 = vsel %vm3441, %v5308, %v5322
        %v5325 = vunpack.c.l.s4 1934713408
        %v5326 = vunpack.c.0.s8 %v5325
        %v5327 = vperm.slane %v5321, %v5326
        %v5329 = vunpack.c.l.s4 1934713408
        %v5330 = vunpack.c.0.s8 %v5329
        %v5331 = vperm.slane %v5323, %v5330
        %v5332 = vrot.slane %v5319, 4
        %v5333 = vsel %vm3441, %v5332, %v5313
        %v5334 = vrot.slane %v5313, 4
        %v5335 = vsel %vm3441, %v5319, %v5334
        %v5337 = vunpack.c.l.s4 1934713408
        %v5338 = vunpack.c.0.s8 %v5337
        %v5339 = vperm.slane %v5333, %v5338
        %v5341 = vunpack.c.l.s4 1934713408
        %v5342 = vunpack.c.0.s8 %v5341
        %v5343 = vperm.slane %v5335, %v5342
        %v5344 = vrot.slane %v5339, 4
        %v5345 = vsel %vm3441, %v5344, %v5327
        %v5346 = vrot.slane %v5327, 4
        %v5347 = vsel %vm3441, %v5339, %v5346
        %v5348 = vrot.slane %v5343, 4
        %v5349 = vsel %vm3441, %v5348, %v5331
        %v5350 = vrot.slane %v5331, 4
        %v5351 = vsel %vm3441, %v5343, %v5350
        %5354 = vrot.lane.b32.xlu0 %v5293, 32
        %v5355 = vpop.permute.xlu0 %5354
        %5356 = vrot.lane.b32.xlu0 %v5347, 32
        %v5357 = vpop.permute.xlu0 %5356
        %5362 = vrot.lane.b32.xlu0 %v5295, 64
        %v5363 = vpop.permute.xlu0 %5362
        %5364 = vrot.lane.b32.xlu0 %v5349, 64
        %v5365 = vpop.permute.xlu0 %5364
        %5370 = vrot.lane.b32.xlu0 %v5297, 96
        %v5371 = vpop.permute.xlu0 %5370
        %5372 = vrot.lane.b32.xlu0 %v5351, 96
        %v5373 = vpop.permute.xlu0 %5372
        %v5376 = vsel %vm3686, %v5291, %v5355
        %v5377 = vsel %vm3686, %v5345, %v5357
        %v5378 = vsel %vm4302, %v5376, %v5363
        %v5379 = vsel %vm4302, %v5377, %v5365
        %v5380 = vsel %vm4305, %v5378, %v5371
        %v5381 = vsel %vm4305, %v5379, %v5373
        %v5382 = vpack.c.bf16 %v5381, %v5380
        %v5384 = vperm.slane %v4487, 0
        %v5402 = vunpack.c.l.b16 %v4471
        %v5403 = vunpack.c.l.b16 %v4472
        %v5404 = vunpack.c.l.b16 %v4473
        %v5405 = vunpack.c.l.b16 %v4474
        %v5406 = vunpack.c.l.b16 %v4475
        %v5407 = vunpack.c.l.b16 %v4476
        %v5408 = vunpack.c.l.b16 %v4477
        %v5409 = vunpack.c.l.b16 %v4478
        %v5410 = vunpack.c.l.b16 %v4479
        %v5411 = vunpack.c.l.b16 %v4480
        %v5412 = vunpack.c.l.b16 %v4481
        %v5413 = vunpack.c.l.b16 %v4482
        %v5414 = vunpack.c.l.b16 %v4483
        %v5415 = vunpack.c.l.b16 %v4484
        %v5416 = vunpack.c.l.b16 %v4485
        %v5417 = vunpack.c.l.b16 %v4486
        %v5418 = vpack.c.b16 %v5403, %v5402
        %v5419 = vpack.c.b16 %v5405, %v5404
        %v5420 = vpack.c.b16 %v5407, %v5406
        %v5421 = vpack.c.b16 %v5409, %v5408
        %v5422 = vpack.c.b16 %v5411, %v5410
        %v5423 = vpack.c.b16 %v5413, %v5412
        %v5424 = vpack.c.b16 %v5415, %v5414
        %v5425 = vpack.c.b16 %v5417, %v5416
        %5434 = vmatpush.bf16.msra.mxu0 %v5425
        %5435 = vmatpush.bf16.msra.mxu0 %v5424
        %5436 = vmatpush.bf16.msra.mxu0 %v5423
        %5437 = vmatpush.bf16.msra.mxu0 %v5422
        %5438 = vmatpush.bf16.msra.mxu0 %v5421
        %5439 = vmatpush.bf16.msra.mxu0 %v5420
        %5440 = vmatpush.bf16.msra.mxu0 %v5419
        %5441 = vmatpush.bf16.msra.mxu0 %v5418
        %5442 = vmatmul.bf16.gmra.mxu0 %v5382
        %v5443 = vpop.f32.mrf.mxu0
        %v5444 = vadd.f32 %v5384, %v5443
        %v5445 = vpop.f32.mrf.mxu0
        %v5446 = vadd.f32 %v5384, %v5445
        %5447 = vdwg.mxu0
        %v5448 = vadd.f32 %v4433, %v5444
        %v5449 = vadd.f32 %v4434, %v5446
        %v5450 = vld [vmem:[%s45] sm:$0x1]
        %v5451 = vld [vmem:[%s47] sm:$0x1]
        %5452 = vadd.xlane.f32.xlu0 %v5448
        %v5453 = vpop.xlane.xlu0 %5452
        %5454 = vadd.xlane.f32.xlu0 %v5449
        %v5455 = vpop.xlane.xlu0 %5454
        %v5456 = vmul.f32 %v5453, %v4388
        %v5457 = vmul.f32 %v5455, %v4388
        %v5458 = vsub.f32 %v5448, %v5456
        %v5459 = vsub.f32 %v5449, %v5457
        %v5460 = vmul.f32 %v5458, %v5458
        %v5461 = vmul.f32 %v5459, %v5459
        %5462 = vadd.xlane.f32.xlu0 %v5460
        %v5463 = vpop.xlane.xlu0 %5462
        %5464 = vadd.xlane.f32.xlu0 %v5461
        %v5465 = vpop.xlane.xlu0 %5464
        %v5466 = vmul.f32 %v5463, %v4388
        %v5467 = vmul.f32 %v5465, %v4388
        %v5468 = vadd.f32 %v5466, 1e-12
        %v5469 = vadd.f32 %v5467, 1e-12
        %v5470 = vrsqrt.pop %v5468
        %v5471 = vmul.f32 %v5470, %v5468
        %v5472 = vmul.f32 %v5471, %v5470
        %v5473 = vmul.f32 0.5, %v5472
        %v5474 = vsub.f32 1.5, %v5473
        %v5475 = vmul.f32 %v5470, %v5474
        %vm5476 = vweird.f32 %v5468
        %vm5477 = vweird.f32 %v5470
        %vm5478 = vmor %vm5476, %vm5477
        %v5479 = vsel %vm5478, %v5470, %v5475
        %v5480 = vrsqrt.pop %v5469
        %v5481 = vmul.f32 %v5480, %v5469
        %v5482 = vmul.f32 %v5481, %v5480
        %v5483 = vmul.f32 0.5, %v5482
        %v5484 = vsub.f32 1.5, %v5483
        %v5485 = vmul.f32 %v5480, %v5484
        %vm5486 = vweird.f32 %v5469
        %vm5487 = vweird.f32 %v5480
        %vm5488 = vmor %vm5486, %vm5487
        %v5489 = vsel %vm5488, %v5480, %v5485
        %v5490 = vmul.f32 %v5458, %v5479
        %v5491 = vmul.f32 %v5459, %v5489
        %v5493 = vperm.slane %v5450, 0
        %v5495 = vmul.f32 %v5490, %v5493
        %v5496 = vmul.f32 %v5491, %v5493
        %v5498 = vperm.slane %v5451, 0
        %v5500 = vadd.f32 %v5495, %v5498
        %v5501 = vadd.f32 %v5496, %v5498
        %v5502 = vpack.c.bf16 %v5501, %v5500
        %v5503 = vld [vmem:[#allocation36] sm:$0xff]
        %v5504 = vld [vmem:[#allocation36 + $0x8] sm:$0xff]
        %v5505 = vld [vmem:[#allocation36 + $0x10] sm:$0xff]
        %v5506 = vld [vmem:[#allocation36 + $0x18] sm:$0xff]
        %v5507 = vld [vmem:[#allocation36 + $0x20] sm:$0xff]
        %v5508 = vld [vmem:[#allocation36 + $0x28] sm:$0xff]
        %v5509 = vld [vmem:[#allocation36 + $0x30] sm:$0xff]
        %v5510 = vld [vmem:[#allocation36 + $0x38] sm:$0xff]
        %v5511 = vld [vmem:[#allocation36 + $0x40] sm:$0xff]
        %v5512 = vld [vmem:[#allocation36 + $0x48] sm:$0xff]
        %v5513 = vld [vmem:[#allocation36 + $0x50] sm:$0xff]
        %v5514 = vld [vmem:[#allocation36 + $0x58] sm:$0xff]
        %v5515 = vld [vmem:[#allocation36 + $0x60] sm:$0xff]
        %v5516 = vld [vmem:[#allocation36 + $0x68] sm:$0xff]
        %v5517 = vld [vmem:[#allocation36 + $0x70] sm:$0xff]
        %v5518 = vld [vmem:[#allocation36 + $0x78] sm:$0xff]
        %v5519 = vld [vmem:[%s51] sm:$0x3]
        %v5521 = vperm.slane %v5519, 0
        %v5522 = vperm.slane %v5519, 1
        %v5541 = vunpack.c.l.b16 %v5503
        %v5542 = vunpack.c.h.b16 %v5503
        %v5543 = vunpack.c.l.b16 %v5504
        %v5544 = vunpack.c.h.b16 %v5504
        %v5545 = vunpack.c.l.b16 %v5505
        %v5546 = vunpack.c.h.b16 %v5505
        %v5547 = vunpack.c.l.b16 %v5506
        %v5548 = vunpack.c.h.b16 %v5506
        %v5549 = vunpack.c.l.b16 %v5507
        %v5550 = vunpack.c.h.b16 %v5507
        %v5551 = vunpack.c.l.b16 %v5508
        %v5552 = vunpack.c.h.b16 %v5508
        %v5553 = vunpack.c.l.b16 %v5509
        %v5554 = vunpack.c.h.b16 %v5509
        %v5555 = vunpack.c.l.b16 %v5510
        %v5556 = vunpack.c.h.b16 %v5510
        %v5557 = vunpack.c.l.b16 %v5511
        %v5558 = vunpack.c.h.b16 %v5511
        %v5559 = vunpack.c.l.b16 %v5512
        %v5560 = vunpack.c.h.b16 %v5512
        %v5561 = vunpack.c.l.b16 %v5513
        %v5562 = vunpack.c.h.b16 %v5513
        %v5563 = vunpack.c.l.b16 %v5514
        %v5564 = vunpack.c.h.b16 %v5514
        %v5565 = vunpack.c.l.b16 %v5515
        %v5566 = vunpack.c.h.b16 %v5515
        %v5567 = vunpack.c.l.b16 %v5516
        %v5568 = vunpack.c.h.b16 %v5516
        %v5569 = vunpack.c.l.b16 %v5517
        %v5570 = vunpack.c.h.b16 %v5517
        %v5571 = vunpack.c.l.b16 %v5518
        %v5572 = vunpack.c.h.b16 %v5518
        %v5573 = vpack.c.b16 %v5543, %v5541
        %v5574 = vpack.c.b16 %v5544, %v5542
        %v5575 = vpack.c.b16 %v5547, %v5545
        %v5576 = vpack.c.b16 %v5548, %v5546
        %v5577 = vpack.c.b16 %v5551, %v5549
        %v5578 = vpack.c.b16 %v5552, %v5550
        %v5579 = vpack.c.b16 %v5555, %v5553
        %v5580 = vpack.c.b16 %v5556, %v5554
        %v5581 = vpack.c.b16 %v5559, %v5557
        %v5582 = vpack.c.b16 %v5560, %v5558
        %v5583 = vpack.c.b16 %v5563, %v5561
        %v5584 = vpack.c.b16 %v5564, %v5562
        %v5585 = vpack.c.b16 %v5567, %v5565
        %v5586 = vpack.c.b16 %v5568, %v5566
        %v5587 = vpack.c.b16 %v5571, %v5569
        %v5588 = vpack.c.b16 %v5572, %v5570
        %5605 = vmatpush.bf16.msra.mxu0 %v5587
        %5606 = vmatpush.bf16.msra.mxu0 %v5585
        %5607 = vmatpush.bf16.msra.mxu0 %v5583
        %5608 = vmatpush.bf16.msra.mxu0 %v5581
        %5609 = vmatpush.bf16.msra.mxu0 %v5579
        %5610 = vmatpush.bf16.msra.mxu0 %v5577
        %5611 = vmatpush.bf16.msra.mxu0 %v5575
        %5612 = vmatpush.bf16.msra.mxu0 %v5573
        %5613 = vmatmul.bf16.gmra.mxu0 %v5502
        %v5614 = vpop.f32.mrf.mxu0
        %v5615 = vadd.f32 %v5521, %v5614
        %v5616 = vpop.f32.mrf.mxu0
        %v5617 = vadd.f32 %v5521, %v5616
        %5618 = vdwg.mxu0
        %5619 = vmatpush.bf16.msra.mxu0 %v5588
        %5620 = vmatpush.bf16.msra.mxu0 %v5586
        %5621 = vmatpush.bf16.msra.mxu0 %v5584
        %5622 = vmatpush.bf16.msra.mxu0 %v5582
        %5623 = vmatpush.bf16.msra.mxu0 %v5580
        %5624 = vmatpush.bf16.msra.mxu0 %v5578
        %5625 = vmatpush.bf16.msra.mxu0 %v5576
        %5626 = vmatpush.bf16.msra.mxu0 %v5574
        %5627 = vmatmul.bf16.gmra.mxu0 %v5502
        %v5628 = vpop.f32.mrf.mxu0
        %v5629 = vadd.f32 %v5522, %v5628
        %v5630 = vpop.f32.mrf.mxu0
        %v5631 = vadd.f32 %v5522, %v5630
        %5632 = vdwg.mxu0
        %v5633 = vmax.f32 %v5615, 0.0
        %v5634 = vmax.f32 %v5629, 0.0
        %v5635 = vmax.f32 %v5617, 0.0
        %v5636 = vmax.f32 %v5631, 0.0
        %v5637 = vpack.c.bf16 %v5635, %v5633
        %v5638 = vpack.c.bf16 %v5636, %v5634
        %v5639 = vld [vmem:[#allocation38] sm:$0xf]
        %v5640 = vld [vmem:[#allocation38 + $0x4] sm:$0xf]
        %v5641 = vld [vmem:[#allocation38 + $0x8] sm:$0xf]
        %v5642 = vld [vmem:[#allocation38 + $0xc] sm:$0xf]
        %v5643 = vld [vmem:[#allocation38 + $0x10] sm:$0xf]
        %v5644 = vld [vmem:[#allocation38 + $0x14] sm:$0xf]
        %v5645 = vld [vmem:[#allocation38 + $0x18] sm:$0xf]
        %v5646 = vld [vmem:[#allocation38 + $0x1c] sm:$0xf]
        %v5647 = vld [vmem:[#allocation38 + $0x20] sm:$0xf]
        %v5648 = vld [vmem:[#allocation38 + $0x24] sm:$0xf]
        %v5649 = vld [vmem:[#allocation38 + $0x28] sm:$0xf]
        %v5650 = vld [vmem:[#allocation38 + $0x2c] sm:$0xf]
        %v5651 = vld [vmem:[#allocation38 + $0x30] sm:$0xf]
        %v5652 = vld [vmem:[#allocation38 + $0x34] sm:$0xf]
        %v5653 = vld [vmem:[#allocation38 + $0x38] sm:$0xf]
        %v5654 = vld [vmem:[#allocation38 + $0x3c] sm:$0xf]
        %v5655 = vld [vmem:[#allocation38 + $0x40] sm:$0xf]
        %v5656 = vld [vmem:[#allocation38 + $0x44] sm:$0xf]
        %v5657 = vld [vmem:[#allocation38 + $0x48] sm:$0xf]
        %v5658 = vld [vmem:[#allocation38 + $0x4c] sm:$0xf]
        %v5659 = vld [vmem:[#allocation38 + $0x50] sm:$0xf]
        %v5660 = vld [vmem:[#allocation38 + $0x54] sm:$0xf]
        %v5661 = vld [vmem:[#allocation38 + $0x58] sm:$0xf]
        %v5662 = vld [vmem:[#allocation38 + $0x5c] sm:$0xf]
        %v5663 = vld [vmem:[#allocation38 + $0x60] sm:$0xf]
        %v5664 = vld [vmem:[#allocation38 + $0x64] sm:$0xf]
        %v5665 = vld [vmem:[#allocation38 + $0x68] sm:$0xf]
        %v5666 = vld [vmem:[#allocation38 + $0x6c] sm:$0xf]
        %v5667 = vld [vmem:[#allocation38 + $0x70] sm:$0xf]
        %v5668 = vld [vmem:[#allocation38 + $0x74] sm:$0xf]
        %v5669 = vld [vmem:[#allocation38 + $0x78] sm:$0xf]
        %v5670 = vld [vmem:[#allocation38 + $0x7c] sm:$0xf]
        %v5671 = vld [vmem:[%s55] sm:$0x1]
        %v5673 = vperm.slane %v5671, 0
        %v5707 = vunpack.c.l.b16 %v5639
        %v5708 = vunpack.c.l.b16 %v5640
        %v5709 = vunpack.c.l.b16 %v5641
        %v5710 = vunpack.c.l.b16 %v5642
        %v5711 = vunpack.c.l.b16 %v5643
        %v5712 = vunpack.c.l.b16 %v5644
        %v5713 = vunpack.c.l.b16 %v5645
        %v5714 = vunpack.c.l.b16 %v5646
        %v5715 = vunpack.c.l.b16 %v5647
        %v5716 = vunpack.c.l.b16 %v5648
        %v5717 = vunpack.c.l.b16 %v5649
        %v5718 = vunpack.c.l.b16 %v5650
        %v5719 = vunpack.c.l.b16 %v5651
        %v5720 = vunpack.c.l.b16 %v5652
        %v5721 = vunpack.c.l.b16 %v5653
        %v5722 = vunpack.c.l.b16 %v5654
        %v5723 = vunpack.c.l.b16 %v5655
        %v5724 = vunpack.c.l.b16 %v5656
        %v5725 = vunpack.c.l.b16 %v5657
        %v5726 = vunpack.c.l.b16 %v5658
        %v5727 = vunpack.c.l.b16 %v5659
        %v5728 = vunpack.c.l.b16 %v5660
        %v5729 = vunpack.c.l.b16 %v5661
        %v5730 = vunpack.c.l.b16 %v5662
        %v5731 = vunpack.c.l.b16 %v5663
        %v5732 = vunpack.c.l.b16 %v5664
        %v5733 = vunpack.c.l.b16 %v5665
        %v5734 = vunpack.c.l.b16 %v5666
        %v5735 = vunpack.c.l.b16 %v5667
        %v5736 = vunpack.c.l.b16 %v5668
        %v5737 = vunpack.c.l.b16 %v5669
        %v5738 = vunpack.c.l.b16 %v5670
        %v5739 = vpack.c.b16 %v5708, %v5707
        %v5740 = vpack.c.b16 %v5710, %v5709
        %v5741 = vpack.c.b16 %v5712, %v5711
        %v5742 = vpack.c.b16 %v5714, %v5713
        %v5743 = vpack.c.b16 %v5716, %v5715
        %v5744 = vpack.c.b16 %v5718, %v5717
        %v5745 = vpack.c.b16 %v5720, %v5719
        %v5746 = vpack.c.b16 %v5722, %v5721
        %v5747 = vpack.c.b16 %v5724, %v5723
        %v5748 = vpack.c.b16 %v5726, %v5725
        %v5749 = vpack.c.b16 %v5728, %v5727
        %v5750 = vpack.c.b16 %v5730, %v5729
        %v5751 = vpack.c.b16 %v5732, %v5731
        %v5752 = vpack.c.b16 %v5734, %v5733
        %v5753 = vpack.c.b16 %v5736, %v5735
        %v5754 = vpack.c.b16 %v5738, %v5737
        %5771 = vmatpush.bf16.msra.mxu0 %v5746
        %5772 = vmatpush.bf16.msra.mxu0 %v5745
        %5773 = vmatpush.bf16.msra.mxu0 %v5744
        %5774 = vmatpush.bf16.msra.mxu0 %v5743
        %5775 = vmatpush.bf16.msra.mxu0 %v5742
        %5776 = vmatpush.bf16.msra.mxu0 %v5741
        %5777 = vmatpush.bf16.msra.mxu0 %v5740
        %5778 = vmatpush.bf16.msra.mxu0 %v5739
        %5779 = vmatmul.bf16.gmra.mxu0 %v5637
        %v5780 = vpop.f32.mrf.mxu0
        %v5781 = vadd.f32 %v5673, %v5780
        %v5782 = vpop.f32.mrf.mxu0
        %v5783 = vadd.f32 %v5673, %v5782
        %5784 = vdwg.mxu0
        %5785 = vmatpush.bf16.msra.mxu0 %v5754
        %5786 = vmatpush.bf16.msra.mxu0 %v5753
        %5787 = vmatpush.bf16.msra.mxu0 %v5752
        %5788 = vmatpush.bf16.msra.mxu0 %v5751
        %5789 = vmatpush.bf16.msra.mxu0 %v5750
        %5790 = vmatpush.bf16.msra.mxu0 %v5749
        %5791 = vmatpush.bf16.msra.mxu0 %v5748
        %5792 = vmatpush.bf16.msra.mxu0 %v5747
        %5793 = vmatmul.bf16.gmra.mxu0 %v5638
        %v5794 = vpop.f32.mrf.mxu0
        %v5795 = vadd.f32 %v5781, %v5794
        %v5796 = vpop.f32.mrf.mxu0
        %v5797 = vadd.f32 %v5783, %v5796
        %5798 = vdwg.mxu0
        %v5799 = vadd.f32 %v5500, %v5795
        %v5800 = vadd.f32 %v5501, %v5797
        %v5801 = vld [vmem:[%s57] sm:$0x1]
        %v5802 = vld [vmem:[%s59] sm:$0x1]
        %5803 = vadd.xlane.f32.xlu0 %v5799
        %v5804 = vpop.xlane.xlu0 %5803
        %5805 = vadd.xlane.f32.xlu0 %v5800
        %v5806 = vpop.xlane.xlu0 %5805
        %v5807 = vmul.f32 %v5804, %v4388
        %v5808 = vmul.f32 %v5806, %v4388
        %v5809 = vsub.f32 %v5799, %v5807
        %v5810 = vsub.f32 %v5800, %v5808
        %v5811 = vmul.f32 %v5809, %v5809
        %v5812 = vmul.f32 %v5810, %v5810
        %5813 = vadd.xlane.f32.xlu0 %v5811
        %v5814 = vpop.xlane.xlu0 %5813
        %5815 = vadd.xlane.f32.xlu0 %v5812
        %v5816 = vpop.xlane.xlu0 %5815
        %v5817 = vmul.f32 %v5814, %v4388
        %v5818 = vmul.f32 %v5816, %v4388
        %v5819 = vadd.f32 %v5817, 1e-12
        %v5820 = vadd.f32 %v5818, 1e-12
        %v5821 = vrsqrt.pop %v5819
        %v5822 = vmul.f32 %v5821, %v5819
        %v5823 = vmul.f32 %v5822, %v5821
        %v5824 = vmul.f32 0.5, %v5823
        %v5825 = vsub.f32 1.5, %v5824
        %v5826 = vmul.f32 %v5821, %v5825
        %vm5827 = vweird.f32 %v5819
        %vm5828 = vweird.f32 %v5821
        %vm5829 = vmor %vm5827, %vm5828
        %v5830 = vsel %vm5829, %v5821, %v5826
        %v5831 = vrsqrt.pop %v5820
        %v5832 = vmul.f32 %v5831, %v5820
        %v5833 = vmul.f32 %v5832, %v5831
        %v5834 = vmul.f32 0.5, %v5833
        %v5835 = vsub.f32 1.5, %v5834
        %v5836 = vmul.f32 %v5831, %v5835
        %vm5837 = vweird.f32 %v5820
        %vm5838 = vweird.f32 %v5831
        %vm5839 = vmor %vm5837, %vm5838
        %v5840 = vsel %vm5839, %v5831, %v5836
        %v5841 = vmul.f32 %v5809, %v5830
        %v5842 = vmul.f32 %v5810, %v5840
        %v5844 = vperm.slane %v5801, 0
        %v5846 = vmul.f32 %v5841, %v5844
        %v5847 = vmul.f32 %v5842, %v5844
        %v5849 = vperm.slane %v5802, 0
        %v5851 = vadd.f32 %v5846, %v5849
        %v5852 = vadd.f32 %v5847, %v5849
        %5853 = vst [vmem:[%s1354] sm:$0xff] %v5851
        %5854 = vst [vmem:[%s1354 + $0x8] sm:$0xff] %v5852
        %s5855 = sand.u32 %s766, 1
        %s5856 = scalar_lea.sflag [#allocation8], %s5855
        %s5857 = sand.u32 %s766, 1
        %s5858 = smul.addr %s5857, 16
        %s5859 = scalar_lea.vmem [#allocation39], %s5858
        // Predicated region
        $region229: #{tpu_custom_call.1} parent=139 // pred_check
          %p5860 = pneg %p776
        $region230: #{tpu_custom_call.1} parent=139 // pred_check_branch
          %5862 = sbr.rel (%p5860) target = $region232
        $region231: #{tpu_custom_call.1} parent=139 // pred_region
          %s5863 = smul.u32 2, %s95
          %5865 = vsyncadd %s5856, 0
          %s5866 = smul.addr %s94, 4
          %s5867 = sadd.s32 %s5863, %s5866
          %s5868 = smul.addr %s5867, 8
          %s5869 = scalar_lea.hbm %s61, %s5868
          %s5870 = sshll.u32 %s5859, 4
          %s5871 = int_to_ptr.vmem [resolvable:$true] %s5870
          %s5872 = sshll.u32 %s5869, 4
          %s5873 = int_to_ptr.hbm [resolvable:$true] %s5872
          %5878 = dma.vmem_to_hbm [thread:$0]  %s5871, 256, %s5873, %s5856, 128, 128, 8
        $region232: #{tpu_custom_call.1} parent=139 // pred_fallthru
          _
      $region140: #{tpu_custom_call.1} parent=5 // pred_fallthru
        _
      %p5879 = scmp.le.s32.totalorder 2, %s85
      // Predicated region
      $region233: #{tpu_custom_call.1} parent=5 // pred_check
        %p5880 = pneg %p5879
      $region234: #{tpu_custom_call.1} parent=5 // pred_check_branch
        %5882 = sbr.rel (%p5880) target = $region236
      $region235: #{tpu_custom_call.1} parent=5 // pred_region
        %s5883 = ssub.s32 %s85, 2
        // Predicated region
        $region237: #{tpu_custom_call.1} parent=235 // pred_check
          %p5884 = pneg %p782
        $region238: #{tpu_custom_call.1} parent=235 // pred_check_branch
          %5886 = sbr.rel (%p5884) target = $region240
        $region239: #{tpu_custom_call.1} parent=235 // pred_region
          %s5887 = sand.u32 %s767, 1
          %s5888 = scalar_lea.sflag [#allocation8], %s5887
          %s5889 = sand.u32 %s767, 1
          %s5890 = smul.addr %s5889, 16
          %s5891 = scalar_lea.vmem [#allocation39], %s5890
          %5893 = dma.done %s5888, 256
        $region240: #{tpu_custom_call.1} parent=235 // pred_fallthru
          _
      $region236: #{tpu_custom_call.1} parent=5 // pred_fallthru
        _
    $region6: #{tpu_custom_call.1} parent=1 // loop_footer
      %s89 = sadd.s32 1, %s85
    $region7: #{tpu_custom_call.1} parent=1 // loop_footer_branch
      %84 = sbr.rel target = $region3
    $region8: #{tpu_custom_call.1} parent=1 // loop_exit
      _
    %5894 = vsyncpa [#allocation7], 1
    %s5895 = scalar_lea.sflag [#allocation7], 1
    %5896 = vsyncpa %s5895, 1
    %5897 = vsyncpa [#allocation10], 1
    %s5898 = scalar_lea.sflag [#allocation10], 1
    %5899 = vsyncpa %s5898, 1
    %5900 = vsyncpa [#allocation13], 1
    %5901 = vsyncpa [#allocation16], 1
    %5902 = vsyncpa [#allocation19], 1
    %5903 = vsyncpa [#allocation22], 1
    %5904 = vsyncpa [#allocation25], 1
    %5905 = vsyncpa [#allocation28], 1
    %5906 = vsyncpa [#allocation31], 1
    %5907 = vsyncpa [#allocation34], 1
    %5908 = vsyncpa [#allocation37], 1
    %5909 = vsyncpa [#allocation8], 1
    %s5910 = scalar_lea.sflag [#allocation8], 1
    %5911 = vsyncpa %s5910, 1

</llo_original>
